<compile_context>
chip_gen: v7x
topology: tpu7x:2x2x1
jax: 0.10.0
libtpu: 0.0.40
codegen_flags: <defaults>
</compile_context>

<pallas_src>
import functools

import jax
import jax.numpy as jnp
from jax.experimental import pallas as pl
from jax.experimental.pallas import tpu as pltpu

_NEG = -float(jnp.finfo(jnp.float32).max)   # torch: -finfo(float32).max
_BF16 = jnp.bfloat16


def _tile(dim, target):
    """Pick a tile size: `target` if it divides `dim`, else the full dim."""
    return target if dim % target == 0 else dim


# ----------------------------- Pallas kernels -----------------------------

def _ln_kernel(x_ref, g_ref, o_ref):
    x = x_ref[...].astype(jnp.float32)
    mu = jnp.mean(x, axis=-1, keepdims=True)
    xc = x - mu
    var = jnp.mean(xc * xc, axis=-1, keepdims=True)
    o_ref[...] = (xc * jax.lax.rsqrt(var + 1e-5)
                  * g_ref[...].astype(jnp.float32)).astype(o_ref.dtype)


def layernorm(x, gamma, *, out_dtype=None, tm=256):
    """LayerNorm over last dim (beta=0), tiled over rows."""
    M, D = x.shape
    tm = _tile(M, tm)
    out_dtype = out_dtype or x.dtype
    return pl.pallas_call(
        _ln_kernel,
        out_shape=jax.ShapeDtypeStruct((M, D), out_dtype),
        grid=(M // tm,),
        in_specs=[pl.BlockSpec((tm, D), lambda i: (i, 0)),
                  pl.BlockSpec((1, D), lambda i: (0, 0))],
        out_specs=pl.BlockSpec((tm, D), lambda i: (i, 0)),
        compiler_params=pltpu.CompilerParams(
            dimension_semantics=("parallel",)),
    )(x, gamma.reshape(1, D).astype(jnp.float32))


def _ln_matmul_kernel(x_ref, g_ref, w_ref, *rest, gelu, has_res):
    o_ref = rest[-1]
    x = x_ref[...].astype(jnp.float32)
    mu = jnp.mean(x, axis=-1, keepdims=True)
    xc = x - mu
    var = jnp.mean(xc * xc, axis=-1, keepdims=True)
    xn = xc * jax.lax.rsqrt(var + 1e-5) * g_ref[...].astype(jnp.float32)
    w = w_ref[...]
    acc = jnp.dot(xn.astype(w.dtype), w, preferred_element_type=jnp.float32)
    if gelu:
        # exact (erf) GELU, matching F.gelu default
        acc = 0.5 * acc * (1.0 + jax.lax.erf(acc * 0.7071067811865476))
    if has_res:
        acc = acc + rest[0][...].astype(jnp.float32)
    o_ref[...] = acc.astype(o_ref.dtype)


def ln_matmul(x, gamma, w, *, gelu=False, residual=None, out_dtype=None,
              tm=256, tn=256):
    """LayerNorm(x) @ w [+GELU] [+residual].  x:(M,K), w:(K,N)."""
    M, K = x.shape
    _, N = w.shape
    tm, tn = _tile(M, tm), _tile(N, tn)
    out_dtype = out_dtype or x.dtype
    in_specs = [pl.BlockSpec((tm, K), lambda i, j: (i, 0)),
                pl.BlockSpec((1, K), lambda i, j: (0, 0)),
                pl.BlockSpec((K, tn), lambda i, j: (0, j))]
    args = [x, gamma.reshape(1, K).astype(jnp.float32), w]
    if residual is not None:
        in_specs.append(pl.BlockSpec((tm, tn), lambda i, j: (i, j)))
        args.append(residual)
    kern = functools.partial(_ln_matmul_kernel, gelu=gelu,
                             has_res=residual is not None)
    return pl.pallas_call(
        kern,
        out_shape=jax.ShapeDtypeStruct((M, N), out_dtype),
        grid=(M // tm, N // tn),
        in_specs=in_specs,
        out_specs=pl.BlockSpec((tm, tn), lambda i, j: (i, j)),
        compiler_params=pltpu.CompilerParams(
            dimension_semantics=("parallel", "parallel")),
    )(*args)


def _matmul_ln_res_kernel(y_ref, w_ref, g_ref, r_ref, o_ref):
    acc = jnp.dot(y_ref[...], w_ref[...], preferred_element_type=jnp.float32)
    mu = jnp.mean(acc, axis=-1, keepdims=True)
    xc = acc - mu
    var = jnp.mean(xc * xc, axis=-1, keepdims=True)
    ln = xc * jax.lax.rsqrt(var + 1e-5) * g_ref[...].astype(jnp.float32)
    o_ref[...] = (ln + r_ref[...].astype(jnp.float32)).astype(o_ref.dtype)


def matmul_ln_residual(y, w, gamma, residual, *, tm=256):
    """(y @ w) -> LayerNorm -> + residual.  LN needs the full output row."""
    M, K = y.shape
    _, N = w.shape
    tm = _tile(M, tm)
    return pl.pallas_call(
        _matmul_ln_res_kernel,
        out_shape=jax.ShapeDtypeStruct((M, N), residual.dtype),
        grid=(M // tm,),
        in_specs=[pl.BlockSpec((tm, K), lambda i: (i, 0)),
                  pl.BlockSpec((K, N), lambda i: (0, 0)),
                  pl.BlockSpec((1, N), lambda i: (0, 0)),
                  pl.BlockSpec((tm, N), lambda i: (i, 0))],
        out_specs=pl.BlockSpec((tm, N), lambda i: (i, 0)),
        compiler_params=pltpu.CompilerParams(
            dimension_semantics=("parallel",)),
    )(y, w, gamma.reshape(1, N).astype(jnp.float32), residual)


def _ln_matmul_t_kernel(x_ref, g_ref, wt_ref, o_ref):
    x = x_ref[...].astype(jnp.float32)
    mu = jnp.mean(x, axis=-1, keepdims=True)
    xc = x - mu
    var = jnp.mean(xc * xc, axis=-1, keepdims=True)
    xn = xc * jax.lax.rsqrt(var + 1e-5) * g_ref[...].astype(jnp.float32)
    wt = wt_ref[...]
    o_ref[...] = jax.lax.dot_general(
        xn.astype(wt.dtype), wt,
        dimension_numbers=(((1,), (1,)), ((), ())),
        preferred_element_type=jnp.float32).astype(o_ref.dtype)


def ln_matmul_transposed(x, gamma, w_t, *, tm=256, tn=256):
    """LayerNorm(x) @ w_t.T without materializing the transpose (tied logits)."""
    M, K = x.shape
    N, _ = w_t.shape
    tm, tn = _tile(M, tm), _tile(N, tn)
    return pl.pallas_call(
        _ln_matmul_t_kernel,
        out_shape=jax.ShapeDtypeStruct((M, N), jnp.float32),
        grid=(M // tm, N // tn),
        in_specs=[pl.BlockSpec((tm, K), lambda i, j: (i, 0)),
                  pl.BlockSpec((1, K), lambda i, j: (0, 0)),
                  pl.BlockSpec((tn, K), lambda i, j: (j, 0))],
        out_specs=pl.BlockSpec((tm, tn), lambda i, j: (i, j)),
        compiler_params=pltpu.CompilerParams(
            dimension_semantics=("parallel", "parallel")),
    )(x, gamma.reshape(1, K).astype(jnp.float32), w_t)


def _self_attn_kernel(q_ref, kvx_ref, nkv_ref, bias_ref, o_ref):
    # q: (I*H, dh) bf16, rows ordered (i, h).  kvx: (I, dh).  nkv: (1, dh).
    # bias: (I*H, I) f32 with the causal mask baked in as -finfo.max.
    q = q_ref[0]
    kvx = kvx_ref[0]
    nkv = nkv_ref[...]
    s = jax.lax.dot_general(q, kvx, (((1,), (1,)), ((), ())),
                            preferred_element_type=jnp.float32)      # (I*H, I)
    s = s + bias_ref[...]
    s_null = jnp.sum(q.astype(jnp.float32) * nkv.astype(jnp.float32),
                     axis=-1, keepdims=True)                          # (I*H, 1)
    m = jnp.maximum(jnp.max(s, axis=-1, keepdims=True), s_null)
    e = jnp.exp(s - m)
    e_null = jnp.exp(s_null - m)
    inv = pl.reciprocal(jnp.sum(e, axis=-1, keepdims=True) + e_null,
                        approx=True)
    out = jnp.dot(e.astype(kvx.dtype), kvx,
                  preferred_element_type=jnp.float32)                 # (I*H, dh)
    out = (out + e_null * nkv.astype(jnp.float32)) * inv
    o_ref[0] = out.astype(o_ref.dtype)


def self_attention(q3, kvx3, null_kv, bias):
    """q3: (B, I*H, dh) pre-scaled, kvx3: (B, I, dh), bias: (I*H, I)."""
    B, IH, dh = q3.shape
    I = kvx3.shape[1]
    return pl.pallas_call(
        _self_attn_kernel,
        out_shape=jax.ShapeDtypeStruct((B, IH, dh), q3.dtype),
        grid=(B,),
        in_specs=[pl.BlockSpec((1, IH, dh), lambda b: (b, 0, 0)),
                  pl.BlockSpec((1, I, dh), lambda b: (b, 0, 0)),
                  pl.BlockSpec((1, dh), lambda b: (0, 0)),
                  pl.BlockSpec((IH, I), lambda b: (0, 0))],
        out_specs=pl.BlockSpec((1, IH, dh), lambda b: (b, 0, 0)),
        compiler_params=pltpu.CompilerParams(
            dimension_semantics=("parallel",)),
    )(q3, kvx3, null_kv, bias)


def _cross_attn_kernel(q_ref, ctx_ref, wkv_ref, nkv_ref, m_ref, o_ref):
    # q: (I*H, dh) bf16.  ctx: (T, C) bf16.  wkv: (C, dh).  mask: (1, T) int32.
    q = q_ref[0]
    ctx = ctx_ref[0]
    nkv = nkv_ref[...]
    kvx = jnp.dot(ctx, wkv_ref[...],
                  preferred_element_type=jnp.float32).astype(nkv.dtype)  # (T, dh)
    s = jax.lax.dot_general(q, kvx, (((1,), (1,)), ((), ())),
                            preferred_element_type=jnp.float32)          # (I*H, T)
    s = jnp.where(m_ref[0] != 0, s, _NEG)      # masked_fill(~mask, -finfo.max)
    s_null = jnp.sum(q.astype(jnp.float32) * nkv.astype(jnp.float32),
                     axis=-1, keepdims=True)
    m = jnp.maximum(jnp.max(s, axis=-1, keepdims=True), s_null)
    e = jnp.exp(s - m)
    e_null = jnp.exp(s_null - m)
    inv = pl.reciprocal(jnp.sum(e, axis=-1, keepdims=True) + e_null,
                        approx=True)
    out = jnp.dot(e.astype(kvx.dtype), kvx, preferred_element_type=jnp.float32)
    out = (out + e_null * nkv.astype(jnp.float32)) * inv
    o_ref[0] = out.astype(o_ref.dtype)


def cross_attention(q3, ctx, wkv, null_kv, mask):
    """q3: (B, I*H, dh) pre-scaled, ctx: (B, T, C), mask: (B, 1, T) int32."""
    B, IH, dh = q3.shape
    _, T, C = ctx.shape
    return pl.pallas_call(
        _cross_attn_kernel,
        out_shape=jax.ShapeDtypeStruct((B, IH, dh), q3.dtype),
        grid=(B,),
        in_specs=[pl.BlockSpec((1, IH, dh), lambda b: (b, 0, 0)),
                  pl.BlockSpec((1, T, C), lambda b: (b, 0, 0)),
                  pl.BlockSpec((C, dh), lambda b: (0, 0)),
                  pl.BlockSpec((1, dh), lambda b: (0, 0)),
                  pl.BlockSpec((1, 1, T), lambda b: (b, 0, 0))],
        out_specs=pl.BlockSpec((1, IH, dh), lambda b: (b, 0, 0)),
        compiler_params=pltpu.CompilerParams(
            dimension_semantics=("parallel",)),
    )(q3, ctx, wkv, null_kv, mask)


# ----------------------------- parameter setup -----------------------------

def make_pos_indices(size):
    ar = jnp.arange(size)
    gh, gw = jnp.meshgrid(ar, ar, indexing="ij")
    pos = jnp.stack([gh, gw], axis=-1).reshape(-1, 2)            # (size^2, 2)
    rel = pos[:, None, :] - pos[None, :, :] + (size - 1)          # (i, j, 2)
    return (rel[..., 0] * (2 * size - 1) + rel[..., 1]).astype(jnp.int32)


def init_params(key, cfg):
    D, H, dh = cfg["n_embed"], cfg["n_head"], cfg["dim_head"]
    V, C = cfg["vocab_size"], cfg["n_cond_embed"]
    size = cfg["image_encoded_dim"]
    hidden = 4 * D
    keys = iter(jax.random.split(key, 16 + 16 * cfg["n_layer"]))

    def nrm(shape, s=0.02):
        return jax.random.normal(next(keys), shape, jnp.float32) * s

    params = dict(
        tok_emb=jax.random.normal(next(keys), (V, D), jnp.float32),
        axial_h=jax.random.normal(next(keys), (size, D), jnp.float32),
        axial_w=jax.random.normal(next(keys), (size, D), jnp.float32),
        start_token=jax.random.normal(next(keys), (D,), jnp.float32),
        init_norm_g=jnp.ones((D,), jnp.float32),
        final_norm_g=jnp.ones((D,), jnp.float32),
        layers=[],
    )
    # TODO(synk): cond_proj / self.drop exist in __init__ but are never used in
    # forward; they are intentionally omitted here.
    for _ in range(cfg["n_layer"]):
        layer = dict(
            self=dict(norm_g=jnp.ones((D,), jnp.float32),
                      wq=nrm((D, H * dh)), wkv=nrm((D, dh)),
                      null_kv=jax.random.normal(next(keys), (dh,), jnp.float32),
                      wo=nrm((H * dh, D)),
                      out_norm_g=jnp.ones((D,), jnp.float32),
                      rel_pos_table=nrm(((2 * size - 1) ** 2, H))),
            cross=dict(norm_g=jnp.ones((D,), jnp.float32),
                       wq=nrm((D, H * dh)), wkv=nrm((C, dh)),
                       null_kv=jax.random.normal(next(keys), (dh,), jnp.float32),
                       wo=nrm((H * dh, D)),
                       out_norm_g=jnp.ones((D,), jnp.float32)),
            ff=dict(g1=jnp.ones((D,), jnp.float32), w1=nrm((D, hidden)),
                    g2=jnp.ones((hidden,), jnp.float32), w2=nrm((hidden, D))),
        )
        params["layers"].append(layer)
    return params


def prepare_params(params, cfg, seq_len):
    """One-time prep: bf16 weights, fused q|kv weight with scale folded into q,
    precomputed per-layer rel-pos bias (causal mask baked in)."""
    D, H, dh = cfg["n_embed"], cfg["n_head"], cfg["dim_head"]
    size = cfg["image_encoded_dim"]
    I = seq_len + 1
    scale = dh ** -0.5
    pos_idx = make_pos_indices(size)

    axial = (params["axial_w"][None, :, :] +
             params["axial_h"][:, None, :]).reshape(size * size, D)

    ii = jnp.arange(I)[:, None, None]
    jj = jnp.arange(I)[None, None, :]
    causal = jj >= ii + 1                         # matches triu(j - i + 1) w/ null slot

    prep = dict(
        tok_emb_f32=params["tok_emb"],
        tok_emb_bf16=params["tok_emb"].astype(_BF16),
        axial=axial,
        start_token=params["start_token"],
        init_norm_g=params["init_norm_g"],
        final_norm_g=params["final_norm_g"],
        layers=[],
    )
    for layer in params["layers"]:
        sa, ca, ff = layer["self"], layer["cross"], layer["ff"]
        w_qkv = jnp.concatenate([sa["wq"] * scale, sa["wkv"]],
                                axis=1).astype(_BF16)
        bias = jnp.take(sa["rel_pos_table"], pos_idx[:I, :I], axis=0)  # (I,I,H)
        bias = jnp.transpose(bias, (0, 2, 1))                          # (I,H,I)
        bias = jnp.where(causal, _NEG, bias)
        bias = bias.reshape(I * H, I).astype(jnp.float32)
        prep["layers"].append(dict(
            self=dict(norm_g=sa["norm_g"], w_qkv=w_qkv,
                      null_kv=sa["null_kv"].reshape(1, dh).astype(_BF16),
                      wo=sa["wo"].astype(_BF16),
                      out_norm_g=sa["out_norm_g"], bias=bias),
            cross=dict(norm_g=ca["norm_g"],
                       wq=(ca["wq"] * scale).astype(_BF16),
                       wkv=ca["wkv"].astype(_BF16),
                       null_kv=ca["null_kv"].reshape(1, dh).astype(_BF16),
                       wo=ca["wo"].astype(_BF16),
                       out_norm_g=ca["out_norm_g"]),
            ff=dict(g1=ff["g1"], w1=ff["w1"].astype(_BF16),
                    g2=ff["g2"], w2=ff["w2"].astype(_BF16)),
        ))
    return prep


# ------------------------------- forward pass -------------------------------

def gpt_forward(prep, image_token_ids, text_token_embeds, text_mask, cfg):
    B, S = image_token_ids.shape
    D, H, dh = cfg["n_embed"], cfg["n_head"], cfg["dim_head"]
    V = cfg["vocab_size"]
    I = S + 1
    M = B * I

    # token embedding gather + axial positional embedding (plain JAX glue)
    tok = jnp.take(prep["tok_emb_f32"], image_token_ids, axis=0)      # (B,S,D)
    tok = tok + prep["axial"][:S][None]
    start = jnp.broadcast_to(prep["start_token"][None, None, :], (B, 1, D))
    x = jnp.concatenate([start, tok], axis=1).reshape(M, D)           # f32

    # cond_drop_prob = 0.0 -> keep_mask is all True, text mask unchanged.
    text = text_token_embeds[:, :cfg["max_text_len"]].astype(_BF16)   # (B,T,C)
    T = text.shape[1]
    cmask = text_mask[:, :cfg["max_text_len"]].astype(jnp.int32).reshape(B, 1, T)

    x = layernorm(x, prep["init_norm_g"], out_dtype=_BF16)            # (M, D) bf16

    for layer in prep["layers"]:
        # -------- causal self-attention (rel-pos bias, null KV slot) --------
        sa = layer["self"]
        qkv = ln_matmul(x, sa["norm_g"], sa["w_qkv"], out_dtype=_BF16)  # (M, H*dh+dh)
        q3 = qkv[:, :H * dh].reshape(B, I * H, dh)     # free reshape, rows (i, h)
        kvx = qkv[:, H * dh:].reshape(B, I, dh)
        attn = self_attention(q3, kvx, sa["null_kv"], sa["bias"])       # (B, I*H, dh)
        x = matmul_ln_residual(attn.reshape(M, H * dh), sa["wo"],
                               sa["out_norm_g"], x)

        # --------------------------- cross-attention -------------------------
        ca = layer["cross"]
        q3 = ln_matmul(x, ca["norm_g"], ca["wq"],
                       out_dtype=_BF16).reshape(B, I * H, dh)
        attn = cross_attention(q3, text, ca["wkv"], ca["null_kv"], cmask)
        x = matmul_ln_residual(attn.reshape(M, H * dh), ca["wo"],
                               ca["out_norm_g"], x)

        # ----------------------------- feedforward ---------------------------
        ff = layer["ff"]
        h = ln_matmul(x, ff["g1"], ff["w1"], gelu=True, out_dtype=_BF16)
        x = ln_matmul(h, ff["g2"], ff["w2"], residual=x, out_dtype=_BF16)

    logits = ln_matmul_transposed(x, prep["final_norm_g"],
                                  prep["tok_emb_bf16"])               # (M, V) f32
    return logits.reshape(B, I, V)


# ----------------------------------- main -----------------------------------

if __name__ == "__main__":
    cfg = dict(vocab_size=64, n_layer=2, n_embed=32, n_head=2, dim_head=16,
               image_encoded_dim=4, n_cond_embed=48, max_text_len=128)

    key = jax.random.PRNGKey(0)
    k_param, k_ids, k_text = jax.random.split(key, 3)

    raw_params = init_params(k_param, cfg)

    B, S, T = 2, 8, 8                       # S <= image_encoded_dim**2 - 1
    prep = prepare_params(raw_params, cfg, S)

    image_token_ids = jax.random.randint(k_ids, (B, S), 0, cfg["vocab_size"])
    text_token_embeds = jax.random.normal(k_text, (B, T, cfg["n_cond_embed"]),
                                          jnp.float32)
    text_mask = jnp.array([[True] * T,
                           [True] * 5 + [False] * (T - 5)], dtype=jnp.bool_)

    fwd = jax.jit(functools.partial(gpt_forward, cfg=cfg))
    logits = fwd(prep, image_token_ids, text_token_embeds, text_mask)
    logits = jax.block_until_ready(logits)

    assert logits.shape == (B, S + 1, cfg["vocab_size"])
    assert bool(jnp.all(jnp.isfinite(logits)))
    print("KERNEL_OK")
</pallas_src>

<mosaic_0001>
module attributes {stable_mosaic.version = 11 : i64} {
  func.func @_ln_matmul_kernel(%arg0: i32, %arg1: i32, %arg2: memref<18x32xbf16, #tpu.memory_space<vmem>>, %arg3: memref<1x32xf32, #tpu.memory_space<vmem>>, %arg4: memref<32x48xbf16, #tpu.memory_space<vmem>>, %arg5: memref<18x48xbf16, #tpu.memory_space<vmem>>) attributes {dimension_semantics = [#tpu.dimension_semantics<parallel>, #tpu.dimension_semantics<parallel>], iteration_bounds = array<i64: 1, 1>, scalar_prefetch = 0 : i64, scratch_operands = 0 : i64, tpu.core_type = #tpu.core_type<tc>, window_params = [{transform_indices = @transform_0, window_bounds = array<i64: 18, 32>}, {pipeline_mode = #tpu.pipeline_mode<synchronous>, transform_indices = @transform_1, window_bounds = array<i64: 1, 32>}, {transform_indices = @transform_2, window_bounds = array<i64: 32, 48>}, {transform_indices = @transform_3, window_bounds = array<i64: 18, 48>}]} {
    %c0 = arith.constant 0 : index
    %c0_0 = arith.constant 0 : index
    %0 = vector.load %arg2[%c0, %c0_0] : memref<18x32xbf16, #tpu.memory_space<vmem>>, vector<18x32xbf16>
    %1 = arith.extf %0 : vector<18x32xbf16> to vector<18x32xf32>
    %cst = arith.constant dense<0.000000e+00> : vector<18xf32>
    %2 = vector.multi_reduction <add>, %1, %cst [1] : vector<18x32xf32> to vector<18xf32>
    %3 = vector.shape_cast %2 : vector<18xf32> to vector<18x1xf32>
    %cst_1 = arith.constant 3.200000e+01 : f32
    %4 = vector.broadcast %cst_1 : f32 to vector<18x1xf32>
    %5 = arith.divf %3, %4 : vector<18x1xf32>
    %6 = vector.broadcast %5 : vector<18x1xf32> to vector<18x32xf32>
    %7 = arith.subf %1, %6 : vector<18x32xf32>
    %8 = arith.mulf %7, %7 : vector<18x32xf32>
    %cst_2 = arith.constant dense<0.000000e+00> : vector<18xf32>
    %9 = vector.multi_reduction <add>, %8, %cst_2 [1] : vector<18x32xf32> to vector<18xf32>
    %10 = vector.shape_cast %9 : vector<18xf32> to vector<18x1xf32>
    %cst_3 = arith.constant 3.200000e+01 : f32
    %11 = vector.broadcast %cst_3 : f32 to vector<18x1xf32>
    %12 = arith.divf %10, %11 : vector<18x1xf32>
    %cst_4 = arith.constant 9.99999974E-6 : f32
    %13 = vector.broadcast %cst_4 : f32 to vector<18x1xf32>
    %14 = arith.addf %12, %13 : vector<18x1xf32>
    %15 = math.rsqrt %14 : vector<18x1xf32>
    %16 = vector.broadcast %15 : vector<18x1xf32> to vector<18x32xf32>
    %17 = arith.mulf %7, %16 : vector<18x32xf32>
    %c0_5 = arith.constant 0 : index
    %c0_6 = arith.constant 0 : index
    %18 = vector.load %arg3[%c0_5, %c0_6] : memref<1x32xf32, #tpu.memory_space<vmem>>, vector<1x32xf32>
    %19 = vector.broadcast %18 : vector<1x32xf32> to vector<18x32xf32>
    %20 = arith.mulf %17, %19 : vector<18x32xf32>
    %c0_7 = arith.constant 0 : index
    %c0_8 = arith.constant 0 : index
    %21 = vector.load %arg4[%c0_7, %c0_8] : memref<32x48xbf16, #tpu.memory_space<vmem>>, vector<32x48xbf16>
    %22 = arith.truncf %20 : vector<18x32xf32> to vector<18x32xbf16>
    %cst_9 = arith.constant dense<0.000000e+00> : vector<18x48xf32>
    %23 = tpu.matmul %22, %21, %cst_9 {dimension_numbers = #tpu.dot_dimension_numbers<[1], [0], [0], [1], [0, 0, 1, 1], [], []>} : vector<18x32xbf16>, vector<32x48xbf16>, vector<18x48xf32> -> vector<18x48xf32>
    %24 = arith.truncf %23 : vector<18x48xf32> to vector<18x48xbf16>
    %c0_10 = arith.constant 0 : index
    %c0_11 = arith.constant 0 : index
    %25 = vector.load %arg5[%c0_10, %c0_11] : memref<18x48xbf16, #tpu.memory_space<vmem>>, vector<18x48xbf16>
    tpu.vector_store %arg5[%c0_10, %c0_11], %24 {strides = array<i32>} : memref<18x48xbf16, #tpu.memory_space<vmem>>, vector<18x48xbf16>,
    return
  }
  func.func @transform_0(%arg0: i32, %arg1: i32) -> (i32, i32) {
    %c0_i32 = arith.constant 0 : i32
    %c0_i32_0 = arith.constant 0 : i32
    return %arg0, %c0_i32 : i32, i32
  }
  func.func @transform_1(%arg0: i32, %arg1: i32) -> (i32, i32) {
    %c0_i32 = arith.constant 0 : i32
    %c0_i32_0 = arith.constant 0 : i32
    %c0_i32_1 = arith.constant 0 : i32
    return %c0_i32, %c0_i32_0 : i32, i32
  }
  func.func @transform_2(%arg0: i32, %arg1: i32) -> (i32, i32) {
    %c0_i32 = arith.constant 0 : i32
    %c0_i32_0 = arith.constant 0 : i32
    return %c0_i32, %arg1 : i32, i32
  }
  func.func @transform_3(%arg0: i32, %arg1: i32) -> (i32, i32) {
    %c0_i32 = arith.constant 0 : i32
    return %arg0, %arg1 : i32, i32
  }
}

module attributes {stable_mosaic.version = 11 : i64} {
  func.func @_ln_kernel(%arg0: i32, %arg1: memref<18x32xf32, #tpu.memory_space<vmem>>, %arg2: memref<1x32xf32, #tpu.memory_space<vmem>>, %arg3: memref<18x32xbf16, #tpu.memory_space<vmem>>) attributes {dimension_semantics = [#tpu.dimension_semantics<parallel>], iteration_bounds = array<i64: 1>, scalar_prefetch = 0 : i64, scratch_operands = 0 : i64, tpu.core_type = #tpu.core_type<tc>, window_params = [{transform_indices = @transform_0, window_bounds = array<i64: 18, 32>}, {pipeline_mode = #tpu.pipeline_mode<synchronous>, transform_indices = @transform_1, window_bounds = array<i64: 1, 32>}, {transform_indices = @transform_2, window_bounds = array<i64: 18, 32>}]} {
    %c0 = arith.constant 0 : index
    %c0_0 = arith.constant 0 : index
    %0 = vector.load %arg1[%c0, %c0_0] : memref<18x32xf32, #tpu.memory_space<vmem>>, vector<18x32xf32>
    %cst = arith.constant dense<0.000000e+00> : vector<18xf32>
    %1 = vector.multi_reduction <add>, %0, %cst [1] : vector<18x32xf32> to vector<18xf32>
    %2 = vector.shape_cast %1 : vector<18xf32> to vector<18x1xf32>
    %cst_1 = arith.constant 3.200000e+01 : f32
    %3 = vector.broadcast %cst_1 : f32 to vector<18x1xf32>
    %4 = arith.divf %2, %3 : vector<18x1xf32>
    %5 = vector.broadcast %4 : vector<18x1xf32> to vector<18x32xf32>
    %6 = arith.subf %0, %5 : vector<18x32xf32>
    %7 = arith.mulf %6, %6 : vector<18x32xf32>
    %cst_2 = arith.constant dense<0.000000e+00> : vector<18xf32>
    %8 = vector.multi_reduction <add>, %7, %cst_2 [1] : vector<18x32xf32> to vector<18xf32>
    %9 = vector.shape_cast %8 : vector<18xf32> to vector<18x1xf32>
    %cst_3 = arith.constant 3.200000e+01 : f32
    %10 = vector.broadcast %cst_3 : f32 to vector<18x1xf32>
    %11 = arith.divf %9, %10 : vector<18x1xf32>
    %cst_4 = arith.constant 9.99999974E-6 : f32
    %12 = vector.broadcast %cst_4 : f32 to vector<18x1xf32>
    %13 = arith.addf %11, %12 : vector<18x1xf32>
    %14 = math.rsqrt %13 : vector<18x1xf32>
    %15 = vector.broadcast %14 : vector<18x1xf32> to vector<18x32xf32>
    %16 = arith.mulf %6, %15 : vector<18x32xf32>
    %c0_5 = arith.constant 0 : index
    %c0_6 = arith.constant 0 : index
    %17 = vector.load %arg2[%c0_5, %c0_6] : memref<1x32xf32, #tpu.memory_space<vmem>>, vector<1x32xf32>
    %18 = vector.broadcast %17 : vector<1x32xf32> to vector<18x32xf32>
    %19 = arith.mulf %16, %18 : vector<18x32xf32>
    %20 = arith.truncf %19 : vector<18x32xf32> to vector<18x32xbf16>
    %c0_7 = arith.constant 0 : index
    %c0_8 = arith.constant 0 : index
    %21 = vector.load %arg3[%c0_7, %c0_8] : memref<18x32xbf16, #tpu.memory_space<vmem>>, vector<18x32xbf16>
    tpu.vector_store %arg3[%c0_7, %c0_8], %20 {strides = array<i32>} : memref<18x32xbf16, #tpu.memory_space<vmem>>, vector<18x32xbf16>,
    return
  }
  func.func @transform_0(%arg0: i32) -> (i32, i32) {
    %c0_i32 = arith.constant 0 : i32
    %c0_i32_0 = arith.constant 0 : i32
    return %arg0, %c0_i32 : i32, i32
  }
  func.func @transform_1(%arg0: i32) -> (i32, i32) {
    %c0_i32 = arith.constant 0 : i32
    %c0_i32_0 = arith.constant 0 : i32
    %c0_i32_1 = arith.constant 0 : i32
    return %c0_i32, %c0_i32_0 : i32, i32
  }
  func.func @transform_2(%arg0: i32) -> (i32, i32) {
    %c0_i32 = arith.constant 0 : i32
    %c0_i32_0 = arith.constant 0 : i32
    return %arg0, %c0_i32 : i32, i32
  }
}

module attributes {stable_mosaic.version = 11 : i64} {
  func.func @_self_attn_kernel(%arg0: i32, %arg1: memref<1x18x16xbf16, #tpu.memory_space<vmem>>, %arg2: memref<1x9x16xbf16, #tpu.memory_space<vmem>>, %arg3: memref<1x16xbf16, #tpu.memory_space<vmem>>, %arg4: memref<18x9xf32, #tpu.memory_space<vmem>>, %arg5: memref<1x18x16xbf16, #tpu.memory_space<vmem>>) attributes {dimension_semantics = [#tpu.dimension_semantics<parallel>], iteration_bounds = array<i64: 2>, scalar_prefetch = 0 : i64, scratch_operands = 0 : i64, tpu.core_type = #tpu.core_type<tc>, window_params = [{transform_indices = @transform_0, window_bounds = array<i64: 1, 18, 16>}, {transform_indices = @transform_1, window_bounds = array<i64: 1, 9, 16>}, {pipeline_mode = #tpu.pipeline_mode<synchronous>, transform_indices = @transform_2, window_bounds = array<i64: 1, 16>}, {pipeline_mode = #tpu.pipeline_mode<synchronous>, transform_indices = @transform_3, window_bounds = array<i64: 18, 9>}, {transform_indices = @transform_4, window_bounds = array<i64: 1, 18, 16>}]} {
    %c0 = arith.constant 0 : index
    %c0_0 = arith.constant 0 : index
    %c0_1 = arith.constant 0 : index
    %0 = vector.load %arg1[%c0, %c0_0, %c0_1] : memref<1x18x16xbf16, #tpu.memory_space<vmem>>, vector<1x18x16xbf16>
    %1 = vector.shape_cast %0 : vector<1x18x16xbf16> to vector<18x16xbf16>
    %c0_2 = arith.constant 0 : index
    %c0_3 = arith.constant 0 : index
    %c0_4 = arith.constant 0 : index
    %2 = vector.load %arg2[%c0_2, %c0_3, %c0_4] : memref<1x9x16xbf16, #tpu.memory_space<vmem>>, vector<1x9x16xbf16>
    %3 = vector.shape_cast %2 : vector<1x9x16xbf16> to vector<9x16xbf16>
    %c0_5 = arith.constant 0 : index
    %c0_6 = arith.constant 0 : index
    %4 = vector.load %arg3[%c0_5, %c0_6] : memref<1x16xbf16, #tpu.memory_space<vmem>>, vector<1x16xbf16>
    %cst = arith.constant dense<0.000000e+00> : vector<18x9xf32>
    %5 = tpu.matmul %1, %3, %cst {dimension_numbers = #tpu.dot_dimension_numbers<[1], [1], [0], [0], [0, 0, 1, 0], [], []>} : vector<18x16xbf16>, vector<9x16xbf16>, vector<18x9xf32> -> vector<18x9xf32>
    %c0_7 = arith.constant 0 : index
    %c0_8 = arith.constant 0 : index
    %6 = vector.load %arg4[%c0_7, %c0_8] : memref<18x9xf32, #tpu.memory_space<vmem>>, vector<18x9xf32>
    %7 = arith.addf %5, %6 : vector<18x9xf32>
    %8 = arith.extf %1 : vector<18x16xbf16> to vector<18x16xf32>
    %9 = arith.extf %4 : vector<1x16xbf16> to vector<1x16xf32>
    %10 = vector.broadcast %9 : vector<1x16xf32> to vector<18x16xf32>
    %11 = arith.mulf %8, %10 : vector<18x16xf32>
    %cst_9 = arith.constant dense<0.000000e+00> : vector<18xf32>
    %12 = vector.multi_reduction <add>, %11, %cst_9 [1] : vector<18x16xf32> to vector<18xf32>
    %13 = vector.shape_cast %12 : vector<18xf32> to vector<18x1xf32>
    %cst_10 = arith.constant dense<0xFF800000> : vector<18xf32>
    %14 = vector.multi_reduction <maximumf>, %7, %cst_10 [1] : vector<18x9xf32> to vector<18xf32>
    %15 = vector.shape_cast %14 : vector<18xf32> to vector<18x1xf32>
    %16 = arith.maximumf %15, %13 : vector<18x1xf32>
    %17 = vector.broadcast %16 : vector<18x1xf32> to vector<18x9xf32>
    %18 = arith.subf %7, %17 : vector<18x9xf32>
    %19 = math.exp %18 : vector<18x9xf32>
    %20 = arith.subf %13, %16 : vector<18x1xf32>
    %21 = math.exp %20 : vector<18x1xf32>
    %cst_11 = arith.constant dense<0.000000e+00> : vector<18xf32>
    %22 = vector.multi_reduction <add>, %19, %cst_11 [1] : vector<18x9xf32> to vector<18xf32>
    %23 = vector.shape_cast %22 : vector<18xf32> to vector<18x1xf32>
    %24 = arith.addf %23, %21 : vector<18x1xf32>
    %25 = tpu.reciprocal %24 {approx = true} : vector<18x1xf32> -> vector<18x1xf32>
    %26 = arith.truncf %19 : vector<18x9xf32> to vector<18x9xbf16>
    %cst_12 = arith.constant dense<0.000000e+00> : vector<18x16xf32>
    %27 = tpu.matmul %26, %3, %cst_12 {dimension_numbers = #tpu.dot_dimension_numbers<[1], [0], [0], [1], [0, 0, 1, 1], [], []>} : vector<18x9xbf16>, vector<9x16xbf16>, vector<18x16xf32> -> vector<18x16xf32>
    %28 = arith.extf %4 : vector<1x16xbf16> to vector<1x16xf32>
    %29 = vector.broadcast %21 : vector<18x1xf32> to vector<18x16xf32>
    %30 = vector.broadcast %28 : vector<1x16xf32> to vector<18x16xf32>
    %31 = arith.mulf %29, %30 : vector<18x16xf32>
    %32 = arith.addf %27, %31 : vector<18x16xf32>
    %33 = vector.broadcast %25 : vector<18x1xf32> to vector<18x16xf32>
    %34 = arith.mulf %32, %33 : vector<18x16xf32>
    %35 = arith.truncf %34 : vector<18x16xf32> to vector<18x16xbf16>
    %c0_13 = arith.constant 0 : index
    %c0_14 = arith.constant 0 : index
    %c0_15 = arith.constant 0 : index
    %36 = vector.load %arg5[%c0_13, %c0_14, %c0_15] : memref<1x18x16xbf16, #tpu.memory_space<vmem>>, vector<1x18x16xbf16>
    %37 = vector.shape_cast %36 : vector<1x18x16xbf16> to vector<18x16xbf16>
    %38 = vector.shape_cast %35 : vector<18x16xbf16> to vector<1x18x16xbf16>
    tpu.vector_store %arg5[%c0_13, %c0_14, %c0_15], %38 {strides = array<i32>} : memref<1x18x16xbf16, #tpu.memory_space<vmem>>, vector<1x18x16xbf16>,
    return
  }
  func.func @transform_0(%arg0: i32) -> (i32, i32, i32) {
    %c0_i32 = arith.constant 0 : i32
    %c0_i32_0 = arith.constant 0 : i32
    %c0_i32_1 = arith.constant 0 : i32
    return %arg0, %c0_i32, %c0_i32_0 : i32, i32, i32
  }
  func.func @transform_1(%arg0: i32) -> (i32, i32, i32) {
    %c0_i32 = arith.constant 0 : i32
    %c0_i32_0 = arith.constant 0 : i32
    %c0_i32_1 = arith.constant 0 : i32
    return %arg0, %c0_i32, %c0_i32_0 : i32, i32, i32
  }
  func.func @transform_2(%arg0: i32) -> (i32, i32) {
    %c0_i32 = arith.constant 0 : i32
    %c0_i32_0 = arith.constant 0 : i32
    %c0_i32_1 = arith.constant 0 : i32
    return %c0_i32, %c0_i32_0 : i32, i32
  }
  func.func @transform_3(%arg0: i32) -> (i32, i32) {
    %c0_i32 = arith.constant 0 : i32
    %c0_i32_0 = arith.constant 0 : i32
    %c0_i32_1 = arith.constant 0 : i32
    return %c0_i32, %c0_i32_0 : i32, i32
  }
  func.func @transform_4(%arg0: i32) -> (i32, i32, i32) {
    %c0_i32 = arith.constant 0 : i32
    %c0_i32_0 = arith.constant 0 : i32
    %c0_i32_1 = arith.constant 0 : i32
    return %arg0, %c0_i32, %c0_i32_0 : i32, i32, i32
  }
}

module attributes {stable_mosaic.version = 11 : i64} {
  func.func @_matmul_ln_res_kernel(%arg0: i32, %arg1: memref<18x32xbf16, #tpu.memory_space<vmem>>, %arg2: memref<32x32xbf16, #tpu.memory_space<vmem>>, %arg3: memref<1x32xf32, #tpu.memory_space<vmem>>, %arg4: memref<18x32xbf16, #tpu.memory_space<vmem>>, %arg5: memref<18x32xbf16, #tpu.memory_space<vmem>>) attributes {dimension_semantics = [#tpu.dimension_semantics<parallel>], iteration_bounds = array<i64: 1>, scalar_prefetch = 0 : i64, scratch_operands = 0 : i64, tpu.core_type = #tpu.core_type<tc>, window_params = [{transform_indices = @transform_0, window_bounds = array<i64: 18, 32>}, {pipeline_mode = #tpu.pipeline_mode<synchronous>, transform_indices = @transform_1, window_bounds = array<i64: 32, 32>}, {pipeline_mode = #tpu.pipeline_mode<synchronous>, transform_indices = @transform_2, window_bounds = array<i64: 1, 32>}, {transform_indices = @transform_3, window_bounds = array<i64: 18, 32>}, {transform_indices = @transform_4, window_bounds = array<i64: 18, 32>}]} {
    %c0 = arith.constant 0 : index
    %c0_0 = arith.constant 0 : index
    %0 = vector.load %arg1[%c0, %c0_0] : memref<18x32xbf16, #tpu.memory_space<vmem>>, vector<18x32xbf16>
    %c0_1 = arith.constant 0 : index
    %c0_2 = arith.constant 0 : index
    %1 = vector.load %arg2[%c0_1, %c0_2] : memref<32x32xbf16, #tpu.memory_space<vmem>>, vector<32x32xbf16>
    %cst = arith.constant dense<0.000000e+00> : vector<18x32xf32>
    %2 = tpu.matmul %0, %1, %cst {dimension_numbers = #tpu.dot_dimension_numbers<[1], [0], [0], [1], [0, 0, 1, 1], [], []>} : vector<18x32xbf16>, vector<32x32xbf16>, vector<18x32xf32> -> vector<18x32xf32>
    %cst_3 = arith.constant dense<0.000000e+00> : vector<18xf32>
    %3 = vector.multi_reduction <add>, %2, %cst_3 [1] : vector<18x32xf32> to vector<18xf32>
    %4 = vector.shape_cast %3 : vector<18xf32> to vector<18x1xf32>
    %cst_4 = arith.constant 3.200000e+01 : f32
    %5 = vector.broadcast %cst_4 : f32 to vector<18x1xf32>
    %6 = arith.divf %4, %5 : vector<18x1xf32>
    %7 = vector.broadcast %6 : vector<18x1xf32> to vector<18x32xf32>
    %8 = arith.subf %2, %7 : vector<18x32xf32>
    %9 = arith.mulf %8, %8 : vector<18x32xf32>
    %cst_5 = arith.constant dense<0.000000e+00> : vector<18xf32>
    %10 = vector.multi_reduction <add>, %9, %cst_5 [1] : vector<18x32xf32> to vector<18xf32>
    %11 = vector.shape_cast %10 : vector<18xf32> to vector<18x1xf32>
    %cst_6 = arith.constant 3.200000e+01 : f32
    %12 = vector.broadcast %cst_6 : f32 to vector<18x1xf32>
    %13 = arith.divf %11, %12 : vector<18x1xf32>
    %cst_7 = arith.constant 9.99999974E-6 : f32
    %14 = vector.broadcast %cst_7 : f32 to vector<18x1xf32>
    %15 = arith.addf %13, %14 : vector<18x1xf32>
    %16 = math.rsqrt %15 : vector<18x1xf32>
    %17 = vector.broadcast %16 : vector<18x1xf32> to vector<18x32xf32>
    %18 = arith.mulf %8, %17 : vector<18x32xf32>
    %c0_8 = arith.constant 0 : index
    %c0_9 = arith.constant 0 : index
    %19 = vector.load %arg3[%c0_8, %c0_9] : memref<1x32xf32, #tpu.memory_space<vmem>>, vector<1x32xf32>
    %20 = vector.broadcast %19 : vector<1x32xf32> to vector<18x32xf32>
    %21 = arith.mulf %18, %20 : vector<18x32xf32>
    %c0_10 = arith.constant 0 : index
    %c0_11 = arith.constant 0 : index
    %22 = vector.load %arg4[%c0_10, %c0_11] : memref<18x32xbf16, #tpu.memory_space<vmem>>, vector<18x32xbf16>
    %23 = arith.extf %22 : vector<18x32xbf16> to vector<18x32xf32>
    %24 = arith.addf %21, %23 : vector<18x32xf32>
    %25 = arith.truncf %24 : vector<18x32xf32> to vector<18x32xbf16>
    %c0_12 = arith.constant 0 : index
    %c0_13 = arith.constant 0 : index
    %26 = vector.load %arg5[%c0_12, %c0_13] : memref<18x32xbf16, #tpu.memory_space<vmem>>, vector<18x32xbf16>
    tpu.vector_store %arg5[%c0_12, %c0_13], %25 {strides = array<i32>} : memref<18x32xbf16, #tpu.memory_space<vmem>>, vector<18x32xbf16>,
    return
  }
  func.func @transform_0(%arg0: i32) -> (i32, i32) {
    %c0_i32 = arith.constant 0 : i32
    %c0_i32_0 = arith.constant 0 : i32
    return %arg0, %c0_i32 : i32, i32
  }
  func.func @transform_1(%arg0: i32) -> (i32, i32) {
    %c0_i32 = arith.constant 0 : i32
    %c0_i32_0 = arith.constant 0 : i32
    %c0_i32_1 = arith.constant 0 : i32
    return %c0_i32, %c0_i32_0 : i32, i32
  }
  func.func @transform_2(%arg0: i32) -> (i32, i32) {
    %c0_i32 = arith.constant 0 : i32
    %c0_i32_0 = arith.constant 0 : i32
    %c0_i32_1 = arith.constant 0 : i32
    return %c0_i32, %c0_i32_0 : i32, i32
  }
  func.func @transform_3(%arg0: i32) -> (i32, i32) {
    %c0_i32 = arith.constant 0 : i32
    %c0_i32_0 = arith.constant 0 : i32
    return %arg0, %c0_i32 : i32, i32
  }
  func.func @transform_4(%arg0: i32) -> (i32, i32) {
    %c0_i32 = arith.constant 0 : i32
    %c0_i32_0 = arith.constant 0 : i32
    return %arg0, %c0_i32 : i32, i32
  }
}

module attributes {stable_mosaic.version = 11 : i64} {
  func.func @_ln_matmul_kernel(%arg0: i32, %arg1: i32, %arg2: memref<18x32xbf16, #tpu.memory_space<vmem>>, %arg3: memref<1x32xf32, #tpu.memory_space<vmem>>, %arg4: memref<32x32xbf16, #tpu.memory_space<vmem>>, %arg5: memref<18x32xbf16, #tpu.memory_space<vmem>>) attributes {dimension_semantics = [#tpu.dimension_semantics<parallel>, #tpu.dimension_semantics<parallel>], iteration_bounds = array<i64: 1, 1>, scalar_prefetch = 0 : i64, scratch_operands = 0 : i64, tpu.core_type = #tpu.core_type<tc>, window_params = [{transform_indices = @transform_0, window_bounds = array<i64: 18, 32>}, {pipeline_mode = #tpu.pipeline_mode<synchronous>, transform_indices = @transform_1, window_bounds = array<i64: 1, 32>}, {transform_indices = @transform_2, window_bounds = array<i64: 32, 32>}, {transform_indices = @transform_3, window_bounds = array<i64: 18, 32>}]} {
    %c0 = arith.constant 0 : index
    %c0_0 = arith.constant 0 : index
    %0 = vector.load %arg2[%c0, %c0_0] : memref<18x32xbf16, #tpu.memory_space<vmem>>, vector<18x32xbf16>
    %1 = arith.extf %0 : vector<18x32xbf16> to vector<18x32xf32>
    %cst = arith.constant dense<0.000000e+00> : vector<18xf32>
    %2 = vector.multi_reduction <add>, %1, %cst [1] : vector<18x32xf32> to vector<18xf32>
    %3 = vector.shape_cast %2 : vector<18xf32> to vector<18x1xf32>
    %cst_1 = arith.constant 3.200000e+01 : f32
    %4 = vector.broadcast %cst_1 : f32 to vector<18x1xf32>
    %5 = arith.divf %3, %4 : vector<18x1xf32>
    %6 = vector.broadcast %5 : vector<18x1xf32> to vector<18x32xf32>
    %7 = arith.subf %1, %6 : vector<18x32xf32>
    %8 = arith.mulf %7, %7 : vector<18x32xf32>
    %cst_2 = arith.constant dense<0.000000e+00> : vector<18xf32>
    %9 = vector.multi_reduction <add>, %8, %cst_2 [1] : vector<18x32xf32> to vector<18xf32>
    %10 = vector.shape_cast %9 : vector<18xf32> to vector<18x1xf32>
    %cst_3 = arith.constant 3.200000e+01 : f32
    %11 = vector.broadcast %cst_3 : f32 to vector<18x1xf32>
    %12 = arith.divf %10, %11 : vector<18x1xf32>
    %cst_4 = arith.constant 9.99999974E-6 : f32
    %13 = vector.broadcast %cst_4 : f32 to vector<18x1xf32>
    %14 = arith.addf %12, %13 : vector<18x1xf32>
    %15 = math.rsqrt %14 : vector<18x1xf32>
    %16 = vector.broadcast %15 : vector<18x1xf32> to vector<18x32xf32>
    %17 = arith.mulf %7, %16 : vector<18x32xf32>
    %c0_5 = arith.constant 0 : index
    %c0_6 = arith.constant 0 : index
    %18 = vector.load %arg3[%c0_5, %c0_6] : memref<1x32xf32, #tpu.memory_space<vmem>>, vector<1x32xf32>
    %19 = vector.broadcast %18 : vector<1x32xf32> to vector<18x32xf32>
    %20 = arith.mulf %17, %19 : vector<18x32xf32>
    %c0_7 = arith.constant 0 : index
    %c0_8 = arith.constant 0 : index
    %21 = vector.load %arg4[%c0_7, %c0_8] : memref<32x32xbf16, #tpu.memory_space<vmem>>, vector<32x32xbf16>
    %22 = arith.truncf %20 : vector<18x32xf32> to vector<18x32xbf16>
    %cst_9 = arith.constant dense<0.000000e+00> : vector<18x32xf32>
    %23 = tpu.matmul %22, %21, %cst_9 {dimension_numbers = #tpu.dot_dimension_numbers<[1], [0], [0], [1], [0, 0, 1, 1], [], []>} : vector<18x32xbf16>, vector<32x32xbf16>, vector<18x32xf32> -> vector<18x32xf32>
    %24 = arith.truncf %23 : vector<18x32xf32> to vector<18x32xbf16>
    %c0_10 = arith.constant 0 : index
    %c0_11 = arith.constant 0 : index
    %25 = vector.load %arg5[%c0_10, %c0_11] : memref<18x32xbf16, #tpu.memory_space<vmem>>, vector<18x32xbf16>
    tpu.vector_store %arg5[%c0_10, %c0_11], %24 {strides = array<i32>} : memref<18x32xbf16, #tpu.memory_space<vmem>>, vector<18x32xbf16>,
    return
  }
  func.func @transform_0(%arg0: i32, %arg1: i32) -> (i32, i32) {
    %c0_i32 = arith.constant 0 : i32
    %c0_i32_0 = arith.constant 0 : i32
    return %arg0, %c0_i32 : i32, i32
  }
  func.func @transform_1(%arg0: i32, %arg1: i32) -> (i32, i32) {
    %c0_i32 = arith.constant 0 : i32
    %c0_i32_0 = arith.constant 0 : i32
    %c0_i32_1 = arith.constant 0 : i32
    return %c0_i32, %c0_i32_0 : i32, i32
  }
  func.func @transform_2(%arg0: i32, %arg1: i32) -> (i32, i32) {
    %c0_i32 = arith.constant 0 : i32
    %c0_i32_0 = arith.constant 0 : i32
    return %c0_i32, %arg1 : i32, i32
  }
  func.func @transform_3(%arg0: i32, %arg1: i32) -> (i32, i32) {
    %c0_i32 = arith.constant 0 : i32
    return %arg0, %arg1 : i32, i32
  }
}

module attributes {stable_mosaic.version = 11 : i64} {
  func.func @_cross_attn_kernel(%arg0: i32, %arg1: memref<1x18x16xbf16, #tpu.memory_space<vmem>>, %arg2: memref<1x8x48xbf16, #tpu.memory_space<vmem>>, %arg3: memref<48x16xbf16, #tpu.memory_space<vmem>>, %arg4: memref<1x16xbf16, #tpu.memory_space<vmem>>, %arg5: memref<1x1x8xi32, #tpu.memory_space<vmem>>, %arg6: memref<1x18x16xbf16, #tpu.memory_space<vmem>>) attributes {dimension_semantics = [#tpu.dimension_semantics<parallel>], iteration_bounds = array<i64: 2>, scalar_prefetch = 0 : i64, scratch_operands = 0 : i64, tpu.core_type = #tpu.core_type<tc>, window_params = [{transform_indices = @transform_0, window_bounds = array<i64: 1, 18, 16>}, {transform_indices = @transform_1, window_bounds = array<i64: 1, 8, 48>}, {pipeline_mode = #tpu.pipeline_mode<synchronous>, transform_indices = @transform_2, window_bounds = array<i64: 48, 16>}, {pipeline_mode = #tpu.pipeline_mode<synchronous>, transform_indices = @transform_3, window_bounds = array<i64: 1, 16>}, {transform_indices = @transform_4, window_bounds = array<i64: 1, 1, 8>}, {transform_indices = @transform_5, window_bounds = array<i64: 1, 18, 16>}]} {
    %c0 = arith.constant 0 : index
    %c0_0 = arith.constant 0 : index
    %c0_1 = arith.constant 0 : index
    %0 = vector.load %arg1[%c0, %c0_0, %c0_1] : memref<1x18x16xbf16, #tpu.memory_space<vmem>>, vector<1x18x16xbf16>
    %1 = vector.shape_cast %0 : vector<1x18x16xbf16> to vector<18x16xbf16>
    %c0_2 = arith.constant 0 : index
    %c0_3 = arith.constant 0 : index
    %c0_4 = arith.constant 0 : index
    %2 = vector.load %arg2[%c0_2, %c0_3, %c0_4] : memref<1x8x48xbf16, #tpu.memory_space<vmem>>, vector<1x8x48xbf16>
    %3 = vector.shape_cast %2 : vector<1x8x48xbf16> to vector<8x48xbf16>
    %c0_5 = arith.constant 0 : index
    %c0_6 = arith.constant 0 : index
    %4 = vector.load %arg4[%c0_5, %c0_6] : memref<1x16xbf16, #tpu.memory_space<vmem>>, vector<1x16xbf16>
    %c0_7 = arith.constant 0 : index
    %c0_8 = arith.constant 0 : index
    %5 = vector.load %arg3[%c0_7, %c0_8] : memref<48x16xbf16, #tpu.memory_space<vmem>>, vector<48x16xbf16>
    %cst = arith.constant dense<0.000000e+00> : vector<8x16xf32>
    %6 = tpu.matmul %3, %5, %cst {dimension_numbers = #tpu.dot_dimension_numbers<[1], [0], [0], [1], [0, 0, 1, 1], [], []>} : vector<8x48xbf16>, vector<48x16xbf16>, vector<8x16xf32> -> vector<8x16xf32>
    %7 = arith.truncf %6 : vector<8x16xf32> to vector<8x16xbf16>
    %cst_9 = arith.constant dense<0.000000e+00> : vector<18x8xf32>
    %8 = tpu.matmul %1, %7, %cst_9 {dimension_numbers = #tpu.dot_dimension_numbers<[1], [1], [0], [0], [0, 0, 1, 0], [], []>} : vector<18x16xbf16>, vector<8x16xbf16>, vector<18x8xf32> -> vector<18x8xf32>
    %c0_10 = arith.constant 0 : index
    %c0_11 = arith.constant 0 : index
    %c0_12 = arith.constant 0 : index
    %9 = vector.load %arg5[%c0_10, %c0_11, %c0_12] : memref<1x1x8xi32, #tpu.memory_space<vmem>>, vector<1x1x8xi32>
    %10 = vector.shape_cast %9 : vector<1x1x8xi32> to vector<1x8xi32>
    %c0_i32 = arith.constant 0 : i32
    %11 = vector.broadcast %c0_i32 : i32 to vector<1x8xi32>
    %12 = arith.cmpi ne, %10, %11 : vector<1x8xi32>
    %cst_13 = arith.constant -3.40282347E+38 : f32
    %13 = vector.shape_cast %12 : vector<1x8xi1> to vector<1x8xi1>
    %14 = vector.broadcast %13 : vector<1x8xi1> to vector<18x8xi1>
    %15 = vector.broadcast %cst_13 : f32 to vector<18x8xf32>
    %16 = arith.select %14, %8, %15 : vector<18x8xi1>, vector<18x8xf32>
    %17 = arith.extf %1 : vector<18x16xbf16> to vector<18x16xf32>
    %18 = arith.extf %4 : vector<1x16xbf16> to vector<1x16xf32>
    %19 = vector.broadcast %18 : vector<1x16xf32> to vector<18x16xf32>
    %20 = arith.mulf %17, %19 : vector<18x16xf32>
    %cst_14 = arith.constant dense<0.000000e+00> : vector<18xf32>
    %21 = vector.multi_reduction <add>, %20, %cst_14 [1] : vector<18x16xf32> to vector<18xf32>
    %22 = vector.shape_cast %21 : vector<18xf32> to vector<18x1xf32>
    %cst_15 = arith.constant dense<0xFF800000> : vector<18xf32>
    %23 = vector.multi_reduction <maximumf>, %16, %cst_15 [1] : vector<18x8xf32> to vector<18xf32>
    %24 = vector.shape_cast %23 : vector<18xf32> to vector<18x1xf32>
    %25 = arith.maximumf %24, %22 : vector<18x1xf32>
    %26 = vector.broadcast %25 : vector<18x1xf32> to vector<18x8xf32>
    %27 = arith.subf %16, %26 : vector<18x8xf32>
    %28 = math.exp %27 : vector<18x8xf32>
    %29 = arith.subf %22, %25 : vector<18x1xf32>
    %30 = math.exp %29 : vector<18x1xf32>
    %cst_16 = arith.constant dense<0.000000e+00> : vector<18xf32>
    %31 = vector.multi_reduction <add>, %28, %cst_16 [1] : vector<18x8xf32> to vector<18xf32>
    %32 = vector.shape_cast %31 : vector<18xf32> to vector<18x1xf32>
    %33 = arith.addf %32, %30 : vector<18x1xf32>
    %34 = tpu.reciprocal %33 {approx = true} : vector<18x1xf32> -> vector<18x1xf32>
    %35 = arith.truncf %28 : vector<18x8xf32> to vector<18x8xbf16>
    %cst_17 = arith.constant dense<0.000000e+00> : vector<18x16xf32>
    %36 = tpu.matmul %35, %7, %cst_17 {dimension_numbers = #tpu.dot_dimension_numbers<[1], [0], [0], [1], [0, 0, 1, 1], [], []>} : vector<18x8xbf16>, vector<8x16xbf16>, vector<18x16xf32> -> vector<18x16xf32>
    %37 = arith.extf %4 : vector<1x16xbf16> to vector<1x16xf32>
    %38 = vector.broadcast %30 : vector<18x1xf32> to vector<18x16xf32>
    %39 = vector.broadcast %37 : vector<1x16xf32> to vector<18x16xf32>
    %40 = arith.mulf %38, %39 : vector<18x16xf32>
    %41 = arith.addf %36, %40 : vector<18x16xf32>
    %42 = vector.broadcast %34 : vector<18x1xf32> to vector<18x16xf32>
    %43 = arith.mulf %41, %42 : vector<18x16xf32>
    %44 = arith.truncf %43 : vector<18x16xf32> to vector<18x16xbf16>
    %c0_18 = arith.constant 0 : index
    %c0_19 = arith.constant 0 : index
    %c0_20 = arith.constant 0 : index
    %45 = vector.load %arg6[%c0_18, %c0_19, %c0_20] : memref<1x18x16xbf16, #tpu.memory_space<vmem>>, vector<1x18x16xbf16>
    %46 = vector.shape_cast %45 : vector<1x18x16xbf16> to vector<18x16xbf16>
    %47 = vector.shape_cast %44 : vector<18x16xbf16> to vector<1x18x16xbf16>
    tpu.vector_store %arg6[%c0_18, %c0_19, %c0_20], %47 {strides = array<i32>} : memref<1x18x16xbf16, #tpu.memory_space<vmem>>, vector<1x18x16xbf16>,
    return
  }
  func.func @transform_0(%arg0: i32) -> (i32, i32, i32) {
    %c0_i32 = arith.constant 0 : i32
    %c0_i32_0 = arith.constant 0 : i32
    %c0_i32_1 = arith.constant 0 : i32
    return %arg0, %c0_i32, %c0_i32_0 : i32, i32, i32
  }
  func.func @transform_1(%arg0: i32) -> (i32, i32, i32) {
    %c0_i32 = arith.constant 0 : i32
    %c0_i32_0 = arith.constant 0 : i32
    %c0_i32_1 = arith.constant 0 : i32
    return %arg0, %c0_i32, %c0_i32_0 : i32, i32, i32
  }
  func.func @transform_2(%arg0: i32) -> (i32, i32) {
    %c0_i32 = arith.constant 0 : i32
    %c0_i32_0 = arith.constant 0 : i32
    %c0_i32_1 = arith.constant 0 : i32
    return %c0_i32, %c0_i32_0 : i32, i32
  }
  func.func @transform_3(%arg0: i32) -> (i32, i32) {
    %c0_i32 = arith.constant 0 : i32
    %c0_i32_0 = arith.constant 0 : i32
    %c0_i32_1 = arith.constant 0 : i32
    return %c0_i32, %c0_i32_0 : i32, i32
  }
  func.func @transform_4(%arg0: i32) -> (i32, i32, i32) {
    %c0_i32 = arith.constant 0 : i32
    %c0_i32_0 = arith.constant 0 : i32
    %c0_i32_1 = arith.constant 0 : i32
    return %arg0, %c0_i32, %c0_i32_0 : i32, i32, i32
  }
  func.func @transform_5(%arg0: i32) -> (i32, i32, i32) {
    %c0_i32 = arith.constant 0 : i32
    %c0_i32_0 = arith.constant 0 : i32
    %c0_i32_1 = arith.constant 0 : i32
    return %arg0, %c0_i32, %c0_i32_0 : i32, i32, i32
  }
}

module attributes {stable_mosaic.version = 11 : i64} {
  func.func @_ln_matmul_kernel(%arg0: i32, %arg1: i32, %arg2: memref<18x128xbf16, #tpu.memory_space<vmem>>, %arg3: memref<1x128xf32, #tpu.memory_space<vmem>>, %arg4: memref<128x32xbf16, #tpu.memory_space<vmem>>, %arg5: memref<18x32xbf16, #tpu.memory_space<vmem>>, %arg6: memref<18x32xbf16, #tpu.memory_space<vmem>>) attributes {dimension_semantics = [#tpu.dimension_semantics<parallel>, #tpu.dimension_semantics<parallel>], iteration_bounds = array<i64: 1, 1>, scalar_prefetch = 0 : i64, scratch_operands = 0 : i64, tpu.core_type = #tpu.core_type<tc>, window_params = [{transform_indices = @transform_0, window_bounds = array<i64: 18, 128>}, {pipeline_mode = #tpu.pipeline_mode<synchronous>, transform_indices = @transform_1, window_bounds = array<i64: 1, 128>}, {transform_indices = @transform_2, window_bounds = array<i64: 128, 32>}, {transform_indices = @transform_3, window_bounds = array<i64: 18, 32>}, {transform_indices = @transform_4, window_bounds = array<i64: 18, 32>}]} {
    %c0 = arith.constant 0 : index
    %c0_0 = arith.constant 0 : index
    %0 = vector.load %arg2[%c0, %c0_0] : memref<18x128xbf16, #tpu.memory_space<vmem>>, vector<18x128xbf16>
    %1 = arith.extf %0 : vector<18x128xbf16> to vector<18x128xf32>
    %cst = arith.constant dense<0.000000e+00> : vector<18xf32>
    %2 = vector.multi_reduction <add>, %1, %cst [1] : vector<18x128xf32> to vector<18xf32>
    %3 = vector.shape_cast %2 : vector<18xf32> to vector<18x1xf32>
    %cst_1 = arith.constant 1.280000e+02 : f32
    %4 = vector.broadcast %cst_1 : f32 to vector<18x1xf32>
    %5 = arith.divf %3, %4 : vector<18x1xf32>
    %6 = vector.broadcast %5 : vector<18x1xf32> to vector<18x128xf32>
    %7 = arith.subf %1, %6 : vector<18x128xf32>
    %8 = arith.mulf %7, %7 : vector<18x128xf32>
    %cst_2 = arith.constant dense<0.000000e+00> : vector<18xf32>
    %9 = vector.multi_reduction <add>, %8, %cst_2 [1] : vector<18x128xf32> to vector<18xf32>
    %10 = vector.shape_cast %9 : vector<18xf32> to vector<18x1xf32>
    %cst_3 = arith.constant 1.280000e+02 : f32
    %11 = vector.broadcast %cst_3 : f32 to vector<18x1xf32>
    %12 = arith.divf %10, %11 : vector<18x1xf32>
    %cst_4 = arith.constant 9.99999974E-6 : f32
    %13 = vector.broadcast %cst_4 : f32 to vector<18x1xf32>
    %14 = arith.addf %12, %13 : vector<18x1xf32>
    %15 = math.rsqrt %14 : vector<18x1xf32>
    %16 = vector.broadcast %15 : vector<18x1xf32> to vector<18x128xf32>
    %17 = arith.mulf %7, %16 : vector<18x128xf32>
    %c0_5 = arith.constant 0 : index
    %c0_6 = arith.constant 0 : index
    %18 = vector.load %arg3[%c0_5, %c0_6] : memref<1x128xf32, #tpu.memory_space<vmem>>, vector<1x128xf32>
    %19 = vector.broadcast %18 : vector<1x128xf32> to vector<18x128xf32>
    %20 = arith.mulf %17, %19 : vector<18x128xf32>
    %c0_7 = arith.constant 0 : index
    %c0_8 = arith.constant 0 : index
    %21 = vector.load %arg4[%c0_7, %c0_8] : memref<128x32xbf16, #tpu.memory_space<vmem>>, vector<128x32xbf16>
    %22 = arith.truncf %20 : vector<18x128xf32> to vector<18x128xbf16>
    %cst_9 = arith.constant dense<0.000000e+00> : vector<18x32xf32>
    %23 = tpu.matmul %22, %21, %cst_9 {dimension_numbers = #tpu.dot_dimension_numbers<[1], [0], [0], [1], [0, 0, 1, 1], [], []>} : vector<18x128xbf16>, vector<128x32xbf16>, vector<18x32xf32> -> vector<18x32xf32>
    %c0_10 = arith.constant 0 : index
    %c0_11 = arith.constant 0 : index
    %24 = vector.load %arg5[%c0_10, %c0_11] : memref<18x32xbf16, #tpu.memory_space<vmem>>, vector<18x32xbf16>
    %25 = arith.extf %24 : vector<18x32xbf16> to vector<18x32xf32>
    %26 = arith.addf %23, %25 : vector<18x32xf32>
    %27 = arith.truncf %26 : vector<18x32xf32> to vector<18x32xbf16>
    %c0_12 = arith.constant 0 : index
    %c0_13 = arith.constant 0 : index
    %28 = vector.load %arg6[%c0_12, %c0_13] : memref<18x32xbf16, #tpu.memory_space<vmem>>, vector<18x32xbf16>
    tpu.vector_store %arg6[%c0_12, %c0_13], %27 {strides = array<i32>} : memref<18x32xbf16, #tpu.memory_space<vmem>>, vector<18x32xbf16>,
    return
  }
  func.func @transform_0(%arg0: i32, %arg1: i32) -> (i32, i32) {
    %c0_i32 = arith.constant 0 : i32
    %c0_i32_0 = arith.constant 0 : i32
    return %arg0, %c0_i32 : i32, i32
  }
  func.func @transform_1(%arg0: i32, %arg1: i32) -> (i32, i32) {
    %c0_i32 = arith.constant 0 : i32
    %c0_i32_0 = arith.constant 0 : i32
    %c0_i32_1 = arith.constant 0 : i32
    return %c0_i32, %c0_i32_0 : i32, i32
  }
  func.func @transform_2(%arg0: i32, %arg1: i32) -> (i32, i32) {
    %c0_i32 = arith.constant 0 : i32
    %c0_i32_0 = arith.constant 0 : i32
    return %c0_i32, %arg1 : i32, i32
  }
  func.func @transform_3(%arg0: i32, %arg1: i32) -> (i32, i32) {
    %c0_i32 = arith.constant 0 : i32
    return %arg0, %arg1 : i32, i32
  }
  func.func @transform_4(%arg0: i32, %arg1: i32) -> (i32, i32) {
    %c0_i32 = arith.constant 0 : i32
    return %arg0, %arg1 : i32, i32
  }
}

module attributes {stable_mosaic.version = 11 : i64} {
  func.func @_ln_matmul_kernel(%arg0: i32, %arg1: i32, %arg2: memref<18x32xbf16, #tpu.memory_space<vmem>>, %arg3: memref<1x32xf32, #tpu.memory_space<vmem>>, %arg4: memref<32x128xbf16, #tpu.memory_space<vmem>>, %arg5: memref<18x128xbf16, #tpu.memory_space<vmem>>) attributes {dimension_semantics = [#tpu.dimension_semantics<parallel>, #tpu.dimension_semantics<parallel>], iteration_bounds = array<i64: 1, 1>, scalar_prefetch = 0 : i64, scratch_operands = 0 : i64, tpu.core_type = #tpu.core_type<tc>, window_params = [{transform_indices = @transform_0, window_bounds = array<i64: 18, 32>}, {pipeline_mode = #tpu.pipeline_mode<synchronous>, transform_indices = @transform_1, window_bounds = array<i64: 1, 32>}, {transform_indices = @transform_2, window_bounds = array<i64: 32, 128>}, {transform_indices = @transform_3, window_bounds = array<i64: 18, 128>}]} {
    %c0 = arith.constant 0 : index
    %c0_0 = arith.constant 0 : index
    %0 = vector.load %arg2[%c0, %c0_0] : memref<18x32xbf16, #tpu.memory_space<vmem>>, vector<18x32xbf16>
    %1 = arith.extf %0 : vector<18x32xbf16> to vector<18x32xf32>
    %cst = arith.constant dense<0.000000e+00> : vector<18xf32>
    %2 = vector.multi_reduction <add>, %1, %cst [1] : vector<18x32xf32> to vector<18xf32>
    %3 = vector.shape_cast %2 : vector<18xf32> to vector<18x1xf32>
    %cst_1 = arith.constant 3.200000e+01 : f32
    %4 = vector.broadcast %cst_1 : f32 to vector<18x1xf32>
    %5 = arith.divf %3, %4 : vector<18x1xf32>
    %6 = vector.broadcast %5 : vector<18x1xf32> to vector<18x32xf32>
    %7 = arith.subf %1, %6 : vector<18x32xf32>
    %8 = arith.mulf %7, %7 : vector<18x32xf32>
    %cst_2 = arith.constant dense<0.000000e+00> : vector<18xf32>
    %9 = vector.multi_reduction <add>, %8, %cst_2 [1] : vector<18x32xf32> to vector<18xf32>
    %10 = vector.shape_cast %9 : vector<18xf32> to vector<18x1xf32>
    %cst_3 = arith.constant 3.200000e+01 : f32
    %11 = vector.broadcast %cst_3 : f32 to vector<18x1xf32>
    %12 = arith.divf %10, %11 : vector<18x1xf32>
    %cst_4 = arith.constant 9.99999974E-6 : f32
    %13 = vector.broadcast %cst_4 : f32 to vector<18x1xf32>
    %14 = arith.addf %12, %13 : vector<18x1xf32>
    %15 = math.rsqrt %14 : vector<18x1xf32>
    %16 = vector.broadcast %15 : vector<18x1xf32> to vector<18x32xf32>
    %17 = arith.mulf %7, %16 : vector<18x32xf32>
    %c0_5 = arith.constant 0 : index
    %c0_6 = arith.constant 0 : index
    %18 = vector.load %arg3[%c0_5, %c0_6] : memref<1x32xf32, #tpu.memory_space<vmem>>, vector<1x32xf32>
    %19 = vector.broadcast %18 : vector<1x32xf32> to vector<18x32xf32>
    %20 = arith.mulf %17, %19 : vector<18x32xf32>
    %c0_7 = arith.constant 0 : index
    %c0_8 = arith.constant 0 : index
    %21 = vector.load %arg4[%c0_7, %c0_8] : memref<32x128xbf16, #tpu.memory_space<vmem>>, vector<32x128xbf16>
    %22 = arith.truncf %20 : vector<18x32xf32> to vector<18x32xbf16>
    %cst_9 = arith.constant dense<0.000000e+00> : vector<18x128xf32>
    %23 = tpu.matmul %22, %21, %cst_9 {dimension_numbers = #tpu.dot_dimension_numbers<[1], [0], [0], [1], [0, 0, 1, 1], [], []>} : vector<18x32xbf16>, vector<32x128xbf16>, vector<18x128xf32> -> vector<18x128xf32>
    %cst_10 = arith.constant 5.000000e-01 : f32
    %24 = vector.broadcast %cst_10 : f32 to vector<18x128xf32>
    %25 = arith.mulf %24, %23 : vector<18x128xf32>
    %cst_11 = arith.constant 0.707106769 : f32
    %26 = vector.broadcast %cst_11 : f32 to vector<18x128xf32>
    %27 = arith.mulf %23, %26 : vector<18x128xf32>
    %28 = math.erf %27 : vector<18x128xf32>
    %cst_12 = arith.constant 1.000000e+00 : f32
    %29 = vector.broadcast %cst_12 : f32 to vector<18x128xf32>
    %30 = arith.addf %29, %28 : vector<18x128xf32>
    %31 = arith.mulf %25, %30 : vector<18x128xf32>
    %32 = arith.truncf %31 : vector<18x128xf32> to vector<18x128xbf16>
    %c0_13 = arith.constant 0 : index
    %c0_14 = arith.constant 0 : index
    %33 = vector.load %arg5[%c0_13, %c0_14] : memref<18x128xbf16, #tpu.memory_space<vmem>>, vector<18x128xbf16>
    tpu.vector_store %arg5[%c0_13, %c0_14], %32 {strides = array<i32>} : memref<18x128xbf16, #tpu.memory_space<vmem>>, vector<18x128xbf16>,
    return
  }
  func.func @transform_0(%arg0: i32, %arg1: i32) -> (i32, i32) {
    %c0_i32 = arith.constant 0 : i32
    %c0_i32_0 = arith.constant 0 : i32
    return %arg0, %c0_i32 : i32, i32
  }
  func.func @transform_1(%arg0: i32, %arg1: i32) -> (i32, i32) {
    %c0_i32 = arith.constant 0 : i32
    %c0_i32_0 = arith.constant 0 : i32
    %c0_i32_1 = arith.constant 0 : i32
    return %c0_i32, %c0_i32_0 : i32, i32
  }
  func.func @transform_2(%arg0: i32, %arg1: i32) -> (i32, i32) {
    %c0_i32 = arith.constant 0 : i32
    %c0_i32_0 = arith.constant 0 : i32
    return %c0_i32, %arg1 : i32, i32
  }
  func.func @transform_3(%arg0: i32, %arg1: i32) -> (i32, i32) {
    %c0_i32 = arith.constant 0 : i32
    return %arg0, %arg1 : i32, i32
  }
}

module attributes {stable_mosaic.version = 11 : i64} {
  func.func @_ln_matmul_t_kernel(%arg0: i32, %arg1: i32, %arg2: memref<18x32xbf16, #tpu.memory_space<vmem>>, %arg3: memref<1x32xf32, #tpu.memory_space<vmem>>, %arg4: memref<64x32xbf16, #tpu.memory_space<vmem>>, %arg5: memref<18x64xf32, #tpu.memory_space<vmem>>) attributes {dimension_semantics = [#tpu.dimension_semantics<parallel>, #tpu.dimension_semantics<parallel>], iteration_bounds = array<i64: 1, 1>, scalar_prefetch = 0 : i64, scratch_operands = 0 : i64, tpu.core_type = #tpu.core_type<tc>, window_params = [{transform_indices = @transform_0, window_bounds = array<i64: 18, 32>}, {pipeline_mode = #tpu.pipeline_mode<synchronous>, transform_indices = @transform_1, window_bounds = array<i64: 1, 32>}, {transform_indices = @transform_2, window_bounds = array<i64: 64, 32>}, {transform_indices = @transform_3, window_bounds = array<i64: 18, 64>}]} {
    %c0 = arith.constant 0 : index
    %c0_0 = arith.constant 0 : index
    %0 = vector.load %arg2[%c0, %c0_0] : memref<18x32xbf16, #tpu.memory_space<vmem>>, vector<18x32xbf16>
    %1 = arith.extf %0 : vector<18x32xbf16> to vector<18x32xf32>
    %cst = arith.constant dense<0.000000e+00> : vector<18xf32>
    %2 = vector.multi_reduction <add>, %1, %cst [1] : vector<18x32xf32> to vector<18xf32>
    %3 = vector.shape_cast %2 : vector<18xf32> to vector<18x1xf32>
    %cst_1 = arith.constant 3.200000e+01 : f32
    %4 = vector.broadcast %cst_1 : f32 to vector<18x1xf32>
    %5 = arith.divf %3, %4 : vector<18x1xf32>
    %6 = vector.broadcast %5 : vector<18x1xf32> to vector<18x32xf32>
    %7 = arith.subf %1, %6 : vector<18x32xf32>
    %8 = arith.mulf %7, %7 : vector<18x32xf32>
    %cst_2 = arith.constant dense<0.000000e+00> : vector<18xf32>
    %9 = vector.multi_reduction <add>, %8, %cst_2 [1] : vector<18x32xf32> to vector<18xf32>
    %10 = vector.shape_cast %9 : vector<18xf32> to vector<18x1xf32>
    %cst_3 = arith.constant 3.200000e+01 : f32
    %11 = vector.broadcast %cst_3 : f32 to vector<18x1xf32>
    %12 = arith.divf %10, %11 : vector<18x1xf32>
    %cst_4 = arith.constant 9.99999974E-6 : f32
    %13 = vector.broadcast %cst_4 : f32 to vector<18x1xf32>
    %14 = arith.addf %12, %13 : vector<18x1xf32>
    %15 = math.rsqrt %14 : vector<18x1xf32>
    %16 = vector.broadcast %15 : vector<18x1xf32> to vector<18x32xf32>
    %17 = arith.mulf %7, %16 : vector<18x32xf32>
    %c0_5 = arith.constant 0 : index
    %c0_6 = arith.constant 0 : index
    %18 = vector.load %arg3[%c0_5, %c0_6] : memref<1x32xf32, #tpu.memory_space<vmem>>, vector<1x32xf32>
    %19 = vector.broadcast %18 : vector<1x32xf32> to vector<18x32xf32>
    %20 = arith.mulf %17, %19 : vector<18x32xf32>
    %c0_7 = arith.constant 0 : index
    %c0_8 = arith.constant 0 : index
    %21 = vector.load %arg4[%c0_7, %c0_8] : memref<64x32xbf16, #tpu.memory_space<vmem>>, vector<64x32xbf16>
    %22 = arith.truncf %20 : vector<18x32xf32> to vector<18x32xbf16>
    %cst_9 = arith.constant dense<0.000000e+00> : vector<18x64xf32>
    %23 = tpu.matmul %22, %21, %cst_9 {dimension_numbers = #tpu.dot_dimension_numbers<[1], [1], [0], [0], [0, 0, 1, 0], [], []>} : vector<18x32xbf16>, vector<64x32xbf16>, vector<18x64xf32> -> vector<18x64xf32>
    %c0_10 = arith.constant 0 : index
    %c0_11 = arith.constant 0 : index
    %24 = vector.load %arg5[%c0_10, %c0_11] : memref<18x64xf32, #tpu.memory_space<vmem>>, vector<18x64xf32>
    tpu.vector_store %arg5[%c0_10, %c0_11], %23 {strides = array<i32>} : memref<18x64xf32, #tpu.memory_space<vmem>>, vector<18x64xf32>,
    return
  }
  func.func @transform_0(%arg0: i32, %arg1: i32) -> (i32, i32) {
    %c0_i32 = arith.constant 0 : i32
    %c0_i32_0 = arith.constant 0 : i32
    return %arg0, %c0_i32 : i32, i32
  }
  func.func @transform_1(%arg0: i32, %arg1: i32) -> (i32, i32) {
    %c0_i32 = arith.constant 0 : i32
    %c0_i32_0 = arith.constant 0 : i32
    %c0_i32_1 = arith.constant 0 : i32
    return %c0_i32, %c0_i32_0 : i32, i32
  }
  func.func @transform_2(%arg0: i32, %arg1: i32) -> (i32, i32) {
    %c0_i32 = arith.constant 0 : i32
    %c0_i32_0 = arith.constant 0 : i32
    return %arg1, %c0_i32 : i32, i32
  }
  func.func @transform_3(%arg0: i32, %arg1: i32) -> (i32, i32) {
    %c0_i32 = arith.constant 0 : i32
    return %arg0, %arg1 : i32, i32
  }
}

</mosaic_0001>

<llo_original>
// kernel: gpt_forward.18
$region0: #{gpt_forward.18}
  #allocation0 [shape = 'u32[]', space=smem, size = 0x4, offset = 0x4, fixed_abs, tag = 'smem constant byte address 0x4 - core index']
  #allocation1 [shape = 'u32[144,128]{1,0:T(1,128)}', space=vmem, size = 0x12000, scoped, tag = 'internal scratch']
  %s0 = inlined_call_operand.vmem [shape: f32[18,32], index: 0, kind: input, shape index: {}]
  %s1 = inlined_call_operand.vmem [shape: f32[1,32], index: 1, kind: input, shape index: {}]
  %s2 = inlined_call_operand.vmem [shape: bf16[18,32], index: 2, kind: output, shape index: {}]
  %s3 = sld [smem:[#allocation0]]
  $region18: #{gpt_forward.18} parent=0
    _
  %s5 = ssub.s32 1, %s3
  %s6 = scalar_select 0, %s5, %s3
  // Predicated region
  $region2: #{gpt_forward.18} parent=0 // pred_check
    _
  $region3: #{gpt_forward.18} parent=0 // pred_check_branch
    %8 = sbr.rel (0) target = $region5
  $region4: #{gpt_forward.18} parent=0 // pred_region
    _
  $region5: #{gpt_forward.18} parent=0 // pred_fallthru
    _
  // Predicated region
  $region6: #{gpt_forward.18} parent=0 // pred_check
    _
  $region7: #{gpt_forward.18} parent=0 // pred_check_branch
    %10 = sbr.rel (0) target = $region9
  $region8: #{gpt_forward.18} parent=0 // pred_region
    _
  $region9: #{gpt_forward.18} parent=0 // pred_fallthru
    _
  %v11 = vld [vmem:[%s0] sm:$0xff]
  %v12 = vld [vmem:[%s0 + $0x8] sm:$0xff]
  %v13 = vld [vmem:[%s0 + $0x10] sm:$0x3]
  %vm14 = vcmask 261120
  %v15 = vsel %vm14, %v11, 0.0
  %16 = vadd.xlane.f32.xlu0 %v15
  %v17 = vpop.xlane.xlu0 %16
  %v18 = vsel %vm14, %v12, 0.0
  %19 = vadd.xlane.f32.xlu0 %v18
  %v20 = vpop.xlane.xlu0 %19
  %vm21 = vcmask 254976
  %v22 = vsel %vm21, %v13, 0.0
  %23 = vadd.xlane.f32.xlu0 %v22
  %v24 = vpop.xlane.xlu0 %23
  %v25 = vrcp.pop 32.0
  %v26 = vmul.f32 %v17, %v25
  %v27 = vmul.f32 %v20, %v25
  %v28 = vmul.f32 %v24, %v25
  %v29 = vsub.f32 %v11, %v26
  %v30 = vsub.f32 %v12, %v27
  %v31 = vsub.f32 %v13, %v28
  %v32 = vmul.f32 %v29, %v29
  %v33 = vmul.f32 %v30, %v30
  %v34 = vmul.f32 %v31, %v31
  %v35 = vsel %vm14, %v32, 0.0
  %36 = vadd.xlane.f32.xlu0 %v35
  %v37 = vpop.xlane.xlu0 %36
  %v38 = vsel %vm14, %v33, 0.0
  %39 = vadd.xlane.f32.xlu0 %v38
  %v40 = vpop.xlane.xlu0 %39
  %v41 = vsel %vm21, %v34, 0.0
  %42 = vadd.xlane.f32.xlu0 %v41
  %v43 = vpop.xlane.xlu0 %42
  %v44 = vmul.f32 %v37, %v25
  %v45 = vmul.f32 %v40, %v25
  %v46 = vmul.f32 %v43, %v25
  %v47 = vadd.f32 %v44, 1e-05
  %v48 = vadd.f32 %v45, 1e-05
  %v49 = vadd.f32 %v46, 1e-05
  %v50 = vrsqrt.pop %v47
  %v51 = vrsqrt.pop %v48
  %v52 = vrsqrt.pop %v49
  %v53 = vmul.f32 %v29, %v50
  %v54 = vmul.f32 %v30, %v51
  %v55 = vmul.f32 %v31, %v52
  %v56 = vld [vmem:[%s1] sm:$0x1]
  %v58 = vlaneseq
  %v59 = vshrl.u32 %v58, 7
  %v60 = vsub.s32 0, %v59
  %v61 = vrot.slane %v56, %v60
  %v63 = vmul.f32 %v53, %v61
  %v64 = vmul.f32 %v54, %v61
  %v65 = vmul.f32 %v55, %v61
  %v66 = vpack.c.bf16 %v64, %v63
  %v67 = vpack.c.bf16 %v65, %v65
  %v70 = vunpack.c.l.b16 %v66
  %v71 = vunpack.c.h.b16 %v66
  %v72 = vunpack.c.l.b16 %v67
  %v73 = vpack.c.b16 %v70, %v70
  %v74 = vpack.c.b16 %v71, %v71
  %v75 = vpack.c.b16 %v72, %v72
  %vm79 = vcmask 257024
  %80 = vst.msk [vmem:[%s2] sm:$0xf] %vm79, %v73
  %81 = vst.msk [vmem:[%s2 + $0x4] sm:$0xf] %vm79, %v74
  %vm82 = vcmask 253952
  %83 = vst.msk [vmem:[%s2 + $0x8] sm:$0x1] %vm82, %v75
  // Predicated region
  $region10: #{gpt_forward.18} parent=0 // pred_check
    _
  $region11: #{gpt_forward.18} parent=0 // pred_check_branch
    %85 = sbr.rel (0) target = $region13
  $region12: #{gpt_forward.18} parent=0 // pred_region
    _
  $region13: #{gpt_forward.18} parent=0 // pred_fallthru
    _
  // Predicated region
  $region14: #{gpt_forward.18} parent=0 // pred_check
    _
  $region15: #{gpt_forward.18} parent=0 // pred_check_branch
    %87 = sbr.rel (0) target = $region17
  $region16: #{gpt_forward.18} parent=0 // pred_region
    _
  $region17: #{gpt_forward.18} parent=0 // pred_fallthru
    _

// kernel: gpt_forward.19
$region0: #{gpt_forward.19}
  #allocation0 [shape = 'u32[]', space=smem, size = 0x4, offset = 0x4, fixed_abs, tag = 'smem constant byte address 0x4 - core index']
  #allocation1 [shape = 'u32[144,128]{1,0:T(1,128)}', space=vmem, size = 0x12000, scoped, tag = 'internal scratch']
  %s0 = inlined_call_operand.vmem [shape: bf16[18,32], index: 0, kind: input, shape index: {}]
  %s1 = inlined_call_operand.vmem [shape: f32[1,32], index: 1, kind: input, shape index: {}]
  %s2 = inlined_call_operand.vmem [shape: bf16[32,48], index: 2, kind: input, shape index: {}]
  %s3 = inlined_call_operand.vmem [shape: bf16[18,48], index: 3, kind: output, shape index: {}]
  %s4 = sld [smem:[#allocation0]]
  $region22: #{gpt_forward.19} parent=0
    _
  %s6 = ssub.s32 1, %s4
  %s7 = scalar_select 0, %s6, %s4
  // Predicated region
  $region2: #{gpt_forward.19} parent=0 // pred_check
    _
  $region3: #{gpt_forward.19} parent=0 // pred_check_branch
    %9 = sbr.rel (0) target = $region5
  $region4: #{gpt_forward.19} parent=0 // pred_region
    _
  $region5: #{gpt_forward.19} parent=0 // pred_fallthru
    _
  // Predicated region
  $region6: #{gpt_forward.19} parent=0 // pred_check
    _
  $region7: #{gpt_forward.19} parent=0 // pred_check_branch
    %11 = sbr.rel (0) target = $region9
  $region8: #{gpt_forward.19} parent=0 // pred_region
    _
  $region9: #{gpt_forward.19} parent=0 // pred_fallthru
    _
  // Predicated region
  $region10: #{gpt_forward.19} parent=0 // pred_check
    _
  $region11: #{gpt_forward.19} parent=0 // pred_check_branch
    %13 = sbr.rel (0) target = $region13
  $region12: #{gpt_forward.19} parent=0 // pred_region
    _
  $region13: #{gpt_forward.19} parent=0 // pred_fallthru
    _
  %v15 = vld [vmem:[%s0] sm:$0xf]
  %v16 = vld [vmem:[%s0 + $0x4] sm:$0xf]
  %v17 = vld [vmem:[%s0 + $0x8] sm:$0x1]
  %v18 = vunpack.c.l.bf16 %v15
  %v19 = vunpack.c.l.bf16 %v16
  %v20 = vunpack.c.l.bf16 %v17
  %vm21 = vcmask 261120
  %v22 = vsel %vm21, %v18, 0.0
  %23 = vadd.xlane.f32.xlu0 %v22
  %v24 = vpop.xlane.xlu0 %23
  %v25 = vsel %vm21, %v19, 0.0
  %26 = vadd.xlane.f32.xlu0 %v25
  %v27 = vpop.xlane.xlu0 %26
  %vm28 = vcmask 254976
  %v29 = vsel %vm28, %v20, 0.0
  %30 = vadd.xlane.f32.xlu0 %v29
  %v31 = vpop.xlane.xlu0 %30
  %v32 = vrcp.pop 32.0
  %v33 = vmul.f32 %v24, %v32
  %v34 = vmul.f32 %v27, %v32
  %v35 = vmul.f32 %v31, %v32
  %v36 = vsub.f32 %v18, %v33
  %v37 = vsub.f32 %v19, %v34
  %v38 = vsub.f32 %v20, %v35
  %v39 = vmul.f32 %v36, %v36
  %v40 = vmul.f32 %v37, %v37
  %v41 = vmul.f32 %v38, %v38
  %v42 = vsel %vm21, %v39, 0.0
  %43 = vadd.xlane.f32.xlu0 %v42
  %v44 = vpop.xlane.xlu0 %43
  %v45 = vsel %vm21, %v40, 0.0
  %46 = vadd.xlane.f32.xlu0 %v45
  %v47 = vpop.xlane.xlu0 %46
  %v48 = vsel %vm28, %v41, 0.0
  %49 = vadd.xlane.f32.xlu0 %v48
  %v50 = vpop.xlane.xlu0 %49
  %v51 = vmul.f32 %v44, %v32
  %v52 = vmul.f32 %v47, %v32
  %v53 = vmul.f32 %v50, %v32
  %v54 = vadd.f32 %v51, 1e-05
  %v55 = vadd.f32 %v52, 1e-05
  %v56 = vadd.f32 %v53, 1e-05
  %v57 = vrsqrt.pop %v54
  %v58 = vrsqrt.pop %v55
  %v59 = vrsqrt.pop %v56
  %v60 = vmul.f32 %v36, %v57
  %v61 = vmul.f32 %v37, %v58
  %v62 = vmul.f32 %v38, %v59
  %v63 = vld [vmem:[%s1] sm:$0x1]
  %v65 = vlaneseq
  %v66 = vshrl.u32 %v65, 7
  %v67 = vsub.s32 0, %v66
  %v68 = vrot.slane %v63, %v67
  %v70 = vmul.f32 %v60, %v68
  %v71 = vmul.f32 %v61, %v68
  %v72 = vmul.f32 %v62, %v68
  %v73 = vld [vmem:[%s2] sm:$0xf]
  %v74 = vld [vmem:[%s2 + $0x4] sm:$0xf]
  %v75 = vld [vmem:[%s2 + $0x8] sm:$0xf]
  %v76 = vld [vmem:[%s2 + $0xc] sm:$0xf]
  %v77 = vpack.c.bf16 %v71, %v70
  %v78 = vpack.c.bf16 %v72, %v72
  %v83 = vunpack.c.l.b16 %v73
  %v84 = vunpack.c.l.b16 %v74
  %v85 = vunpack.c.l.b16 %v75
  %v86 = vunpack.c.l.b16 %v76
  %v87 = vpack.c.b16 %v84, %v83
  %v88 = vpack.c.b16 %v86, %v85
  %v92 = vsel %vm21, %v77, 0
  %v95 = vsel %vm21, %v78, 0
  %97 = vmatprep.subr.bf16.mxu0 0
  %98 = vmatpush1.bf16.msra.mxu0 %v87
  %99 = vmatprep.subr.bf16.mxu0 0
  %100 = vmatpush1.bf16.msra.mxu0 %v88
  %101 = vmatprep.subr.bf16.mxu0 0
  %102 = vmatpush1.bf16.msra.mxu0 0
  %103 = vmatprep.subr.bf16.mxu0 0
  %104 = vmatpush1.bf16.msra.mxu0 0
  %105 = vmatprep.subr.bf16.mxu0 0
  %106 = vmatpush1.bf16.msra.mxu0 0
  %107 = vmatprep.subr.bf16.mxu0 0
  %108 = vmatpush1.bf16.msra.mxu0 0
  %109 = vmatprep.subr.bf16.mxu0 0
  %110 = vmatpush1.bf16.msra.mxu0 0
  %111 = vmatprep.subr.bf16.mxu0 0
  %112 = vmatpush1.bf16.msra.mxu0 0
  %113 = vmatprep.subr.bf16.mxu0 0
  %114 = vmatpush1.bf16.msra.mxu0 0
  %115 = vmatprep.subr.bf16.mxu0 0
  %116 = vmatpush1.bf16.msra.mxu0 0
  %117 = vmatprep.subr.bf16.mxu0 0
  %118 = vmatpush1.bf16.msra.mxu0 0
  %119 = vmatprep.subr.bf16.mxu0 0
  %120 = vmatpush1.bf16.msra.mxu0 0
  %121 = vmatprep.subr.bf16.mxu0 0
  %122 = vmatpush1.bf16.msra.mxu0 0
  %123 = vmatprep.subr.bf16.mxu0 0
  %124 = vmatpush1.bf16.msra.mxu0 0
  %125 = vmatprep.subr.bf16.mxu0 0
  %126 = vmatpush1.bf16.msra.mxu0 0
  %127 = vmatprep.subr.bf16.mxu0 0
  %128 = vmatpush1.bf16.msra.mxu0 0
  %129 = vmatprep.mubr.bf16.mxu0 0
  %130 = vmatmul.mubr.bf16.gmra.mrb[0].mxu0 %v92
  %v131 = vpop.f32.mrb[0].mxu0
  %v132 = vadd.f32 0.0, %v131
  %v133 = vpop.f32.mrb[0].mxu0
  %v134 = vpop.f32.mrb[0].mxu0
  %v135 = vadd.f32 0.0, %v134
  %v136 = vpop.f32.mrb[0].mxu0
  %137 = vmatprep.mubr.bf16.mxu0 0
  %138 = vmatmul.mubr.bf16.gmra.mrb[0].mxu0 %v95
  %v139 = vpop.f32.mrb[0].mxu0
  %v140 = vadd.f32 0.0, %v139
  %v141 = vpop.f32.mrb[0].mxu0
  %v142 = vpop.f32.mrb[0].mxu0
  %v143 = vpop.f32.mrb[0].mxu0
  %144 = vdwg.mxu0
  %v145 = vpack.c.bf16 %v135, %v132
  %v146 = vpack.c.bf16 %v140, %v140
  %v149 = vunpack.c.l.b16 %v145
  %v150 = vunpack.c.h.b16 %v145
  %v151 = vunpack.c.l.b16 %v146
  %v152 = vpack.c.b16 %v149, %v149
  %v153 = vpack.c.b16 %v150, %v150
  %v154 = vpack.c.b16 %v151, %v151
  %vm158 = vcmask 388096
  %159 = vst.msk [vmem:[%s3] sm:$0xf] %vm158, %v152
  %160 = vst.msk [vmem:[%s3 + $0x4] sm:$0xf] %vm158, %v153
  %vm161 = vcmask 385024
  %162 = vst.msk [vmem:[%s3 + $0x8] sm:$0x1] %vm161, %v154
  // Predicated region
  $region14: #{gpt_forward.19} parent=0 // pred_check
    _
  $region15: #{gpt_forward.19} parent=0 // pred_check_branch
    %164 = sbr.rel (0) target = $region17
  $region16: #{gpt_forward.19} parent=0 // pred_region
    _
  $region17: #{gpt_forward.19} parent=0 // pred_fallthru
    _
  // Predicated region
  $region18: #{gpt_forward.19} parent=0 // pred_check
    _
  $region19: #{gpt_forward.19} parent=0 // pred_check_branch
    %166 = sbr.rel (0) target = $region21
  $region20: #{gpt_forward.19} parent=0 // pred_region
    _
  $region21: #{gpt_forward.19} parent=0 // pred_fallthru
    _

// kernel: gpt_forward.21
$region0: #{gpt_forward.21}
  #allocation0 [shape = 'u32[]', space=smem, size = 0x4, offset = 0x4, fixed_abs, tag = 'smem constant byte address 0x4 - core index']
  #allocation1 [shape = 'u32[144,128]{1,0:T(1,128)}', space=vmem, size = 0x12000, scoped, tag = 'internal scratch']
  %s0 = inlined_call_operand.vmem [shape: bf16[18,32], index: 0, kind: input, shape index: {}]
  %s1 = inlined_call_operand.vmem [shape: bf16[32,32], index: 1, kind: input, shape index: {}]
  %s2 = inlined_call_operand.vmem [shape: f32[1,32], index: 2, kind: input, shape index: {}]
  %s3 = inlined_call_operand.vmem [shape: bf16[18,32], index: 3, kind: input, shape index: {}]
  %s4 = inlined_call_operand.vmem [shape: bf16[18,32], index: 4, kind: output, shape index: {}]
  %s5 = sld [smem:[#allocation0]]
  $region26: #{gpt_forward.21} parent=0
    _
  %s7 = ssub.s32 1, %s5
  %s8 = scalar_select 0, %s7, %s5
  // Predicated region
  $region2: #{gpt_forward.21} parent=0 // pred_check
    _
  $region3: #{gpt_forward.21} parent=0 // pred_check_branch
    %10 = sbr.rel (0) target = $region5
  $region4: #{gpt_forward.21} parent=0 // pred_region
    _
  $region5: #{gpt_forward.21} parent=0 // pred_fallthru
    _
  // Predicated region
  $region6: #{gpt_forward.21} parent=0 // pred_check
    _
  $region7: #{gpt_forward.21} parent=0 // pred_check_branch
    %12 = sbr.rel (0) target = $region9
  $region8: #{gpt_forward.21} parent=0 // pred_region
    _
  $region9: #{gpt_forward.21} parent=0 // pred_fallthru
    _
  // Predicated region
  $region10: #{gpt_forward.21} parent=0 // pred_check
    _
  $region11: #{gpt_forward.21} parent=0 // pred_check_branch
    %14 = sbr.rel (0) target = $region13
  $region12: #{gpt_forward.21} parent=0 // pred_region
    _
  $region13: #{gpt_forward.21} parent=0 // pred_fallthru
    _
  // Predicated region
  $region14: #{gpt_forward.21} parent=0 // pred_check
    _
  $region15: #{gpt_forward.21} parent=0 // pred_check_branch
    %16 = sbr.rel (0) target = $region17
  $region16: #{gpt_forward.21} parent=0 // pred_region
    _
  $region17: #{gpt_forward.21} parent=0 // pred_fallthru
    _
  %v18 = vld [vmem:[%s0] sm:$0xf]
  %v19 = vld [vmem:[%s0 + $0x4] sm:$0xf]
  %v20 = vld [vmem:[%s0 + $0x8] sm:$0x1]
  %v21 = vld [vmem:[%s1] sm:$0xf]
  %v22 = vld [vmem:[%s1 + $0x4] sm:$0xf]
  %v23 = vld [vmem:[%s1 + $0x8] sm:$0xf]
  %v24 = vld [vmem:[%s1 + $0xc] sm:$0xf]
  %v28 = vunpack.c.l.b16 %v18
  %v29 = vunpack.c.l.b16 %v19
  %v30 = vunpack.c.l.b16 %v20
  %v31 = vpack.c.b16 %v29, %v28
  %v32 = vpack.c.b16 %v30, %v30
  %v37 = vunpack.c.l.b16 %v21
  %v38 = vunpack.c.l.b16 %v22
  %v39 = vunpack.c.l.b16 %v23
  %v40 = vunpack.c.l.b16 %v24
  %v41 = vpack.c.b16 %v38, %v37
  %v42 = vpack.c.b16 %v40, %v39
  %vm45 = vcmask 261120
  %v47 = vsel %vm45, %v31, 0
  %v50 = vsel %vm45, %v32, 0
  %52 = vmatprep.subr.bf16.mxu0 0
  %53 = vmatpush1.bf16.msra.mxu0 %v41
  %54 = vmatprep.subr.bf16.mxu0 0
  %55 = vmatpush1.bf16.msra.mxu0 %v42
  %56 = vmatprep.subr.bf16.mxu0 0
  %57 = vmatpush1.bf16.msra.mxu0 0
  %58 = vmatprep.subr.bf16.mxu0 0
  %59 = vmatpush1.bf16.msra.mxu0 0
  %60 = vmatprep.subr.bf16.mxu0 0
  %61 = vmatpush1.bf16.msra.mxu0 0
  %62 = vmatprep.subr.bf16.mxu0 0
  %63 = vmatpush1.bf16.msra.mxu0 0
  %64 = vmatprep.subr.bf16.mxu0 0
  %65 = vmatpush1.bf16.msra.mxu0 0
  %66 = vmatprep.subr.bf16.mxu0 0
  %67 = vmatpush1.bf16.msra.mxu0 0
  %68 = vmatprep.subr.bf16.mxu0 0
  %69 = vmatpush1.bf16.msra.mxu0 0
  %70 = vmatprep.subr.bf16.mxu0 0
  %71 = vmatpush1.bf16.msra.mxu0 0
  %72 = vmatprep.subr.bf16.mxu0 0
  %73 = vmatpush1.bf16.msra.mxu0 0
  %74 = vmatprep.subr.bf16.mxu0 0
  %75 = vmatpush1.bf16.msra.mxu0 0
  %76 = vmatprep.subr.bf16.mxu0 0
  %77 = vmatpush1.bf16.msra.mxu0 0
  %78 = vmatprep.subr.bf16.mxu0 0
  %79 = vmatpush1.bf16.msra.mxu0 0
  %80 = vmatprep.subr.bf16.mxu0 0
  %81 = vmatpush1.bf16.msra.mxu0 0
  %82 = vmatprep.subr.bf16.mxu0 0
  %83 = vmatpush1.bf16.msra.mxu0 0
  %84 = vmatprep.mubr.bf16.mxu0 0
  %85 = vmatmul.mubr.bf16.gmra.mrb[0].mxu0 %v47
  %v86 = vpop.f32.mrb[0].mxu0
  %v87 = vadd.f32 0.0, %v86
  %v88 = vpop.f32.mrb[0].mxu0
  %v89 = vpop.f32.mrb[0].mxu0
  %v90 = vadd.f32 0.0, %v89
  %v91 = vpop.f32.mrb[0].mxu0
  %92 = vmatprep.mubr.bf16.mxu0 0
  %93 = vmatmul.mubr.bf16.gmra.mrb[0].mxu0 %v50
  %v94 = vpop.f32.mrb[0].mxu0
  %v95 = vadd.f32 0.0, %v94
  %v96 = vpop.f32.mrb[0].mxu0
  %v97 = vpop.f32.mrb[0].mxu0
  %v98 = vpop.f32.mrb[0].mxu0
  %99 = vdwg.mxu0
  %v100 = vsel %vm45, %v87, 0.0
  %101 = vadd.xlane.f32.xlu0 %v100
  %v102 = vpop.xlane.xlu0 %101
  %v103 = vsel %vm45, %v90, 0.0
  %104 = vadd.xlane.f32.xlu0 %v103
  %v105 = vpop.xlane.xlu0 %104
  %vm106 = vcmask 254976
  %v107 = vsel %vm106, %v95, 0.0
  %108 = vadd.xlane.f32.xlu0 %v107
  %v109 = vpop.xlane.xlu0 %108
  %v110 = vrcp.pop 32.0
  %v111 = vmul.f32 %v102, %v110
  %v112 = vmul.f32 %v105, %v110
  %v113 = vmul.f32 %v109, %v110
  %v114 = vsub.f32 %v87, %v111
  %v115 = vsub.f32 %v90, %v112
  %v116 = vsub.f32 %v95, %v113
  %v117 = vmul.f32 %v114, %v114
  %v118 = vmul.f32 %v115, %v115
  %v119 = vmul.f32 %v116, %v116
  %v120 = vsel %vm45, %v117, 0.0
  %121 = vadd.xlane.f32.xlu0 %v120
  %v122 = vpop.xlane.xlu0 %121
  %v123 = vsel %vm45, %v118, 0.0
  %124 = vadd.xlane.f32.xlu0 %v123
  %v125 = vpop.xlane.xlu0 %124
  %v126 = vsel %vm106, %v119, 0.0
  %127 = vadd.xlane.f32.xlu0 %v126
  %v128 = vpop.xlane.xlu0 %127
  %v129 = vmul.f32 %v122, %v110
  %v130 = vmul.f32 %v125, %v110
  %v131 = vmul.f32 %v128, %v110
  %v132 = vadd.f32 %v129, 1e-05
  %v133 = vadd.f32 %v130, 1e-05
  %v134 = vadd.f32 %v131, 1e-05
  %v135 = vrsqrt.pop %v132
  %v136 = vrsqrt.pop %v133
  %v137 = vrsqrt.pop %v134
  %v138 = vmul.f32 %v114, %v135
  %v139 = vmul.f32 %v115, %v136
  %v140 = vmul.f32 %v116, %v137
  %v141 = vld [vmem:[%s2] sm:$0x1]
  %v143 = vlaneseq
  %v144 = vshrl.u32 %v143, 7
  %v145 = vsub.s32 0, %v144
  %v146 = vrot.slane %v141, %v145
  %v148 = vmul.f32 %v138, %v146
  %v149 = vmul.f32 %v139, %v146
  %v150 = vmul.f32 %v140, %v146
  %v151 = vld [vmem:[%s3] sm:$0xf]
  %v152 = vld [vmem:[%s3 + $0x4] sm:$0xf]
  %v153 = vld [vmem:[%s3 + $0x8] sm:$0x1]
  %v154 = vunpack.c.l.bf16 %v151
  %v155 = vunpack.c.l.bf16 %v152
  %v156 = vunpack.c.l.bf16 %v153
  %v157 = vadd.f32 %v148, %v154
  %v158 = vadd.f32 %v149, %v155
  %v159 = vadd.f32 %v150, %v156
  %v160 = vpack.c.bf16 %v158, %v157
  %v161 = vpack.c.bf16 %v159, %v159
  %v164 = vunpack.c.l.b16 %v160
  %v165 = vunpack.c.h.b16 %v160
  %v166 = vunpack.c.l.b16 %v161
  %v167 = vpack.c.b16 %v164, %v164
  %v168 = vpack.c.b16 %v165, %v165
  %v169 = vpack.c.b16 %v166, %v166
  %vm173 = vcmask 257024
  %174 = vst.msk [vmem:[%s4] sm:$0xf] %vm173, %v167
  %175 = vst.msk [vmem:[%s4 + $0x4] sm:$0xf] %vm173, %v168
  %vm176 = vcmask 253952
  %177 = vst.msk [vmem:[%s4 + $0x8] sm:$0x1] %vm176, %v169
  // Predicated region
  $region18: #{gpt_forward.21} parent=0 // pred_check
    _
  $region19: #{gpt_forward.21} parent=0 // pred_check_branch
    %179 = sbr.rel (0) target = $region21
  $region20: #{gpt_forward.21} parent=0 // pred_region
    _
  $region21: #{gpt_forward.21} parent=0 // pred_fallthru
    _
  // Predicated region
  $region22: #{gpt_forward.21} parent=0 // pred_check
    _
  $region23: #{gpt_forward.21} parent=0 // pred_check_branch
    %181 = sbr.rel (0) target = $region25
  $region24: #{gpt_forward.21} parent=0 // pred_region
    _
  $region25: #{gpt_forward.21} parent=0 // pred_fallthru
    _

// kernel: gpt_forward.20
$region0: #{gpt_forward.20}
  #allocation0 [shape = 'u32[]', space=smem, size = 0x4, offset = 0x4, fixed_abs, tag = 'smem constant byte address 0x4 - core index']
  #allocation1 [shape = 'u32[144,128]{1,0:T(1,128)}', space=vmem, size = 0x12000, scoped, tag = 'internal scratch']
  %s0 = inlined_call_operand.vmem [shape: bf16[2,18,16], index: 0, kind: input, shape index: {}]
  %s1 = inlined_call_operand.vmem [shape: bf16[2,9,16], index: 1, kind: input, shape index: {}]
  %s2 = inlined_call_operand.vmem [shape: bf16[1,16], index: 2, kind: input, shape index: {}]
  %s3 = inlined_call_operand.vmem [shape: f32[18,9], index: 3, kind: input, shape index: {}]
  %s4 = inlined_call_operand.vmem [shape: bf16[2,18,16], index: 4, kind: output, shape index: {}]
  %s5 = sld [smem:[#allocation0]]
  $region49: #{gpt_forward.20} parent=0
    _
  %s7 = ssub.s32 1, %s5
  %s8 = scalar_select 0, %s7, %s5
  loop: start=0, step=1, limit=4
  $region2: #{gpt_forward.20} parent=0 // loop_pre_header
    _
  $region3: #{gpt_forward.20} parent=0 // loop_header
    %s10 = sphi 0, %s14
    %p11 = scmp.ge.s32.totalorder %s10, 4
    %s20 = sphi 0, %s22
    %s23 = sphi 0, %s20
    %s24 = sphi 0, %s23
    %s40 = sphi 0, %s24
    %s46 = sphi 0, %s48
    %s49 = sphi 0, %s46
    %s50 = sphi 0, %s49
    %s66 = sphi 0, %s50
    %s70 = sphi 0, %s70
    %s72 = sphi 0, %s70
    %s73 = sphi 0, %s72
    %s87 = sphi 0, %s73
    %s91 = sphi 0, %s91
    %s93 = sphi 0, %s91
    %s94 = sphi 0, %s93
    %s108 = sphi 0, %s94
    %s114 = sphi 0, %s116
    %s117 = sphi 0, %s114
    %s118 = sphi 0, %s117
    %s134 = sphi 0, %s118
  $region4: #{gpt_forward.20} parent=0 // loop_header_branch
    %13 = sbr.rel (%p11) target = $region8
  $region5: #{gpt_forward.20} parent=0 // loop_body
    %s15 = ssub.s32 %s10, 1
    %s16 = ssub.s32 %s10, 2
    %s17 = sadd.s32 %s10, 1
    %s18 = ssub.s32 %s10, %s17
    %p19 = scmp.eq.s32.totalorder %s18, 0
    %s21 = sadd.s32 %s20, 1
    %s22 = scalar_select %p19, %s20, %s21
    %p25 = pneg %p19
    %p26 = scmp.eq.s32.totalorder %s10, 1
    %p27 = por %p25, %p26
    %p28 = scmp.ne.s32.totalorder %s20, %s23
    %p29 = scmp.eq.s32.totalorder %s10, 0
    %p30 = por %p28, %p29
    %p31 = scmp.ne.s32.totalorder %s20, %s23
    %p32 = scmp.eq.s32.totalorder %s15, 1
    %p33 = por %p31, %p32
    %p34 = scmp.ne.s32.totalorder %s23, %s24
    %p35 = scmp.eq.s32.totalorder %s15, 0
    %p36 = por %p34, %p35
    %p37 = scmp.ne.s32.totalorder %s23, %s24
    %p38 = scmp.eq.s32.totalorder %s16, 1
    %p39 = por %p37, %p38
    %p41 = scmp.ne.s32.totalorder %s24, %s40
    %p42 = scmp.eq.s32.totalorder %s16, 0
    %p43 = por %p41, %p42
    %s44 = ssub.s32 %s10, %s17
    %p45 = scmp.eq.s32.totalorder %s44, 0
    %s47 = sadd.s32 %s46, 1
    %s48 = scalar_select %p45, %s46, %s47
    %p51 = pneg %p45
    %p52 = scmp.eq.s32.totalorder %s10, 1
    %p53 = por %p51, %p52
    %p54 = scmp.ne.s32.totalorder %s46, %s49
    %p55 = scmp.eq.s32.totalorder %s10, 0
    %p56 = por %p54, %p55
    %p57 = scmp.ne.s32.totalorder %s46, %s49
    %p58 = scmp.eq.s32.totalorder %s15, 1
    %p59 = por %p57, %p58
    %p60 = scmp.ne.s32.totalorder %s49, %s50
    %p61 = scmp.eq.s32.totalorder %s15, 0
    %p62 = por %p60, %p61
    %p63 = scmp.ne.s32.totalorder %s49, %s50
    %p64 = scmp.eq.s32.totalorder %s16, 1
    %p65 = por %p63, %p64
    %p67 = scmp.ne.s32.totalorder %s50, %s66
    %p68 = scmp.eq.s32.totalorder %s16, 0
    %p69 = por %p67, %p68
    %s71 = sadd.s32 %s70, 1
    %p74 = scmp.eq.s32.totalorder %s10, 1
    %p75 = scmp.ne.s32.totalorder %s70, %s72
    %p76 = scmp.eq.s32.totalorder %s10, 0
    %p77 = por %p75, %p76
    %p78 = scmp.ne.s32.totalorder %s70, %s72
    %p79 = scmp.eq.s32.totalorder %s15, 1
    %p80 = por %p78, %p79
    %p81 = scmp.ne.s32.totalorder %s72, %s73
    %p82 = scmp.eq.s32.totalorder %s15, 0
    %p83 = por %p81, %p82
    %p84 = scmp.ne.s32.totalorder %s72, %s73
    %p85 = scmp.eq.s32.totalorder %s16, 1
    %p86 = por %p84, %p85
    %p88 = scmp.ne.s32.totalorder %s73, %s87
    %p89 = scmp.eq.s32.totalorder %s16, 0
    %p90 = por %p88, %p89
    %s92 = sadd.s32 %s91, 1
    %p95 = scmp.eq.s32.totalorder %s10, 1
    %p96 = scmp.ne.s32.totalorder %s91, %s93
    %p97 = scmp.eq.s32.totalorder %s10, 0
    %p98 = por %p96, %p97
    %p99 = scmp.ne.s32.totalorder %s91, %s93
    %p100 = scmp.eq.s32.totalorder %s15, 1
    %p101 = por %p99, %p100
    %p102 = scmp.ne.s32.totalorder %s93, %s94
    %p103 = scmp.eq.s32.totalorder %s15, 0
    %p104 = por %p102, %p103
    %p105 = scmp.ne.s32.totalorder %s93, %s94
    %p106 = scmp.eq.s32.totalorder %s16, 1
    %p107 = por %p105, %p106
    %p109 = scmp.ne.s32.totalorder %s94, %s108
    %p110 = scmp.eq.s32.totalorder %s16, 0
    %p111 = por %p109, %p110
    %s112 = ssub.s32 %s10, %s17
    %p113 = scmp.eq.s32.totalorder %s112, 0
    %s115 = sadd.s32 %s114, 1
    %s116 = scalar_select %p113, %s114, %s115
    %p119 = pneg %p113
    %p120 = scmp.eq.s32.totalorder %s10, 1
    %p121 = por %p119, %p120
    %p122 = scmp.ne.s32.totalorder %s114, %s117
    %p123 = scmp.eq.s32.totalorder %s10, 0
    %p124 = por %p122, %p123
    %p125 = scmp.ne.s32.totalorder %s114, %s117
    %p126 = scmp.eq.s32.totalorder %s15, 1
    %p127 = por %p125, %p126
    %p128 = scmp.ne.s32.totalorder %s117, %s118
    %p129 = scmp.eq.s32.totalorder %s15, 0
    %p130 = por %p128, %p129
    %p131 = scmp.ne.s32.totalorder %s117, %s118
    %p132 = scmp.eq.s32.totalorder %s16, 1
    %p133 = por %p131, %p132
    %p135 = scmp.ne.s32.totalorder %s118, %s134
    %p136 = scmp.eq.s32.totalorder %s16, 0
    %p137 = por %p135, %p136
    %p138 = scmp.le.s32.totalorder 1, %s10
    %p139 = scmp.lt.s32.totalorder %s10, 3
    %p140 = pnand %p138, %p139
    %p141 = pneg %p140
    // Predicated region
    $region9: #{gpt_forward.20} parent=5 // pred_check
      _
    $region10: #{gpt_forward.20} parent=5 // pred_check_branch
      %143 = sbr.rel (%p140) target = $region12
    $region11: #{gpt_forward.20} parent=5 // pred_region
      %s144 = ssub.s32 %s10, 1
      // Predicated region
      $region13: #{gpt_forward.20} parent=11 // pred_check
        %p145 = pneg %p83
      $region14: #{gpt_forward.20} parent=11 // pred_check_branch
        %147 = sbr.rel (%p145) target = $region16
      $region15: #{gpt_forward.20} parent=11 // pred_region
        _
      $region16: #{gpt_forward.20} parent=11 // pred_fallthru
        _
      // Predicated region
      $region17: #{gpt_forward.20} parent=11 // pred_check
        %p148 = pneg %p104
      $region18: #{gpt_forward.20} parent=11 // pred_check_branch
        %150 = sbr.rel (%p148) target = $region20
      $region19: #{gpt_forward.20} parent=11 // pred_region
        _
      $region20: #{gpt_forward.20} parent=11 // pred_fallthru
        _
    $region12: #{gpt_forward.20} parent=5 // pred_fallthru
      _
    %p151 = scmp.lt.s32.totalorder %s10, 2
    // Predicated region
    $region21: #{gpt_forward.20} parent=5 // pred_check
      %p152 = pneg %p151
    $region22: #{gpt_forward.20} parent=5 // pred_check_branch
      %154 = sbr.rel (%p152) target = $region24
    $region23: #{gpt_forward.20} parent=5 // pred_region
      // Predicated region
      $region25: #{gpt_forward.20} parent=23 // pred_check
        %p155 = pneg %p30
      $region26: #{gpt_forward.20} parent=23 // pred_check_branch
        %157 = sbr.rel (%p155) target = $region28
      $region27: #{gpt_forward.20} parent=23 // pred_region
        %p158 = scmp.lt.s32.totalorder %s10, 1
        %s159 = scalar_select %p158, %s10, 1
        %s160 = smul.addr %s159, 3
        %s161 = smul.addr %s160, 4
        %s162 = scalar_lea.vmem %s0, %s161
      $region28: #{gpt_forward.20} parent=23 // pred_fallthru
        _
      // Predicated region
      $region29: #{gpt_forward.20} parent=23 // pred_check
        %p163 = pneg %p56
      $region30: #{gpt_forward.20} parent=23 // pred_check_branch
        %165 = sbr.rel (%p163) target = $region32
      $region31: #{gpt_forward.20} parent=23 // pred_region
        %p166 = scmp.lt.s32.totalorder %s10, 1
        %s167 = scalar_select %p166, %s10, 1
        %s168 = smul.addr %s167, 2
        %s169 = smul.addr %s168, 4
        %s170 = scalar_lea.vmem %s1, %s169
      $region32: #{gpt_forward.20} parent=23 // pred_fallthru
        _
    $region24: #{gpt_forward.20} parent=5 // pred_fallthru
      _
    %p171 = scmp.le.s32.totalorder 1, %s10
    %p172 = scmp.lt.s32.totalorder %s10, 3
    %p173 = pnand %p171, %p172
    %p174 = pneg %p173
    // Predicated region
    $region33: #{gpt_forward.20} parent=5 // pred_check
      _
    $region34: #{gpt_forward.20} parent=5 // pred_check_branch
      %176 = sbr.rel (%p173) target = $region36
    $region35: #{gpt_forward.20} parent=5 // pred_region
      %s177 = ssub.s32 %s10, 1
      %p178 = scmp.lt.s32.totalorder %s15, 1
      %s179 = scalar_select %p178, %s15, 1
      %s180 = smul.addr %s179, 3
      %s181 = smul.addr %s180, 4
      %s182 = scalar_lea.vmem %s0, %s181
      %p183 = pneg %p36
      %p184 = pneg %p33
      %p185 = scmp.lt.s32.totalorder %s15, 1
      %s186 = scalar_select %p185, %s15, 1
      %s187 = smul.addr %s186, 2
      %s188 = smul.addr %s187, 4
      %s189 = scalar_lea.vmem %s1, %s188
      %p190 = pneg %p62
      %p191 = pneg %p59
      %p192 = pneg %p83
      %p193 = pneg %p80
      %p194 = pneg %p104
      %p195 = pneg %p101
      %p196 = pneg %p130
      %p197 = pneg %p127
      %p198 = scmp.lt.s32.totalorder %s15, 1
      %s199 = scalar_select %p198, %s15, 1
      %s200 = smul.addr %s199, 3
      %s201 = smul.addr %s200, 4
      %s202 = scalar_lea.vmem %s4, %s201
      %p203 = scmp.lt.s32.totalorder %s15, 1
      %s204 = scalar_select %p203, %s15, 1
      %s205 = smul.addr %s204, 3
      %s206 = smul.addr %s205, 4
      %s207 = scalar_lea.vmem %s0, %s206
      %p208 = scmp.lt.s32.totalorder %s15, 1
      %s209 = scalar_select %p208, %s15, 1
      %s210 = smul.addr %s209, 2
      %s211 = smul.addr %s210, 4
      %s212 = scalar_lea.vmem %s1, %s211
      %p213 = scmp.lt.s32.totalorder %s15, 1
      %s214 = scalar_select %p213, %s15, 1
      %s215 = smul.addr %s214, 3
      %s216 = smul.addr %s215, 4
      %s217 = scalar_lea.vmem %s4, %s216
      %v219 = vld [vmem:[%s207] sm:$0xf]
      %v220 = vld [vmem:[%s207 + $0x4] sm:$0xf]
      %v221 = vld [vmem:[%s207 + $0x8] sm:$0x1]
      %v222 = vld [vmem:[%s212] sm:$0xf]
      %v223 = vld [vmem:[%s212 + $0x4] sm:$0x1]
      %v224 = vld [vmem:[%s2] sm:$0x1]
      %v225 = vld [vmem:[%s3] sm:$0xff]
      %v226 = vld [vmem:[%s3 + $0x8] sm:$0xff]
      %v227 = vld [vmem:[%s3 + $0x10] sm:$0x3]
      %v231 = vunpack.c.l.b16 %v219
      %v232 = vunpack.c.l.b16 %v220
      %v233 = vunpack.c.l.b16 %v221
      %v234 = vpack.c.b16 %v232, %v231
      %v235 = vpack.c.b16 %v233, %v233
      %v238 = vunpack.c.l.b16 %v222
      %v239 = vunpack.c.l.b16 %v223
      %v240 = vpack.c.b16 %v239, %v238
      %vm241 = vcmask 130048
      %v243 = vsel %vm241, %v234, 0
      %v246 = vsel %vm241, %v235, 0
      %v249 = vsel %vm241, %v240, 0
      %251 = vmatprep.subr.bf16.mxu0 0
      %252 = vmatpush1.bf16.xpose.msra.mxu0 %v249
      %253 = vmatprep.subr.bf16.mxu0 0
      %254 = vmatpush1.bf16.xpose.msra.mxu0 0
      %255 = vmatprep.subr.bf16.mxu0 0
      %256 = vmatpush1.bf16.xpose.msra.mxu0 0
      %257 = vmatprep.subr.bf16.mxu0 0
      %258 = vmatpush1.bf16.xpose.msra.mxu0 0
      %259 = vmatprep.subr.bf16.mxu0 0
      %260 = vmatpush1.bf16.xpose.msra.mxu0 0
      %261 = vmatprep.subr.bf16.mxu0 0
      %262 = vmatpush1.bf16.xpose.msra.mxu0 0
      %263 = vmatprep.subr.bf16.mxu0 0
      %264 = vmatpush1.bf16.xpose.msra.mxu0 0
      %265 = vmatprep.subr.bf16.mxu0 0
      %266 = vmatpush1.bf16.xpose.msra.mxu0 0
      %267 = vmatprep.subr.bf16.mxu0 0
      %268 = vmatpush1.bf16.xpose.msra.mxu0 0
      %269 = vmatprep.subr.bf16.mxu0 0
      %270 = vmatpush1.bf16.xpose.msra.mxu0 0
      %271 = vmatprep.subr.bf16.mxu0 0
      %272 = vmatpush1.bf16.xpose.msra.mxu0 0
      %273 = vmatprep.subr.bf16.mxu0 0
      %274 = vmatpush1.bf16.xpose.msra.mxu0 0
      %275 = vmatprep.subr.bf16.mxu0 0
      %276 = vmatpush1.bf16.xpose.msra.mxu0 0
      %277 = vmatprep.subr.bf16.mxu0 0
      %278 = vmatpush1.bf16.xpose.msra.mxu0 0
      %279 = vmatprep.subr.bf16.mxu0 0
      %280 = vmatpush1.bf16.xpose.msra.mxu0 0
      %281 = vmatprep.subr.bf16.mxu0 0
      %282 = vmatpush1.bf16.xpose.msra.mxu0 0
      %283 = vmatprep.mubr.bf16.mxu0 0
      %284 = vmatmul.mubr.bf16.gmra.mrb[0].mxu0 %v243
      %v285 = vpop.f32.mrb[0].mxu0
      %v286 = vadd.f32 %v225, %v285
      %v287 = vpop.f32.mrb[0].mxu0
      %v288 = vpop.f32.mrb[0].mxu0
      %v289 = vadd.f32 %v226, %v288
      %v290 = vpop.f32.mrb[0].mxu0
      %291 = vmatprep.mubr.bf16.mxu0 0
      %292 = vmatmul.mubr.bf16.gmra.mrb[0].mxu0 %v246
      %v293 = vpop.f32.mrb[0].mxu0
      %v294 = vadd.f32 %v227, %v293
      %v295 = vpop.f32.mrb[0].mxu0
      %v296 = vpop.f32.mrb[0].mxu0
      %v297 = vpop.f32.mrb[0].mxu0
      %298 = vdwg.mxu0
      %v299 = vunpack.c.l.bf16 %v219
      %v300 = vunpack.c.l.bf16 %v220
      %v301 = vunpack.c.l.bf16 %v221
      %v302 = vunpack.c.l.bf16 %v224
      %v303 = vlaneseq
      %v304 = vshrl.u32 %v303, 7
      %v305 = vsub.s32 0, %v304
      %v306 = vrot.slane %v302, %v305
      %v307 = vmul.f32 %v299, %v306
      %v308 = vmul.f32 %v300, %v306
      %v309 = vmul.f32 %v301, %v306
      %v310 = vsel %vm241, %v307, 0.0
      %311 = vadd.xlane.f32.xlu0 %v310
      %v312 = vpop.xlane.xlu0 %311
      %v313 = vsel %vm241, %v308, 0.0
      %314 = vadd.xlane.f32.xlu0 %v313
      %v315 = vpop.xlane.xlu0 %314
      %vm316 = vcmask 123904
      %v317 = vsel %vm316, %v309, 0.0
      %318 = vadd.xlane.f32.xlu0 %v317
      %v319 = vpop.xlane.xlu0 %318
      %vm320 = vcmask 72704
      %v321 = vsel %vm320, %v286, -inf
      %322 = vmax.xlane.f32.xlu0 %v321
      %v323 = vpop.xlane.xlu0 %322
      %v324 = vsel %vm320, %v289, -inf
      %325 = vmax.xlane.f32.xlu0 %v324
      %v326 = vpop.xlane.xlu0 %325
      %vm327 = vcmask 66560
      %v328 = vsel %vm327, %v294, -inf
      %329 = vmax.xlane.f32.xlu0 %v328
      %v330 = vpop.xlane.xlu0 %329
      %v331 = vmax.f32 %v323, %v312
      %v332 = vmax.f32 %v326, %v315
      %v333 = vmax.f32 %v330, %v319
      %v334 = vsub.f32 %v286, %v331
      %v335 = vsub.f32 %v289, %v332
      %v336 = vsub.f32 %v294, %v333
      %v337 = vmul.f32 %v334, 1.442695
      %v338 = vpow.pop %v337
      %v339 = vmul.f32 %v335, 1.442695
      %v340 = vpow.pop %v339
      %v341 = vmul.f32 %v336, 1.442695
      %v342 = vpow.pop %v341
      %v343 = vsub.f32 %v312, %v331
      %v344 = vsub.f32 %v315, %v332
      %v345 = vsub.f32 %v319, %v333
      %v346 = vmul.f32 %v343, 1.442695
      %v347 = vpow.pop %v346
      %v348 = vmul.f32 %v344, 1.442695
      %v349 = vpow.pop %v348
      %v350 = vmul.f32 %v345, 1.442695
      %v351 = vpow.pop %v350
      %v352 = vsel %vm320, %v338, 0.0
      %353 = vadd.xlane.f32.xlu0 %v352
      %v354 = vpop.xlane.xlu0 %353
      %v355 = vsel %vm320, %v340, 0.0
      %356 = vadd.xlane.f32.xlu0 %v355
      %v357 = vpop.xlane.xlu0 %356
      %v358 = vsel %vm327, %v342, 0.0
      %359 = vadd.xlane.f32.xlu0 %v358
      %v360 = vpop.xlane.xlu0 %359
      %v361 = vadd.f32 %v354, %v347
      %v362 = vadd.f32 %v357, %v349
      %v363 = vadd.f32 %v360, %v351
      %v364 = vrcp.pop %v361
      %v365 = vrcp.pop %v362
      %v366 = vrcp.pop %v363
      %v367 = vpack.c.bf16 %v340, %v338
      %v368 = vpack.c.bf16 %v342, %v342
      %v369 = vmul.f32 %v347, %v306
      %v370 = vmul.f32 %v349, %v306
      %v371 = vmul.f32 %v351, %v306
      %v373 = vsel %vm320, %v367, 0
      %v376 = vsel %vm320, %v368, 0
      %vm378 = vcmask 1043456
      %vm379 = vcmask 1044480
      %v380 = vsel %vm378, 4294967295, 65535
      %v381 = vsel %vm379, %v380, 0
      %v382 = vand.u32 %v240, %v381
      %384 = vmatprep.subr.bf16.mxu0 0
      %385 = vmatpush1.bf16.msra.mxu0 %v382
      %386 = vmatprep.subr.bf16.mxu0 0
      %387 = vmatpush1.bf16.msra.mxu0 0
      %388 = vmatprep.subr.bf16.mxu0 0
      %389 = vmatpush1.bf16.msra.mxu0 0
      %390 = vmatprep.subr.bf16.mxu0 0
      %391 = vmatpush1.bf16.msra.mxu0 0
      %392 = vmatprep.subr.bf16.mxu0 0
      %393 = vmatpush1.bf16.msra.mxu0 0
      %394 = vmatprep.subr.bf16.mxu0 0
      %395 = vmatpush1.bf16.msra.mxu0 0
      %396 = vmatprep.subr.bf16.mxu0 0
      %397 = vmatpush1.bf16.msra.mxu0 0
      %398 = vmatprep.subr.bf16.mxu0 0
      %399 = vmatpush1.bf16.msra.mxu0 0
      %400 = vmatprep.subr.bf16.mxu0 0
      %401 = vmatpush1.bf16.msra.mxu0 0
      %402 = vmatprep.subr.bf16.mxu0 0
      %403 = vmatpush1.bf16.msra.mxu0 0
      %404 = vmatprep.subr.bf16.mxu0 0
      %405 = vmatpush1.bf16.msra.mxu0 0
      %406 = vmatprep.subr.bf16.mxu0 0
      %407 = vmatpush1.bf16.msra.mxu0 0
      %408 = vmatprep.subr.bf16.mxu0 0
      %409 = vmatpush1.bf16.msra.mxu0 0
      %410 = vmatprep.subr.bf16.mxu0 0
      %411 = vmatpush1.bf16.msra.mxu0 0
      %412 = vmatprep.subr.bf16.mxu0 0
      %413 = vmatpush1.bf16.msra.mxu0 0
      %414 = vmatprep.subr.bf16.mxu0 0
      %415 = vmatpush1.bf16.msra.mxu0 0
      %416 = vmatprep.mubr.bf16.mxu0 0
      %417 = vmatmul.mubr.bf16.gmra.mrb[0].mxu0 %v373
      %v418 = vpop.f32.mrb[0].mxu0
      %v419 = vadd.f32 %v369, %v418
      %v420 = vpop.f32.mrb[0].mxu0
      %v421 = vpop.f32.mrb[0].mxu0
      %v422 = vadd.f32 %v370, %v421
      %v423 = vpop.f32.mrb[0].mxu0
      %424 = vmatprep.mubr.bf16.mxu0 0
      %425 = vmatmul.mubr.bf16.gmra.mrb[0].mxu0 %v376
      %v426 = vpop.f32.mrb[0].mxu0
      %v427 = vadd.f32 %v371, %v426
      %v428 = vpop.f32.mrb[0].mxu0
      %v429 = vpop.f32.mrb[0].mxu0
      %v430 = vpop.f32.mrb[0].mxu0
      %431 = vdwg.mxu0
      %v432 = vmul.f32 %v419, %v364
      %v433 = vmul.f32 %v422, %v365
      %v434 = vmul.f32 %v427, %v366
      %v435 = vpack.c.bf16 %v433, %v432
      %v436 = vpack.c.bf16 %v434, %v434
      %v439 = vunpack.c.l.b16 %v435
      %v440 = vunpack.c.h.b16 %v435
      %v441 = vunpack.c.l.b16 %v436
      %v442 = vpack.c.b16 %v439, %v439
      %v443 = vpack.c.b16 %v440, %v440
      %v444 = vpack.c.b16 %v441, %v441
      %vm448 = vcmask 125952
      %449 = vst.msk [vmem:[%s217] sm:$0xf] %vm448, %v442
      %450 = vst.msk [vmem:[%s217 + $0x4] sm:$0xf] %vm448, %v443
      %vm451 = vcmask 122880
      %452 = vst.msk [vmem:[%s217 + $0x8] sm:$0x1] %vm451, %v444
      %p453 = scmp.lt.s32.totalorder %s15, 1
      %s454 = scalar_select %p453, %s15, 1
      %s455 = smul.addr %s454, 3
      %s456 = smul.addr %s455, 4
      %s457 = scalar_lea.vmem %s4, %s456
      // Predicated region
      $region37: #{gpt_forward.20} parent=35 // pred_check
        %p458 = pneg %p127
      $region38: #{gpt_forward.20} parent=35 // pred_check_branch
        %460 = sbr.rel (%p458) target = $region40
      $region39: #{gpt_forward.20} parent=35 // pred_region
        _
      $region40: #{gpt_forward.20} parent=35 // pred_fallthru
        _
    $region36: #{gpt_forward.20} parent=5 // pred_fallthru
      _
    %p461 = scmp.le.s32.totalorder 2, %s10
    // Predicated region
    $region41: #{gpt_forward.20} parent=5 // pred_check
      %p462 = pneg %p461
    $region42: #{gpt_forward.20} parent=5 // pred_check_branch
      %464 = sbr.rel (%p462) target = $region44
    $region43: #{gpt_forward.20} parent=5 // pred_region
      %s465 = ssub.s32 %s10, 2
      // Predicated region
      $region45: #{gpt_forward.20} parent=43 // pred_check
        %p466 = pneg %p133
      $region46: #{gpt_forward.20} parent=43 // pred_check_branch
        %468 = sbr.rel (%p466) target = $region48
      $region47: #{gpt_forward.20} parent=43 // pred_region
        %p469 = scmp.lt.s32.totalorder %s16, 1
        %s470 = scalar_select %p469, %s16, 1
        %s471 = smul.addr %s470, 3
        %s472 = smul.addr %s471, 4
        %s473 = scalar_lea.vmem %s4, %s472
      $region48: #{gpt_forward.20} parent=43 // pred_fallthru
        _
    $region44: #{gpt_forward.20} parent=5 // pred_fallthru
      _
  $region6: #{gpt_forward.20} parent=0 // loop_footer
    %s14 = sadd.s32 1, %s10
  $region7: #{gpt_forward.20} parent=0 // loop_footer_branch
    %9 = sbr.rel target = $region3
  $region8: #{gpt_forward.20} parent=0 // loop_exit
    _

// kernel: gpt_forward.22
$region0: #{gpt_forward.22}
  #allocation0 [shape = 'u32[]', space=smem, size = 0x4, offset = 0x4, fixed_abs, tag = 'smem constant byte address 0x4 - core index']
  #allocation1 [shape = 'u32[144,128]{1,0:T(1,128)}', space=vmem, size = 0x12000, scoped, tag = 'internal scratch']
  %s0 = inlined_call_operand.vmem [shape: bf16[18,32], index: 0, kind: input, shape index: {}]
  %s1 = inlined_call_operand.vmem [shape: f32[1,32], index: 1, kind: input, shape index: {}]
  %s2 = inlined_call_operand.vmem [shape: bf16[32,32], index: 2, kind: input, shape index: {}]
  %s3 = inlined_call_operand.vmem [shape: bf16[18,32], index: 3, kind: output, shape index: {}]
  %s4 = sld [smem:[#allocation0]]
  $region22: #{gpt_forward.22} parent=0
    _
  %s6 = ssub.s32 1, %s4
  %s7 = scalar_select 0, %s6, %s4
  // Predicated region
  $region2: #{gpt_forward.22} parent=0 // pred_check
    _
  $region3: #{gpt_forward.22} parent=0 // pred_check_branch
    %9 = sbr.rel (0) target = $region5
  $region4: #{gpt_forward.22} parent=0 // pred_region
    _
  $region5: #{gpt_forward.22} parent=0 // pred_fallthru
    _
  // Predicated region
  $region6: #{gpt_forward.22} parent=0 // pred_check
    _
  $region7: #{gpt_forward.22} parent=0 // pred_check_branch
    %11 = sbr.rel (0) target = $region9
  $region8: #{gpt_forward.22} parent=0 // pred_region
    _
  $region9: #{gpt_forward.22} parent=0 // pred_fallthru
    _
  // Predicated region
  $region10: #{gpt_forward.22} parent=0 // pred_check
    _
  $region11: #{gpt_forward.22} parent=0 // pred_check_branch
    %13 = sbr.rel (0) target = $region13
  $region12: #{gpt_forward.22} parent=0 // pred_region
    _
  $region13: #{gpt_forward.22} parent=0 // pred_fallthru
    _
  %v15 = vld [vmem:[%s0] sm:$0xf]
  %v16 = vld [vmem:[%s0 + $0x4] sm:$0xf]
  %v17 = vld [vmem:[%s0 + $0x8] sm:$0x1]
  %v18 = vunpack.c.l.bf16 %v15
  %v19 = vunpack.c.l.bf16 %v16
  %v20 = vunpack.c.l.bf16 %v17
  %vm21 = vcmask 261120
  %v22 = vsel %vm21, %v18, 0.0
  %23 = vadd.xlane.f32.xlu0 %v22
  %v24 = vpop.xlane.xlu0 %23
  %v25 = vsel %vm21, %v19, 0.0
  %26 = vadd.xlane.f32.xlu0 %v25
  %v27 = vpop.xlane.xlu0 %26
  %vm28 = vcmask 254976
  %v29 = vsel %vm28, %v20, 0.0
  %30 = vadd.xlane.f32.xlu0 %v29
  %v31 = vpop.xlane.xlu0 %30
  %v32 = vrcp.pop 32.0
  %v33 = vmul.f32 %v24, %v32
  %v34 = vmul.f32 %v27, %v32
  %v35 = vmul.f32 %v31, %v32
  %v36 = vsub.f32 %v18, %v33
  %v37 = vsub.f32 %v19, %v34
  %v38 = vsub.f32 %v20, %v35
  %v39 = vmul.f32 %v36, %v36
  %v40 = vmul.f32 %v37, %v37
  %v41 = vmul.f32 %v38, %v38
  %v42 = vsel %vm21, %v39, 0.0
  %43 = vadd.xlane.f32.xlu0 %v42
  %v44 = vpop.xlane.xlu0 %43
  %v45 = vsel %vm21, %v40, 0.0
  %46 = vadd.xlane.f32.xlu0 %v45
  %v47 = vpop.xlane.xlu0 %46
  %v48 = vsel %vm28, %v41, 0.0
  %49 = vadd.xlane.f32.xlu0 %v48
  %v50 = vpop.xlane.xlu0 %49
  %v51 = vmul.f32 %v44, %v32
  %v52 = vmul.f32 %v47, %v32
  %v53 = vmul.f32 %v50, %v32
  %v54 = vadd.f32 %v51, 1e-05
  %v55 = vadd.f32 %v52, 1e-05
  %v56 = vadd.f32 %v53, 1e-05
  %v57 = vrsqrt.pop %v54
  %v58 = vrsqrt.pop %v55
  %v59 = vrsqrt.pop %v56
  %v60 = vmul.f32 %v36, %v57
  %v61 = vmul.f32 %v37, %v58
  %v62 = vmul.f32 %v38, %v59
  %v63 = vld [vmem:[%s1] sm:$0x1]
  %v65 = vlaneseq
  %v66 = vshrl.u32 %v65, 7
  %v67 = vsub.s32 0, %v66
  %v68 = vrot.slane %v63, %v67
  %v70 = vmul.f32 %v60, %v68
  %v71 = vmul.f32 %v61, %v68
  %v72 = vmul.f32 %v62, %v68
  %v73 = vld [vmem:[%s2] sm:$0xf]
  %v74 = vld [vmem:[%s2 + $0x4] sm:$0xf]
  %v75 = vld [vmem:[%s2 + $0x8] sm:$0xf]
  %v76 = vld [vmem:[%s2 + $0xc] sm:$0xf]
  %v77 = vpack.c.bf16 %v71, %v70
  %v78 = vpack.c.bf16 %v72, %v72
  %v83 = vunpack.c.l.b16 %v73
  %v84 = vunpack.c.l.b16 %v74
  %v85 = vunpack.c.l.b16 %v75
  %v86 = vunpack.c.l.b16 %v76
  %v87 = vpack.c.b16 %v84, %v83
  %v88 = vpack.c.b16 %v86, %v85
  %v92 = vsel %vm21, %v77, 0
  %v95 = vsel %vm21, %v78, 0
  %97 = vmatprep.subr.bf16.mxu0 0
  %98 = vmatpush1.bf16.msra.mxu0 %v87
  %99 = vmatprep.subr.bf16.mxu0 0
  %100 = vmatpush1.bf16.msra.mxu0 %v88
  %101 = vmatprep.subr.bf16.mxu0 0
  %102 = vmatpush1.bf16.msra.mxu0 0
  %103 = vmatprep.subr.bf16.mxu0 0
  %104 = vmatpush1.bf16.msra.mxu0 0
  %105 = vmatprep.subr.bf16.mxu0 0
  %106 = vmatpush1.bf16.msra.mxu0 0
  %107 = vmatprep.subr.bf16.mxu0 0
  %108 = vmatpush1.bf16.msra.mxu0 0
  %109 = vmatprep.subr.bf16.mxu0 0
  %110 = vmatpush1.bf16.msra.mxu0 0
  %111 = vmatprep.subr.bf16.mxu0 0
  %112 = vmatpush1.bf16.msra.mxu0 0
  %113 = vmatprep.subr.bf16.mxu0 0
  %114 = vmatpush1.bf16.msra.mxu0 0
  %115 = vmatprep.subr.bf16.mxu0 0
  %116 = vmatpush1.bf16.msra.mxu0 0
  %117 = vmatprep.subr.bf16.mxu0 0
  %118 = vmatpush1.bf16.msra.mxu0 0
  %119 = vmatprep.subr.bf16.mxu0 0
  %120 = vmatpush1.bf16.msra.mxu0 0
  %121 = vmatprep.subr.bf16.mxu0 0
  %122 = vmatpush1.bf16.msra.mxu0 0
  %123 = vmatprep.subr.bf16.mxu0 0
  %124 = vmatpush1.bf16.msra.mxu0 0
  %125 = vmatprep.subr.bf16.mxu0 0
  %126 = vmatpush1.bf16.msra.mxu0 0
  %127 = vmatprep.subr.bf16.mxu0 0
  %128 = vmatpush1.bf16.msra.mxu0 0
  %129 = vmatprep.mubr.bf16.mxu0 0
  %130 = vmatmul.mubr.bf16.gmra.mrb[0].mxu0 %v92
  %v131 = vpop.f32.mrb[0].mxu0
  %v132 = vadd.f32 0.0, %v131
  %v133 = vpop.f32.mrb[0].mxu0
  %v134 = vpop.f32.mrb[0].mxu0
  %v135 = vadd.f32 0.0, %v134
  %v136 = vpop.f32.mrb[0].mxu0
  %137 = vmatprep.mubr.bf16.mxu0 0
  %138 = vmatmul.mubr.bf16.gmra.mrb[0].mxu0 %v95
  %v139 = vpop.f32.mrb[0].mxu0
  %v140 = vadd.f32 0.0, %v139
  %v141 = vpop.f32.mrb[0].mxu0
  %v142 = vpop.f32.mrb[0].mxu0
  %v143 = vpop.f32.mrb[0].mxu0
  %144 = vdwg.mxu0
  %v145 = vpack.c.bf16 %v135, %v132
  %v146 = vpack.c.bf16 %v140, %v140
  %v149 = vunpack.c.l.b16 %v145
  %v150 = vunpack.c.h.b16 %v145
  %v151 = vunpack.c.l.b16 %v146
  %v152 = vpack.c.b16 %v149, %v149
  %v153 = vpack.c.b16 %v150, %v150
  %v154 = vpack.c.b16 %v151, %v151
  %vm158 = vcmask 257024
  %159 = vst.msk [vmem:[%s3] sm:$0xf] %vm158, %v152
  %160 = vst.msk [vmem:[%s3 + $0x4] sm:$0xf] %vm158, %v153
  %vm161 = vcmask 253952
  %162 = vst.msk [vmem:[%s3 + $0x8] sm:$0x1] %vm161, %v154
  // Predicated region
  $region14: #{gpt_forward.22} parent=0 // pred_check
    _
  $region15: #{gpt_forward.22} parent=0 // pred_check_branch
    %164 = sbr.rel (0) target = $region17
  $region16: #{gpt_forward.22} parent=0 // pred_region
    _
  $region17: #{gpt_forward.22} parent=0 // pred_fallthru
    _
  // Predicated region
  $region18: #{gpt_forward.22} parent=0 // pred_check
    _
  $region19: #{gpt_forward.22} parent=0 // pred_check_branch
    %166 = sbr.rel (0) target = $region21
  $region20: #{gpt_forward.22} parent=0 // pred_region
    _
  $region21: #{gpt_forward.22} parent=0 // pred_fallthru
    _

// kernel: gpt_forward.23
$region0: #{gpt_forward.23}
  #allocation0 [shape = 'u32[]', space=smem, size = 0x4, offset = 0x4, fixed_abs, tag = 'smem constant byte address 0x4 - core index']
  #allocation1 [shape = 'u32[144,128]{1,0:T(1,128)}', space=vmem, size = 0x12000, scoped, tag = 'internal scratch']
  %s0 = inlined_call_operand.vmem [shape: bf16[2,18,16], index: 0, kind: input, shape index: {}]
  %s1 = inlined_call_operand.vmem [shape: bf16[2,8,48], index: 1, kind: input, shape index: {}]
  %s2 = inlined_call_operand.vmem [shape: bf16[48,16], index: 2, kind: input, shape index: {}]
  %s3 = inlined_call_operand.vmem [shape: bf16[1,16], index: 3, kind: input, shape index: {}]
  %s4 = inlined_call_operand.vmem [shape: s32[2,1,8], index: 4, kind: input, shape index: {}]
  %s5 = inlined_call_operand.vmem [shape: bf16[2,18,16], index: 5, kind: output, shape index: {}]
  %s6 = sld [smem:[#allocation0]]
  $region53: #{gpt_forward.23} parent=0
    _
  %s8 = ssub.s32 1, %s6
  %s9 = scalar_select 0, %s8, %s6
  loop: start=0, step=1, limit=4
  $region2: #{gpt_forward.23} parent=0 // loop_pre_header
    _
  $region3: #{gpt_forward.23} parent=0 // loop_header
    %s11 = sphi 0, %s15
    %p12 = scmp.ge.s32.totalorder %s11, 4
    %s21 = sphi 0, %s23
    %s24 = sphi 0, %s21
    %s25 = sphi 0, %s24
    %s41 = sphi 0, %s25
    %s47 = sphi 0, %s49
    %s50 = sphi 0, %s47
    %s51 = sphi 0, %s50
    %s67 = sphi 0, %s51
    %s71 = sphi 0, %s71
    %s73 = sphi 0, %s71
    %s74 = sphi 0, %s73
    %s88 = sphi 0, %s74
    %s92 = sphi 0, %s92
    %s94 = sphi 0, %s92
    %s95 = sphi 0, %s94
    %s109 = sphi 0, %s95
    %s115 = sphi 0, %s117
    %s118 = sphi 0, %s115
    %s119 = sphi 0, %s118
    %s135 = sphi 0, %s119
    %s141 = sphi 0, %s143
    %s144 = sphi 0, %s141
    %s145 = sphi 0, %s144
    %s161 = sphi 0, %s145
  $region4: #{gpt_forward.23} parent=0 // loop_header_branch
    %14 = sbr.rel (%p12) target = $region8
  $region5: #{gpt_forward.23} parent=0 // loop_body
    %s16 = ssub.s32 %s11, 1
    %s17 = ssub.s32 %s11, 2
    %s18 = sadd.s32 %s11, 1
    %s19 = ssub.s32 %s11, %s18
    %p20 = scmp.eq.s32.totalorder %s19, 0
    %s22 = sadd.s32 %s21, 1
    %s23 = scalar_select %p20, %s21, %s22
    %p26 = pneg %p20
    %p27 = scmp.eq.s32.totalorder %s11, 1
    %p28 = por %p26, %p27
    %p29 = scmp.ne.s32.totalorder %s21, %s24
    %p30 = scmp.eq.s32.totalorder %s11, 0
    %p31 = por %p29, %p30
    %p32 = scmp.ne.s32.totalorder %s21, %s24
    %p33 = scmp.eq.s32.totalorder %s16, 1
    %p34 = por %p32, %p33
    %p35 = scmp.ne.s32.totalorder %s24, %s25
    %p36 = scmp.eq.s32.totalorder %s16, 0
    %p37 = por %p35, %p36
    %p38 = scmp.ne.s32.totalorder %s24, %s25
    %p39 = scmp.eq.s32.totalorder %s17, 1
    %p40 = por %p38, %p39
    %p42 = scmp.ne.s32.totalorder %s25, %s41
    %p43 = scmp.eq.s32.totalorder %s17, 0
    %p44 = por %p42, %p43
    %s45 = ssub.s32 %s11, %s18
    %p46 = scmp.eq.s32.totalorder %s45, 0
    %s48 = sadd.s32 %s47, 1
    %s49 = scalar_select %p46, %s47, %s48
    %p52 = pneg %p46
    %p53 = scmp.eq.s32.totalorder %s11, 1
    %p54 = por %p52, %p53
    %p55 = scmp.ne.s32.totalorder %s47, %s50
    %p56 = scmp.eq.s32.totalorder %s11, 0
    %p57 = por %p55, %p56
    %p58 = scmp.ne.s32.totalorder %s47, %s50
    %p59 = scmp.eq.s32.totalorder %s16, 1
    %p60 = por %p58, %p59
    %p61 = scmp.ne.s32.totalorder %s50, %s51
    %p62 = scmp.eq.s32.totalorder %s16, 0
    %p63 = por %p61, %p62
    %p64 = scmp.ne.s32.totalorder %s50, %s51
    %p65 = scmp.eq.s32.totalorder %s17, 1
    %p66 = por %p64, %p65
    %p68 = scmp.ne.s32.totalorder %s51, %s67
    %p69 = scmp.eq.s32.totalorder %s17, 0
    %p70 = por %p68, %p69
    %s72 = sadd.s32 %s71, 1
    %p75 = scmp.eq.s32.totalorder %s11, 1
    %p76 = scmp.ne.s32.totalorder %s71, %s73
    %p77 = scmp.eq.s32.totalorder %s11, 0
    %p78 = por %p76, %p77
    %p79 = scmp.ne.s32.totalorder %s71, %s73
    %p80 = scmp.eq.s32.totalorder %s16, 1
    %p81 = por %p79, %p80
    %p82 = scmp.ne.s32.totalorder %s73, %s74
    %p83 = scmp.eq.s32.totalorder %s16, 0
    %p84 = por %p82, %p83
    %p85 = scmp.ne.s32.totalorder %s73, %s74
    %p86 = scmp.eq.s32.totalorder %s17, 1
    %p87 = por %p85, %p86
    %p89 = scmp.ne.s32.totalorder %s74, %s88
    %p90 = scmp.eq.s32.totalorder %s17, 0
    %p91 = por %p89, %p90
    %s93 = sadd.s32 %s92, 1
    %p96 = scmp.eq.s32.totalorder %s11, 1
    %p97 = scmp.ne.s32.totalorder %s92, %s94
    %p98 = scmp.eq.s32.totalorder %s11, 0
    %p99 = por %p97, %p98
    %p100 = scmp.ne.s32.totalorder %s92, %s94
    %p101 = scmp.eq.s32.totalorder %s16, 1
    %p102 = por %p100, %p101
    %p103 = scmp.ne.s32.totalorder %s94, %s95
    %p104 = scmp.eq.s32.totalorder %s16, 0
    %p105 = por %p103, %p104
    %p106 = scmp.ne.s32.totalorder %s94, %s95
    %p107 = scmp.eq.s32.totalorder %s17, 1
    %p108 = por %p106, %p107
    %p110 = scmp.ne.s32.totalorder %s95, %s109
    %p111 = scmp.eq.s32.totalorder %s17, 0
    %p112 = por %p110, %p111
    %s113 = ssub.s32 %s11, %s18
    %p114 = scmp.eq.s32.totalorder %s113, 0
    %s116 = sadd.s32 %s115, 1
    %s117 = scalar_select %p114, %s115, %s116
    %p120 = pneg %p114
    %p121 = scmp.eq.s32.totalorder %s11, 1
    %p122 = por %p120, %p121
    %p123 = scmp.ne.s32.totalorder %s115, %s118
    %p124 = scmp.eq.s32.totalorder %s11, 0
    %p125 = por %p123, %p124
    %p126 = scmp.ne.s32.totalorder %s115, %s118
    %p127 = scmp.eq.s32.totalorder %s16, 1
    %p128 = por %p126, %p127
    %p129 = scmp.ne.s32.totalorder %s118, %s119
    %p130 = scmp.eq.s32.totalorder %s16, 0
    %p131 = por %p129, %p130
    %p132 = scmp.ne.s32.totalorder %s118, %s119
    %p133 = scmp.eq.s32.totalorder %s17, 1
    %p134 = por %p132, %p133
    %p136 = scmp.ne.s32.totalorder %s119, %s135
    %p137 = scmp.eq.s32.totalorder %s17, 0
    %p138 = por %p136, %p137
    %s139 = ssub.s32 %s11, %s18
    %p140 = scmp.eq.s32.totalorder %s139, 0
    %s142 = sadd.s32 %s141, 1
    %s143 = scalar_select %p140, %s141, %s142
    %p146 = pneg %p140
    %p147 = scmp.eq.s32.totalorder %s11, 1
    %p148 = por %p146, %p147
    %p149 = scmp.ne.s32.totalorder %s141, %s144
    %p150 = scmp.eq.s32.totalorder %s11, 0
    %p151 = por %p149, %p150
    %p152 = scmp.ne.s32.totalorder %s141, %s144
    %p153 = scmp.eq.s32.totalorder %s16, 1
    %p154 = por %p152, %p153
    %p155 = scmp.ne.s32.totalorder %s144, %s145
    %p156 = scmp.eq.s32.totalorder %s16, 0
    %p157 = por %p155, %p156
    %p158 = scmp.ne.s32.totalorder %s144, %s145
    %p159 = scmp.eq.s32.totalorder %s17, 1
    %p160 = por %p158, %p159
    %p162 = scmp.ne.s32.totalorder %s145, %s161
    %p163 = scmp.eq.s32.totalorder %s17, 0
    %p164 = por %p162, %p163
    %p165 = scmp.le.s32.totalorder 1, %s11
    %p166 = scmp.lt.s32.totalorder %s11, 3
    %p167 = pnand %p165, %p166
    %p168 = pneg %p167
    // Predicated region
    $region9: #{gpt_forward.23} parent=5 // pred_check
      _
    $region10: #{gpt_forward.23} parent=5 // pred_check_branch
      %170 = sbr.rel (%p167) target = $region12
    $region11: #{gpt_forward.23} parent=5 // pred_region
      %s171 = ssub.s32 %s11, 1
      // Predicated region
      $region13: #{gpt_forward.23} parent=11 // pred_check
        %p172 = pneg %p84
      $region14: #{gpt_forward.23} parent=11 // pred_check_branch
        %174 = sbr.rel (%p172) target = $region16
      $region15: #{gpt_forward.23} parent=11 // pred_region
        _
      $region16: #{gpt_forward.23} parent=11 // pred_fallthru
        _
      // Predicated region
      $region17: #{gpt_forward.23} parent=11 // pred_check
        %p175 = pneg %p105
      $region18: #{gpt_forward.23} parent=11 // pred_check_branch
        %177 = sbr.rel (%p175) target = $region20
      $region19: #{gpt_forward.23} parent=11 // pred_region
        _
      $region20: #{gpt_forward.23} parent=11 // pred_fallthru
        _
    $region12: #{gpt_forward.23} parent=5 // pred_fallthru
      _
    %p178 = scmp.lt.s32.totalorder %s11, 2
    // Predicated region
    $region21: #{gpt_forward.23} parent=5 // pred_check
      %p179 = pneg %p178
    $region22: #{gpt_forward.23} parent=5 // pred_check_branch
      %181 = sbr.rel (%p179) target = $region24
    $region23: #{gpt_forward.23} parent=5 // pred_region
      // Predicated region
      $region25: #{gpt_forward.23} parent=23 // pred_check
        %p182 = pneg %p31
      $region26: #{gpt_forward.23} parent=23 // pred_check_branch
        %184 = sbr.rel (%p182) target = $region28
      $region27: #{gpt_forward.23} parent=23 // pred_region
        %p185 = scmp.lt.s32.totalorder %s11, 1
        %s186 = scalar_select %p185, %s11, 1
        %s187 = smul.addr %s186, 3
        %s188 = smul.addr %s187, 4
        %s189 = scalar_lea.vmem %s0, %s188
      $region28: #{gpt_forward.23} parent=23 // pred_fallthru
        _
      // Predicated region
      $region29: #{gpt_forward.23} parent=23 // pred_check
        %p190 = pneg %p57
      $region30: #{gpt_forward.23} parent=23 // pred_check_branch
        %192 = sbr.rel (%p190) target = $region32
      $region31: #{gpt_forward.23} parent=23 // pred_region
        %p193 = scmp.lt.s32.totalorder %s11, 1
        %s194 = scalar_select %p193, %s11, 1
        %s195 = smul.addr %s194, 4
        %s196 = scalar_lea.vmem %s1, %s195
      $region32: #{gpt_forward.23} parent=23 // pred_fallthru
        _
      // Predicated region
      $region33: #{gpt_forward.23} parent=23 // pred_check
        %p197 = pneg %p125
      $region34: #{gpt_forward.23} parent=23 // pred_check_branch
        %199 = sbr.rel (%p197) target = $region36
      $region35: #{gpt_forward.23} parent=23 // pred_region
        %p200 = scmp.lt.s32.totalorder %s11, 1
        %s201 = scalar_select %p200, %s11, 1
        %s202 = scalar_lea.vmem %s4, %s201
      $region36: #{gpt_forward.23} parent=23 // pred_fallthru
        _
    $region24: #{gpt_forward.23} parent=5 // pred_fallthru
      _
    %p203 = scmp.le.s32.totalorder 1, %s11
    %p204 = scmp.lt.s32.totalorder %s11, 3
    %p205 = pnand %p203, %p204
    %p206 = pneg %p205
    // Predicated region
    $region37: #{gpt_forward.23} parent=5 // pred_check
      _
    $region38: #{gpt_forward.23} parent=5 // pred_check_branch
      %208 = sbr.rel (%p205) target = $region40
    $region39: #{gpt_forward.23} parent=5 // pred_region
      %s209 = ssub.s32 %s11, 1
      %p210 = scmp.lt.s32.totalorder %s16, 1
      %s211 = scalar_select %p210, %s16, 1
      %s212 = smul.addr %s211, 3
      %s213 = smul.addr %s212, 4
      %s214 = scalar_lea.vmem %s0, %s213
      %p215 = pneg %p37
      %p216 = pneg %p34
      %p217 = scmp.lt.s32.totalorder %s16, 1
      %s218 = scalar_select %p217, %s16, 1
      %s219 = smul.addr %s218, 4
      %s220 = scalar_lea.vmem %s1, %s219
      %p221 = pneg %p63
      %p222 = pneg %p60
      %p223 = pneg %p84
      %p224 = pneg %p81
      %p225 = pneg %p105
      %p226 = pneg %p102
      %p227 = scmp.lt.s32.totalorder %s16, 1
      %s228 = scalar_select %p227, %s16, 1
      %s229 = scalar_lea.vmem %s4, %s228
      %p230 = pneg %p131
      %p231 = pneg %p128
      %p232 = pneg %p157
      %p233 = pneg %p154
      %p234 = scmp.lt.s32.totalorder %s16, 1
      %s235 = scalar_select %p234, %s16, 1
      %s236 = smul.addr %s235, 3
      %s237 = smul.addr %s236, 4
      %s238 = scalar_lea.vmem %s5, %s237
      %p239 = scmp.lt.s32.totalorder %s16, 1
      %s240 = scalar_select %p239, %s16, 1
      %s241 = smul.addr %s240, 3
      %s242 = smul.addr %s241, 4
      %s243 = scalar_lea.vmem %s0, %s242
      %p244 = scmp.lt.s32.totalorder %s16, 1
      %s245 = scalar_select %p244, %s16, 1
      %s246 = smul.addr %s245, 4
      %s247 = scalar_lea.vmem %s1, %s246
      %p248 = scmp.lt.s32.totalorder %s16, 1
      %s249 = scalar_select %p248, %s16, 1
      %s250 = scalar_lea.vmem %s4, %s249
      %p251 = scmp.lt.s32.totalorder %s16, 1
      %s252 = scalar_select %p251, %s16, 1
      %s253 = smul.addr %s252, 3
      %s254 = smul.addr %s253, 4
      %s255 = scalar_lea.vmem %s5, %s254
      %v257 = vld [vmem:[%s243] sm:$0xf]
      %v258 = vld [vmem:[%s243 + $0x4] sm:$0xf]
      %v259 = vld [vmem:[%s243 + $0x8] sm:$0x1]
      %v260 = vld [vmem:[%s247] sm:$0xf]
      %v261 = vld [vmem:[%s3] sm:$0x1]
      %v262 = vld [vmem:[%s2] sm:$0xf]
      %v263 = vld [vmem:[%s2 + $0x4] sm:$0xf]
      %v264 = vld [vmem:[%s2 + $0x8] sm:$0xf]
      %v265 = vld [vmem:[%s2 + $0xc] sm:$0xf]
      %v266 = vld [vmem:[%s2 + $0x10] sm:$0xf]
      %v267 = vld [vmem:[%s2 + $0x14] sm:$0xf]
      %v274 = vunpack.c.l.b16 %v262
      %v275 = vunpack.c.l.b16 %v263
      %v276 = vunpack.c.l.b16 %v264
      %v277 = vunpack.c.l.b16 %v265
      %v278 = vunpack.c.l.b16 %v266
      %v279 = vunpack.c.l.b16 %v267
      %v280 = vpack.c.b16 %v275, %v274
      %v281 = vpack.c.b16 %v277, %v276
      %v282 = vpack.c.b16 %v279, %v278
      %vm286 = vcmask 392192
      %v288 = vsel %vm286, %v260, 0
      %290 = vmatprep.subr.bf16.mxu0 0
      %291 = vmatpush1.bf16.msra.mxu0 %v280
      %292 = vmatprep.subr.bf16.mxu0 0
      %293 = vmatpush1.bf16.msra.mxu0 %v281
      %294 = vmatprep.subr.bf16.mxu0 0
      %295 = vmatpush1.bf16.msra.mxu0 %v282
      %296 = vmatprep.subr.bf16.mxu0 0
      %297 = vmatpush1.bf16.msra.mxu0 0
      %298 = vmatprep.subr.bf16.mxu0 0
      %299 = vmatpush1.bf16.msra.mxu0 0
      %300 = vmatprep.subr.bf16.mxu0 0
      %301 = vmatpush1.bf16.msra.mxu0 0
      %302 = vmatprep.subr.bf16.mxu0 0
      %303 = vmatpush1.bf16.msra.mxu0 0
      %304 = vmatprep.subr.bf16.mxu0 0
      %305 = vmatpush1.bf16.msra.mxu0 0
      %306 = vmatprep.subr.bf16.mxu0 0
      %307 = vmatpush1.bf16.msra.mxu0 0
      %308 = vmatprep.subr.bf16.mxu0 0
      %309 = vmatpush1.bf16.msra.mxu0 0
      %310 = vmatprep.subr.bf16.mxu0 0
      %311 = vmatpush1.bf16.msra.mxu0 0
      %312 = vmatprep.subr.bf16.mxu0 0
      %313 = vmatpush1.bf16.msra.mxu0 0
      %314 = vmatprep.subr.bf16.mxu0 0
      %315 = vmatpush1.bf16.msra.mxu0 0
      %316 = vmatprep.subr.bf16.mxu0 0
      %317 = vmatpush1.bf16.msra.mxu0 0
      %318 = vmatprep.subr.bf16.mxu0 0
      %319 = vmatpush1.bf16.msra.mxu0 0
      %320 = vmatprep.subr.bf16.mxu0 0
      %321 = vmatpush1.bf16.msra.mxu0 0
      %322 = vmatprep.mubr.bf16.mxu0 0
      %323 = vmatmul.mubr.bf16.gmra.mrb[0].mxu0 %v288
      %v324 = vpop.f32.mrb[0].mxu0
      %v325 = vadd.f32 0.0, %v324
      %v326 = vpop.f32.mrb[0].mxu0
      %v327 = vpop.f32.mrb[0].mxu0
      %v328 = vpop.f32.mrb[0].mxu0
      %329 = vdwg.mxu0
      %v330 = vpack.c.bf16 %v325, %v325
      %v334 = vunpack.c.l.b16 %v257
      %v335 = vunpack.c.l.b16 %v258
      %v336 = vunpack.c.l.b16 %v259
      %v337 = vpack.c.b16 %v335, %v334
      %v338 = vpack.c.b16 %v336, %v336
      %vm339 = vcmask 130048
      %v341 = vsel %vm339, %v337, 0
      %v344 = vsel %vm339, %v338, 0
      %v347 = vsel %vm339, %v330, 0
      %349 = vmatprep.subr.bf16.mxu0 0
      %350 = vmatpush1.bf16.xpose.msra.mxu0 %v347
      %351 = vmatprep.subr.bf16.mxu0 0
      %352 = vmatpush1.bf16.xpose.msra.mxu0 0
      %353 = vmatprep.subr.bf16.mxu0 0
      %354 = vmatpush1.bf16.xpose.msra.mxu0 0
      %355 = vmatprep.subr.bf16.mxu0 0
      %356 = vmatpush1.bf16.xpose.msra.mxu0 0
      %357 = vmatprep.subr.bf16.mxu0 0
      %358 = vmatpush1.bf16.xpose.msra.mxu0 0
      %359 = vmatprep.subr.bf16.mxu0 0
      %360 = vmatpush1.bf16.xpose.msra.mxu0 0
      %361 = vmatprep.subr.bf16.mxu0 0
      %362 = vmatpush1.bf16.xpose.msra.mxu0 0
      %363 = vmatprep.subr.bf16.mxu0 0
      %364 = vmatpush1.bf16.xpose.msra.mxu0 0
      %365 = vmatprep.subr.bf16.mxu0 0
      %366 = vmatpush1.bf16.xpose.msra.mxu0 0
      %367 = vmatprep.subr.bf16.mxu0 0
      %368 = vmatpush1.bf16.xpose.msra.mxu0 0
      %369 = vmatprep.subr.bf16.mxu0 0
      %370 = vmatpush1.bf16.xpose.msra.mxu0 0
      %371 = vmatprep.subr.bf16.mxu0 0
      %372 = vmatpush1.bf16.xpose.msra.mxu0 0
      %373 = vmatprep.subr.bf16.mxu0 0
      %374 = vmatpush1.bf16.xpose.msra.mxu0 0
      %375 = vmatprep.subr.bf16.mxu0 0
      %376 = vmatpush1.bf16.xpose.msra.mxu0 0
      %377 = vmatprep.subr.bf16.mxu0 0
      %378 = vmatpush1.bf16.xpose.msra.mxu0 0
      %379 = vmatprep.subr.bf16.mxu0 0
      %380 = vmatpush1.bf16.xpose.msra.mxu0 0
      %381 = vmatprep.mubr.bf16.mxu0 0
      %382 = vmatmul.mubr.bf16.gmra.mrb[0].mxu0 %v341
      %v383 = vpop.f32.mrb[0].mxu0
      %v384 = vadd.f32 0.0, %v383
      %v385 = vpop.f32.mrb[0].mxu0
      %v386 = vpop.f32.mrb[0].mxu0
      %v387 = vadd.f32 0.0, %v386
      %v388 = vpop.f32.mrb[0].mxu0
      %389 = vmatprep.mubr.bf16.mxu0 0
      %390 = vmatmul.mubr.bf16.gmra.mrb[0].mxu0 %v344
      %v391 = vpop.f32.mrb[0].mxu0
      %v392 = vadd.f32 0.0, %v391
      %v393 = vpop.f32.mrb[0].mxu0
      %v394 = vpop.f32.mrb[0].mxu0
      %v395 = vpop.f32.mrb[0].mxu0
      %396 = vdwg.mxu0
      %v397 = vld [vmem:[%s250] sm:$0x1]
      %vm398 = vcmp.ne.s32.totalorder %v397, 0
      %v399 = vsel %vm398, 1, 0
      %v400 = vlaneseq
      %v401 = vshrl.u32 %v400, 7
      %v402 = vsub.s32 0, %v401
      %v403 = vrot.slane %v399, %v402
      %vm404 = vcmp.eq.s32.totalorder %v403, 1
      %v405 = vsel %vm404, %v384, -3.4028235e+38
      %v406 = vsel %vm404, %v387, -3.4028235e+38
      %v407 = vsel %vm404, %v392, -3.4028235e+38
      %v408 = vunpack.c.l.bf16 %v257
      %v409 = vunpack.c.l.bf16 %v258
      %v410 = vunpack.c.l.bf16 %v259
      %v411 = vunpack.c.l.bf16 %v261
      %v412 = vlaneseq
      %v413 = vshrl.u32 %v412, 7
      %v414 = vsub.s32 0, %v413
      %v415 = vrot.slane %v411, %v414
      %v416 = vmul.f32 %v408, %v415
      %v417 = vmul.f32 %v409, %v415
      %v418 = vmul.f32 %v410, %v415
      %v419 = vsel %vm339, %v416, 0.0
      %420 = vadd.xlane.f32.xlu0 %v419
      %v421 = vpop.xlane.xlu0 %420
      %v422 = vsel %vm339, %v417, 0.0
      %423 = vadd.xlane.f32.xlu0 %v422
      %v424 = vpop.xlane.xlu0 %423
      %vm425 = vcmask 123904
      %v426 = vsel %vm425, %v418, 0.0
      %427 = vadd.xlane.f32.xlu0 %v426
      %v428 = vpop.xlane.xlu0 %427
      %vm429 = vcmask 64512
      %v430 = vsel %vm429, %v405, -inf
      %431 = vmax.xlane.f32.xlu0 %v430
      %v432 = vpop.xlane.xlu0 %431
      %v433 = vsel %vm429, %v406, -inf
      %434 = vmax.xlane.f32.xlu0 %v433
      %v435 = vpop.xlane.xlu0 %434
      %vm436 = vcmask 58368
      %v437 = vsel %vm436, %v407, -inf
      %438 = vmax.xlane.f32.xlu0 %v437
      %v439 = vpop.xlane.xlu0 %438
      %v440 = vmax.f32 %v432, %v421
      %v441 = vmax.f32 %v435, %v424
      %v442 = vmax.f32 %v439, %v428
      %v443 = vsub.f32 %v405, %v440
      %v444 = vsub.f32 %v406, %v441
      %v445 = vsub.f32 %v407, %v442
      %v446 = vmul.f32 %v443, 1.442695
      %v447 = vpow.pop %v446
      %v448 = vmul.f32 %v444, 1.442695
      %v449 = vpow.pop %v448
      %v450 = vmul.f32 %v445, 1.442695
      %v451 = vpow.pop %v450
      %v452 = vsub.f32 %v421, %v440
      %v453 = vsub.f32 %v424, %v441
      %v454 = vsub.f32 %v428, %v442
      %v455 = vmul.f32 %v452, 1.442695
      %v456 = vpow.pop %v455
      %v457 = vmul.f32 %v453, 1.442695
      %v458 = vpow.pop %v457
      %v459 = vmul.f32 %v454, 1.442695
      %v460 = vpow.pop %v459
      %v461 = vsel %vm429, %v447, 0.0
      %462 = vadd.xlane.f32.xlu0 %v461
      %v463 = vpop.xlane.xlu0 %462
      %v464 = vsel %vm429, %v449, 0.0
      %465 = vadd.xlane.f32.xlu0 %v464
      %v466 = vpop.xlane.xlu0 %465
      %v467 = vsel %vm436, %v451, 0.0
      %468 = vadd.xlane.f32.xlu0 %v467
      %v469 = vpop.xlane.xlu0 %468
      %v470 = vadd.f32 %v463, %v456
      %v471 = vadd.f32 %v466, %v458
      %v472 = vadd.f32 %v469, %v460
      %v473 = vrcp.pop %v470
      %v474 = vrcp.pop %v471
      %v475 = vrcp.pop %v472
      %v476 = vpack.c.bf16 %v449, %v447
      %v477 = vpack.c.bf16 %v451, %v451
      %v478 = vmul.f32 %v456, %v415
      %v479 = vmul.f32 %v458, %v415
      %v480 = vmul.f32 %v460, %v415
      %v482 = vsel %vm429, %v476, 0
      %v485 = vsel %vm429, %v477, 0
      %vm487 = vcmask 1043456
      %v488 = vsel %vm487, %v330, 0
      %490 = vmatprep.subr.bf16.mxu0 0
      %491 = vmatpush1.bf16.msra.mxu0 %v488
      %492 = vmatprep.subr.bf16.mxu0 0
      %493 = vmatpush1.bf16.msra.mxu0 0
      %494 = vmatprep.subr.bf16.mxu0 0
      %495 = vmatpush1.bf16.msra.mxu0 0
      %496 = vmatprep.subr.bf16.mxu0 0
      %497 = vmatpush1.bf16.msra.mxu0 0
      %498 = vmatprep.subr.bf16.mxu0 0
      %499 = vmatpush1.bf16.msra.mxu0 0
      %500 = vmatprep.subr.bf16.mxu0 0
      %501 = vmatpush1.bf16.msra.mxu0 0
      %502 = vmatprep.subr.bf16.mxu0 0
      %503 = vmatpush1.bf16.msra.mxu0 0
      %504 = vmatprep.subr.bf16.mxu0 0
      %505 = vmatpush1.bf16.msra.mxu0 0
      %506 = vmatprep.subr.bf16.mxu0 0
      %507 = vmatpush1.bf16.msra.mxu0 0
      %508 = vmatprep.subr.bf16.mxu0 0
      %509 = vmatpush1.bf16.msra.mxu0 0
      %510 = vmatprep.subr.bf16.mxu0 0
      %511 = vmatpush1.bf16.msra.mxu0 0
      %512 = vmatprep.subr.bf16.mxu0 0
      %513 = vmatpush1.bf16.msra.mxu0 0
      %514 = vmatprep.subr.bf16.mxu0 0
      %515 = vmatpush1.bf16.msra.mxu0 0
      %516 = vmatprep.subr.bf16.mxu0 0
      %517 = vmatpush1.bf16.msra.mxu0 0
      %518 = vmatprep.subr.bf16.mxu0 0
      %519 = vmatpush1.bf16.msra.mxu0 0
      %520 = vmatprep.subr.bf16.mxu0 0
      %521 = vmatpush1.bf16.msra.mxu0 0
      %522 = vmatprep.mubr.bf16.mxu0 0
      %523 = vmatmul.mubr.bf16.gmra.mrb[0].mxu0 %v482
      %v524 = vpop.f32.mrb[0].mxu0
      %v525 = vadd.f32 %v478, %v524
      %v526 = vpop.f32.mrb[0].mxu0
      %v527 = vpop.f32.mrb[0].mxu0
      %v528 = vadd.f32 %v479, %v527
      %v529 = vpop.f32.mrb[0].mxu0
      %530 = vmatprep.mubr.bf16.mxu0 0
      %531 = vmatmul.mubr.bf16.gmra.mrb[0].mxu0 %v485
      %v532 = vpop.f32.mrb[0].mxu0
      %v533 = vadd.f32 %v480, %v532
      %v534 = vpop.f32.mrb[0].mxu0
      %v535 = vpop.f32.mrb[0].mxu0
      %v536 = vpop.f32.mrb[0].mxu0
      %537 = vdwg.mxu0
      %v538 = vmul.f32 %v525, %v473
      %v539 = vmul.f32 %v528, %v474
      %v540 = vmul.f32 %v533, %v475
      %v541 = vpack.c.bf16 %v539, %v538
      %v542 = vpack.c.bf16 %v540, %v540
      %v545 = vunpack.c.l.b16 %v541
      %v546 = vunpack.c.h.b16 %v541
      %v547 = vunpack.c.l.b16 %v542
      %v548 = vpack.c.b16 %v545, %v545
      %v549 = vpack.c.b16 %v546, %v546
      %v550 = vpack.c.b16 %v547, %v547
      %vm554 = vcmask 125952
      %555 = vst.msk [vmem:[%s255] sm:$0xf] %vm554, %v548
      %556 = vst.msk [vmem:[%s255 + $0x4] sm:$0xf] %vm554, %v549
      %vm557 = vcmask 122880
      %558 = vst.msk [vmem:[%s255 + $0x8] sm:$0x1] %vm557, %v550
      %p559 = scmp.lt.s32.totalorder %s16, 1
      %s560 = scalar_select %p559, %s16, 1
      %s561 = smul.addr %s560, 3
      %s562 = smul.addr %s561, 4
      %s563 = scalar_lea.vmem %s5, %s562
      // Predicated region
      $region41: #{gpt_forward.23} parent=39 // pred_check
        %p564 = pneg %p154
      $region42: #{gpt_forward.23} parent=39 // pred_check_branch
        %566 = sbr.rel (%p564) target = $region44
      $region43: #{gpt_forward.23} parent=39 // pred_region
        _
      $region44: #{gpt_forward.23} parent=39 // pred_fallthru
        _
    $region40: #{gpt_forward.23} parent=5 // pred_fallthru
      _
    %p567 = scmp.le.s32.totalorder 2, %s11
    // Predicated region
    $region45: #{gpt_forward.23} parent=5 // pred_check
      %p568 = pneg %p567
    $region46: #{gpt_forward.23} parent=5 // pred_check_branch
      %570 = sbr.rel (%p568) target = $region48
    $region47: #{gpt_forward.23} parent=5 // pred_region
      %s571 = ssub.s32 %s11, 2
      // Predicated region
      $region49: #{gpt_forward.23} parent=47 // pred_check
        %p572 = pneg %p160
      $region50: #{gpt_forward.23} parent=47 // pred_check_branch
        %574 = sbr.rel (%p572) target = $region52
      $region51: #{gpt_forward.23} parent=47 // pred_region
        %p575 = scmp.lt.s32.totalorder %s17, 1
        %s576 = scalar_select %p575, %s17, 1
        %s577 = smul.addr %s576, 3
        %s578 = smul.addr %s577, 4
        %s579 = scalar_lea.vmem %s5, %s578
      $region52: #{gpt_forward.23} parent=47 // pred_fallthru
        _
    $region48: #{gpt_forward.23} parent=5 // pred_fallthru
      _
  $region6: #{gpt_forward.23} parent=0 // loop_footer
    %s15 = sadd.s32 1, %s11
  $region7: #{gpt_forward.23} parent=0 // loop_footer_branch
    %10 = sbr.rel target = $region3
  $region8: #{gpt_forward.23} parent=0 // loop_exit
    _

// kernel: gpt_forward.26
$region0: #{gpt_forward.26}
  #allocation0 [shape = 'u32[]', space=smem, size = 0x4, offset = 0x4, fixed_abs, tag = 'smem constant byte address 0x4 - core index']
  #allocation1 [shape = 'u32[144,128]{1,0:T(1,128)}', space=vmem, size = 0x12000, scoped, tag = 'internal scratch']
  %s0 = inlined_call_operand.vmem [shape: bf16[18,128], index: 0, kind: input, shape index: {}]
  %s1 = inlined_call_operand.vmem [shape: f32[1,128], index: 1, kind: input, shape index: {}]
  %s2 = inlined_call_operand.vmem [shape: bf16[128,32], index: 2, kind: input, shape index: {}]
  %s3 = inlined_call_operand.vmem [shape: bf16[18,32], index: 3, kind: input, shape index: {}]
  %s4 = inlined_call_operand.vmem [shape: bf16[18,32], index: 4, kind: output, shape index: {}]
  %s5 = sld [smem:[#allocation0]]
  $region26: #{gpt_forward.26} parent=0
    _
  %s7 = ssub.s32 1, %s5
  %s8 = scalar_select 0, %s7, %s5
  // Predicated region
  $region2: #{gpt_forward.26} parent=0 // pred_check
    _
  $region3: #{gpt_forward.26} parent=0 // pred_check_branch
    %10 = sbr.rel (0) target = $region5
  $region4: #{gpt_forward.26} parent=0 // pred_region
    _
  $region5: #{gpt_forward.26} parent=0 // pred_fallthru
    _
  // Predicated region
  $region6: #{gpt_forward.26} parent=0 // pred_check
    _
  $region7: #{gpt_forward.26} parent=0 // pred_check_branch
    %12 = sbr.rel (0) target = $region9
  $region8: #{gpt_forward.26} parent=0 // pred_region
    _
  $region9: #{gpt_forward.26} parent=0 // pred_fallthru
    _
  // Predicated region
  $region10: #{gpt_forward.26} parent=0 // pred_check
    _
  $region11: #{gpt_forward.26} parent=0 // pred_check_branch
    %14 = sbr.rel (0) target = $region13
  $region12: #{gpt_forward.26} parent=0 // pred_region
    _
  $region13: #{gpt_forward.26} parent=0 // pred_fallthru
    _
  // Predicated region
  $region14: #{gpt_forward.26} parent=0 // pred_check
    _
  $region15: #{gpt_forward.26} parent=0 // pred_check_branch
    %16 = sbr.rel (0) target = $region17
  $region16: #{gpt_forward.26} parent=0 // pred_region
    _
  $region17: #{gpt_forward.26} parent=0 // pred_fallthru
    _
  %v18 = vld [vmem:[%s0] sm:$0xf]
  %v19 = vld [vmem:[%s0 + $0x4] sm:$0xf]
  %v20 = vld [vmem:[%s0 + $0x8] sm:$0x1]
  %v21 = vunpack.c.l.bf16 %v18
  %v22 = vunpack.c.l.bf16 %v19
  %v23 = vunpack.c.l.bf16 %v20
  %24 = vadd.xlane.f32.xlu0 %v21
  %v25 = vpop.xlane.xlu0 %24
  %26 = vadd.xlane.f32.xlu0 %v22
  %v27 = vpop.xlane.xlu0 %26
  %vm28 = vcmask 1041408
  %v29 = vsel %vm28, %v23, 0.0
  %30 = vadd.xlane.f32.xlu0 %v29
  %v31 = vpop.xlane.xlu0 %30
  %v32 = vrcp.pop 128.0
  %v33 = vmul.f32 %v25, %v32
  %v34 = vmul.f32 %v27, %v32
  %v35 = vmul.f32 %v31, %v32
  %v36 = vsub.f32 %v21, %v33
  %v37 = vsub.f32 %v22, %v34
  %v38 = vsub.f32 %v23, %v35
  %v39 = vmul.f32 %v36, %v36
  %v40 = vmul.f32 %v37, %v37
  %v41 = vmul.f32 %v38, %v38
  %42 = vadd.xlane.f32.xlu0 %v39
  %v43 = vpop.xlane.xlu0 %42
  %44 = vadd.xlane.f32.xlu0 %v40
  %v45 = vpop.xlane.xlu0 %44
  %v46 = vsel %vm28, %v41, 0.0
  %47 = vadd.xlane.f32.xlu0 %v46
  %v48 = vpop.xlane.xlu0 %47
  %v49 = vmul.f32 %v43, %v32
  %v50 = vmul.f32 %v45, %v32
  %v51 = vmul.f32 %v48, %v32
  %v52 = vadd.f32 %v49, 1e-05
  %v53 = vadd.f32 %v50, 1e-05
  %v54 = vadd.f32 %v51, 1e-05
  %v55 = vrsqrt.pop %v52
  %v56 = vrsqrt.pop %v53
  %v57 = vrsqrt.pop %v54
  %v58 = vmul.f32 %v36, %v55
  %v59 = vmul.f32 %v37, %v56
  %v60 = vmul.f32 %v38, %v57
  %v61 = vld [vmem:[%s1] sm:$0x1]
  %v63 = vlaneseq
  %v64 = vshrl.u32 %v63, 7
  %v65 = vsub.s32 0, %v64
  %v66 = vrot.slane %v61, %v65
  %v68 = vmul.f32 %v58, %v66
  %v69 = vmul.f32 %v59, %v66
  %v70 = vmul.f32 %v60, %v66
  %v71 = vld [vmem:[%s2] sm:$0xf]
  %v72 = vld [vmem:[%s2 + $0x4] sm:$0xf]
  %v73 = vld [vmem:[%s2 + $0x8] sm:$0xf]
  %v74 = vld [vmem:[%s2 + $0xc] sm:$0xf]
  %v75 = vld [vmem:[%s2 + $0x10] sm:$0xf]
  %v76 = vld [vmem:[%s2 + $0x14] sm:$0xf]
  %v77 = vld [vmem:[%s2 + $0x18] sm:$0xf]
  %v78 = vld [vmem:[%s2 + $0x1c] sm:$0xf]
  %v79 = vld [vmem:[%s2 + $0x20] sm:$0xf]
  %v80 = vld [vmem:[%s2 + $0x24] sm:$0xf]
  %v81 = vld [vmem:[%s2 + $0x28] sm:$0xf]
  %v82 = vld [vmem:[%s2 + $0x2c] sm:$0xf]
  %v83 = vld [vmem:[%s2 + $0x30] sm:$0xf]
  %v84 = vld [vmem:[%s2 + $0x34] sm:$0xf]
  %v85 = vld [vmem:[%s2 + $0x38] sm:$0xf]
  %v86 = vld [vmem:[%s2 + $0x3c] sm:$0xf]
  %v87 = vpack.c.bf16 %v69, %v68
  %v88 = vpack.c.bf16 %v70, %v70
  %v89 = vld [vmem:[%s3] sm:$0xf]
  %v90 = vld [vmem:[%s3 + $0x4] sm:$0xf]
  %v91 = vld [vmem:[%s3 + $0x8] sm:$0x1]
  %v92 = vunpack.c.l.bf16 %v89
  %v93 = vunpack.c.l.bf16 %v90
  %v94 = vunpack.c.l.bf16 %v91
  %v111 = vunpack.c.l.b16 %v71
  %v112 = vunpack.c.l.b16 %v72
  %v113 = vunpack.c.l.b16 %v73
  %v114 = vunpack.c.l.b16 %v74
  %v115 = vunpack.c.l.b16 %v75
  %v116 = vunpack.c.l.b16 %v76
  %v117 = vunpack.c.l.b16 %v77
  %v118 = vunpack.c.l.b16 %v78
  %v119 = vunpack.c.l.b16 %v79
  %v120 = vunpack.c.l.b16 %v80
  %v121 = vunpack.c.l.b16 %v81
  %v122 = vunpack.c.l.b16 %v82
  %v123 = vunpack.c.l.b16 %v83
  %v124 = vunpack.c.l.b16 %v84
  %v125 = vunpack.c.l.b16 %v85
  %v126 = vunpack.c.l.b16 %v86
  %v127 = vpack.c.b16 %v112, %v111
  %v128 = vpack.c.b16 %v114, %v113
  %v129 = vpack.c.b16 %v116, %v115
  %v130 = vpack.c.b16 %v118, %v117
  %v131 = vpack.c.b16 %v120, %v119
  %v132 = vpack.c.b16 %v122, %v121
  %v133 = vpack.c.b16 %v124, %v123
  %v134 = vpack.c.b16 %v126, %v125
  %143 = vmatprep.subr.bf16.mxu0 0
  %144 = vmatpush1.bf16.msra.mxu0 %v127
  %145 = vmatprep.subr.bf16.mxu0 0
  %146 = vmatpush1.bf16.msra.mxu0 %v128
  %147 = vmatprep.subr.bf16.mxu0 0
  %148 = vmatpush1.bf16.msra.mxu0 %v129
  %149 = vmatprep.subr.bf16.mxu0 0
  %150 = vmatpush1.bf16.msra.mxu0 %v130
  %151 = vmatprep.subr.bf16.mxu0 0
  %152 = vmatpush1.bf16.msra.mxu0 %v131
  %153 = vmatprep.subr.bf16.mxu0 0
  %154 = vmatpush1.bf16.msra.mxu0 %v132
  %155 = vmatprep.subr.bf16.mxu0 0
  %156 = vmatpush1.bf16.msra.mxu0 %v133
  %157 = vmatprep.subr.bf16.mxu0 0
  %158 = vmatpush1.bf16.msra.mxu0 %v134
  %159 = vmatprep.subr.bf16.mxu0 0
  %160 = vmatpush1.bf16.msra.mxu0 0
  %161 = vmatprep.subr.bf16.mxu0 0
  %162 = vmatpush1.bf16.msra.mxu0 0
  %163 = vmatprep.subr.bf16.mxu0 0
  %164 = vmatpush1.bf16.msra.mxu0 0
  %165 = vmatprep.subr.bf16.mxu0 0
  %166 = vmatpush1.bf16.msra.mxu0 0
  %167 = vmatprep.subr.bf16.mxu0 0
  %168 = vmatpush1.bf16.msra.mxu0 0
  %169 = vmatprep.subr.bf16.mxu0 0
  %170 = vmatpush1.bf16.msra.mxu0 0
  %171 = vmatprep.subr.bf16.mxu0 0
  %172 = vmatpush1.bf16.msra.mxu0 0
  %173 = vmatprep.subr.bf16.mxu0 0
  %174 = vmatpush1.bf16.msra.mxu0 0
  %175 = vmatprep.mubr.bf16.mxu0 0
  %176 = vmatmul.mubr.bf16.gmra.mrb[0].mxu0 %v87
  %v177 = vpop.f32.mrb[0].mxu0
  %v178 = vadd.f32 %v92, %v177
  %v179 = vpop.f32.mrb[0].mxu0
  %v180 = vpop.f32.mrb[0].mxu0
  %v181 = vadd.f32 %v93, %v180
  %v182 = vpop.f32.mrb[0].mxu0
  %183 = vmatprep.mubr.bf16.mxu0 0
  %184 = vmatmul.mubr.bf16.gmra.mrb[0].mxu0 %v88
  %v185 = vpop.f32.mrb[0].mxu0
  %v186 = vadd.f32 %v94, %v185
  %v187 = vpop.f32.mrb[0].mxu0
  %v188 = vpop.f32.mrb[0].mxu0
  %v189 = vpop.f32.mrb[0].mxu0
  %190 = vdwg.mxu0
  %v191 = vpack.c.bf16 %v181, %v178
  %v192 = vpack.c.bf16 %v186, %v186
  %v195 = vunpack.c.l.b16 %v191
  %v196 = vunpack.c.h.b16 %v191
  %v197 = vunpack.c.l.b16 %v192
  %v198 = vpack.c.b16 %v195, %v195
  %v199 = vpack.c.b16 %v196, %v196
  %v200 = vpack.c.b16 %v197, %v197
  %vm204 = vcmask 257024
  %205 = vst.msk [vmem:[%s4] sm:$0xf] %vm204, %v198
  %206 = vst.msk [vmem:[%s4 + $0x4] sm:$0xf] %vm204, %v199
  %vm207 = vcmask 253952
  %208 = vst.msk [vmem:[%s4 + $0x8] sm:$0x1] %vm207, %v200
  // Predicated region
  $region18: #{gpt_forward.26} parent=0 // pred_check
    _
  $region19: #{gpt_forward.26} parent=0 // pred_check_branch
    %210 = sbr.rel (0) target = $region21
  $region20: #{gpt_forward.26} parent=0 // pred_region
    _
  $region21: #{gpt_forward.26} parent=0 // pred_fallthru
    _
  // Predicated region
  $region22: #{gpt_forward.26} parent=0 // pred_check
    _
  $region23: #{gpt_forward.26} parent=0 // pred_check_branch
    %212 = sbr.rel (0) target = $region25
  $region24: #{gpt_forward.26} parent=0 // pred_region
    _
  $region25: #{gpt_forward.26} parent=0 // pred_fallthru
    _

// kernel: gpt_forward.25
$region0: #{gpt_forward.25}
  #allocation0 [shape = 'u32[]', space=smem, size = 0x4, offset = 0x4, fixed_abs, tag = 'smem constant byte address 0x4 - core index']
  #allocation1 [shape = 'u32[144,128]{1,0:T(1,128)}', space=vmem, size = 0x12000, scoped, tag = 'internal scratch']
  %s0 = inlined_call_operand.vmem [shape: bf16[18,32], index: 0, kind: input, shape index: {}]
  %s1 = inlined_call_operand.vmem [shape: f32[1,32], index: 1, kind: input, shape index: {}]
  %s2 = inlined_call_operand.vmem [shape: bf16[32,128], index: 2, kind: input, shape index: {}]
  %s3 = inlined_call_operand.vmem [shape: bf16[18,128], index: 3, kind: output, shape index: {}]
  %s4 = sld [smem:[#allocation0]]
  $region22: #{gpt_forward.25} parent=0
    _
  %s6 = ssub.s32 1, %s4
  %s7 = scalar_select 0, %s6, %s4
  // Predicated region
  $region2: #{gpt_forward.25} parent=0 // pred_check
    _
  $region3: #{gpt_forward.25} parent=0 // pred_check_branch
    %9 = sbr.rel (0) target = $region5
  $region4: #{gpt_forward.25} parent=0 // pred_region
    _
  $region5: #{gpt_forward.25} parent=0 // pred_fallthru
    _
  // Predicated region
  $region6: #{gpt_forward.25} parent=0 // pred_check
    _
  $region7: #{gpt_forward.25} parent=0 // pred_check_branch
    %11 = sbr.rel (0) target = $region9
  $region8: #{gpt_forward.25} parent=0 // pred_region
    _
  $region9: #{gpt_forward.25} parent=0 // pred_fallthru
    _
  // Predicated region
  $region10: #{gpt_forward.25} parent=0 // pred_check
    _
  $region11: #{gpt_forward.25} parent=0 // pred_check_branch
    %13 = sbr.rel (0) target = $region13
  $region12: #{gpt_forward.25} parent=0 // pred_region
    _
  $region13: #{gpt_forward.25} parent=0 // pred_fallthru
    _
  %v15 = vld [vmem:[%s0] sm:$0xf]
  %v16 = vld [vmem:[%s0 + $0x4] sm:$0xf]
  %v17 = vld [vmem:[%s0 + $0x8] sm:$0x1]
  %v18 = vunpack.c.l.bf16 %v15
  %v19 = vunpack.c.l.bf16 %v16
  %v20 = vunpack.c.l.bf16 %v17
  %vm21 = vcmask 261120
  %v22 = vsel %vm21, %v18, 0.0
  %23 = vadd.xlane.f32.xlu0 %v22
  %v24 = vpop.xlane.xlu0 %23
  %v25 = vsel %vm21, %v19, 0.0
  %26 = vadd.xlane.f32.xlu0 %v25
  %v27 = vpop.xlane.xlu0 %26
  %vm28 = vcmask 254976
  %v29 = vsel %vm28, %v20, 0.0
  %30 = vadd.xlane.f32.xlu0 %v29
  %v31 = vpop.xlane.xlu0 %30
  %v32 = vrcp.pop 32.0
  %v33 = vmul.f32 %v24, %v32
  %v34 = vmul.f32 %v27, %v32
  %v35 = vmul.f32 %v31, %v32
  %v36 = vsub.f32 %v18, %v33
  %v37 = vsub.f32 %v19, %v34
  %v38 = vsub.f32 %v20, %v35
  %v39 = vmul.f32 %v36, %v36
  %v40 = vmul.f32 %v37, %v37
  %v41 = vmul.f32 %v38, %v38
  %v42 = vsel %vm21, %v39, 0.0
  %43 = vadd.xlane.f32.xlu0 %v42
  %v44 = vpop.xlane.xlu0 %43
  %v45 = vsel %vm21, %v40, 0.0
  %46 = vadd.xlane.f32.xlu0 %v45
  %v47 = vpop.xlane.xlu0 %46
  %v48 = vsel %vm28, %v41, 0.0
  %49 = vadd.xlane.f32.xlu0 %v48
  %v50 = vpop.xlane.xlu0 %49
  %v51 = vmul.f32 %v44, %v32
  %v52 = vmul.f32 %v47, %v32
  %v53 = vmul.f32 %v50, %v32
  %v54 = vadd.f32 %v51, 1e-05
  %v55 = vadd.f32 %v52, 1e-05
  %v56 = vadd.f32 %v53, 1e-05
  %v57 = vrsqrt.pop %v54
  %v58 = vrsqrt.pop %v55
  %v59 = vrsqrt.pop %v56
  %v60 = vmul.f32 %v36, %v57
  %v61 = vmul.f32 %v37, %v58
  %v62 = vmul.f32 %v38, %v59
  %v63 = vld [vmem:[%s1] sm:$0x1]
  %v65 = vlaneseq
  %v66 = vshrl.u32 %v65, 7
  %v67 = vsub.s32 0, %v66
  %v68 = vrot.slane %v63, %v67
  %v70 = vmul.f32 %v60, %v68
  %v71 = vmul.f32 %v61, %v68
  %v72 = vmul.f32 %v62, %v68
  %v73 = vld [vmem:[%s2] sm:$0xf]
  %v74 = vld [vmem:[%s2 + $0x4] sm:$0xf]
  %v75 = vld [vmem:[%s2 + $0x8] sm:$0xf]
  %v76 = vld [vmem:[%s2 + $0xc] sm:$0xf]
  %v77 = vpack.c.bf16 %v71, %v70
  %v78 = vpack.c.bf16 %v72, %v72
  %v83 = vunpack.c.l.b16 %v73
  %v84 = vunpack.c.l.b16 %v74
  %v85 = vunpack.c.l.b16 %v75
  %v86 = vunpack.c.l.b16 %v76
  %v87 = vpack.c.b16 %v84, %v83
  %v88 = vpack.c.b16 %v86, %v85
  %v92 = vsel %vm21, %v77, 0
  %v95 = vsel %vm21, %v78, 0
  %97 = vmatprep.subr.bf16.mxu0 0
  %98 = vmatpush1.bf16.msra.mxu0 %v87
  %99 = vmatprep.subr.bf16.mxu0 0
  %100 = vmatpush1.bf16.msra.mxu0 %v88
  %101 = vmatprep.subr.bf16.mxu0 0
  %102 = vmatpush1.bf16.msra.mxu0 0
  %103 = vmatprep.subr.bf16.mxu0 0
  %104 = vmatpush1.bf16.msra.mxu0 0
  %105 = vmatprep.subr.bf16.mxu0 0
  %106 = vmatpush1.bf16.msra.mxu0 0
  %107 = vmatprep.subr.bf16.mxu0 0
  %108 = vmatpush1.bf16.msra.mxu0 0
  %109 = vmatprep.subr.bf16.mxu0 0
  %110 = vmatpush1.bf16.msra.mxu0 0
  %111 = vmatprep.subr.bf16.mxu0 0
  %112 = vmatpush1.bf16.msra.mxu0 0
  %113 = vmatprep.subr.bf16.mxu0 0
  %114 = vmatpush1.bf16.msra.mxu0 0
  %115 = vmatprep.subr.bf16.mxu0 0
  %116 = vmatpush1.bf16.msra.mxu0 0
  %117 = vmatprep.subr.bf16.mxu0 0
  %118 = vmatpush1.bf16.msra.mxu0 0
  %119 = vmatprep.subr.bf16.mxu0 0
  %120 = vmatpush1.bf16.msra.mxu0 0
  %121 = vmatprep.subr.bf16.mxu0 0
  %122 = vmatpush1.bf16.msra.mxu0 0
  %123 = vmatprep.subr.bf16.mxu0 0
  %124 = vmatpush1.bf16.msra.mxu0 0
  %125 = vmatprep.subr.bf16.mxu0 0
  %126 = vmatpush1.bf16.msra.mxu0 0
  %127 = vmatprep.subr.bf16.mxu0 0
  %128 = vmatpush1.bf16.msra.mxu0 0
  %129 = vmatprep.mubr.bf16.mxu0 0
  %130 = vmatmul.mubr.bf16.gmra.mrb[0].mxu0 %v92
  %v131 = vpop.f32.mrb[0].mxu0
  %v132 = vadd.f32 0.0, %v131
  %v133 = vpop.f32.mrb[0].mxu0
  %v134 = vpop.f32.mrb[0].mxu0
  %v135 = vadd.f32 0.0, %v134
  %v136 = vpop.f32.mrb[0].mxu0
  %137 = vmatprep.mubr.bf16.mxu0 0
  %138 = vmatmul.mubr.bf16.gmra.mrb[0].mxu0 %v95
  %v139 = vpop.f32.mrb[0].mxu0
  %v140 = vadd.f32 0.0, %v139
  %v141 = vpop.f32.mrb[0].mxu0
  %v142 = vpop.f32.mrb[0].mxu0
  %v143 = vpop.f32.mrb[0].mxu0
  %144 = vdwg.mxu0
  %v145 = vmul.f32 %v132, 0.5
  %v146 = vmul.f32 %v135, 0.5
  %v147 = vmul.f32 %v140, 0.5
  %v148 = vmul.f32 %v132, 0.70710677
  %v149 = vmul.f32 %v135, 0.70710677
  %v150 = vmul.f32 %v140, 0.70710677
  %v151 = verf.f32.pop %v148
  %v152 = verf.f32.pop %v149
  %v153 = verf.f32.pop %v150
  %v154 = vadd.f32 %v151, 1.0
  %v155 = vadd.f32 %v152, 1.0
  %v156 = vadd.f32 %v153, 1.0
  %v157 = vmul.f32 %v145, %v154
  %v158 = vmul.f32 %v146, %v155
  %v159 = vmul.f32 %v147, %v156
  %v160 = vpack.c.bf16 %v158, %v157
  %v161 = vpack.c.bf16 %v159, %v159
  %v164 = vunpack.c.l.b16 %v160
  %v165 = vunpack.c.h.b16 %v160
  %v166 = vunpack.c.l.b16 %v161
  %v167 = vpack.c.b16 %v164, %v164
  %v168 = vpack.c.b16 %v165, %v165
  %v169 = vpack.c.b16 %v166, %v166
  %173 = vst [vmem:[%s3] sm:$0xf] %v167
  %174 = vst [vmem:[%s3 + $0x4] sm:$0xf] %v168
  %175 = vst [vmem:[%s3 + $0x8] sm:$0x1] %v169
  // Predicated region
  $region14: #{gpt_forward.25} parent=0 // pred_check
    _
  $region15: #{gpt_forward.25} parent=0 // pred_check_branch
    %177 = sbr.rel (0) target = $region17
  $region16: #{gpt_forward.25} parent=0 // pred_region
    _
  $region17: #{gpt_forward.25} parent=0 // pred_fallthru
    _
  // Predicated region
  $region18: #{gpt_forward.25} parent=0 // pred_check
    _
  $region19: #{gpt_forward.25} parent=0 // pred_check_branch
    %179 = sbr.rel (0) target = $region21
  $region20: #{gpt_forward.25} parent=0 // pred_region
    _
  $region21: #{gpt_forward.25} parent=0 // pred_fallthru
    _

// kernel: gpt_forward.35
$region0: #{gpt_forward.35}
  #allocation0 [shape = 'u32[]', space=smem, size = 0x4, offset = 0x4, fixed_abs, tag = 'smem constant byte address 0x4 - core index']
  #allocation1 [shape = 'u32[144,128]{1,0:T(1,128)}', space=vmem, size = 0x12000, scoped, tag = 'internal scratch']
  %s0 = inlined_call_operand.vmem [shape: bf16[18,32], index: 0, kind: input, shape index: {}]
  %s1 = inlined_call_operand.vmem [shape: f32[1,32], index: 1, kind: input, shape index: {}]
  %s2 = inlined_call_operand.vmem [shape: bf16[64,32], index: 2, kind: input, shape index: {}]
  %s3 = inlined_call_operand.vmem [shape: f32[18,64], index: 3, kind: output, shape index: {}]
  %s4 = sld [smem:[#allocation0]]
  $region22: #{gpt_forward.35} parent=0
    _
  %s6 = ssub.s32 1, %s4
  %s7 = scalar_select 0, %s6, %s4
  // Predicated region
  $region2: #{gpt_forward.35} parent=0 // pred_check
    _
  $region3: #{gpt_forward.35} parent=0 // pred_check_branch
    %9 = sbr.rel (0) target = $region5
  $region4: #{gpt_forward.35} parent=0 // pred_region
    _
  $region5: #{gpt_forward.35} parent=0 // pred_fallthru
    _
  // Predicated region
  $region6: #{gpt_forward.35} parent=0 // pred_check
    _
  $region7: #{gpt_forward.35} parent=0 // pred_check_branch
    %11 = sbr.rel (0) target = $region9
  $region8: #{gpt_forward.35} parent=0 // pred_region
    _
  $region9: #{gpt_forward.35} parent=0 // pred_fallthru
    _
  // Predicated region
  $region10: #{gpt_forward.35} parent=0 // pred_check
    _
  $region11: #{gpt_forward.35} parent=0 // pred_check_branch
    %13 = sbr.rel (0) target = $region13
  $region12: #{gpt_forward.35} parent=0 // pred_region
    _
  $region13: #{gpt_forward.35} parent=0 // pred_fallthru
    _
  %v15 = vld [vmem:[%s0] sm:$0xf]
  %v16 = vld [vmem:[%s0 + $0x4] sm:$0xf]
  %v17 = vld [vmem:[%s0 + $0x8] sm:$0x1]
  %v18 = vunpack.c.l.bf16 %v15
  %v19 = vunpack.c.l.bf16 %v16
  %v20 = vunpack.c.l.bf16 %v17
  %vm21 = vcmask 261120
  %v22 = vsel %vm21, %v18, 0.0
  %23 = vadd.xlane.f32.xlu0 %v22
  %v24 = vpop.xlane.xlu0 %23
  %v25 = vsel %vm21, %v19, 0.0
  %26 = vadd.xlane.f32.xlu0 %v25
  %v27 = vpop.xlane.xlu0 %26
  %vm28 = vcmask 254976
  %v29 = vsel %vm28, %v20, 0.0
  %30 = vadd.xlane.f32.xlu0 %v29
  %v31 = vpop.xlane.xlu0 %30
  %v32 = vrcp.pop 32.0
  %v33 = vmul.f32 %v24, %v32
  %v34 = vmul.f32 %v27, %v32
  %v35 = vmul.f32 %v31, %v32
  %v36 = vsub.f32 %v18, %v33
  %v37 = vsub.f32 %v19, %v34
  %v38 = vsub.f32 %v20, %v35
  %v39 = vmul.f32 %v36, %v36
  %v40 = vmul.f32 %v37, %v37
  %v41 = vmul.f32 %v38, %v38
  %v42 = vsel %vm21, %v39, 0.0
  %43 = vadd.xlane.f32.xlu0 %v42
  %v44 = vpop.xlane.xlu0 %43
  %v45 = vsel %vm21, %v40, 0.0
  %46 = vadd.xlane.f32.xlu0 %v45
  %v47 = vpop.xlane.xlu0 %46
  %v48 = vsel %vm28, %v41, 0.0
  %49 = vadd.xlane.f32.xlu0 %v48
  %v50 = vpop.xlane.xlu0 %49
  %v51 = vmul.f32 %v44, %v32
  %v52 = vmul.f32 %v47, %v32
  %v53 = vmul.f32 %v50, %v32
  %v54 = vadd.f32 %v51, 1e-05
  %v55 = vadd.f32 %v52, 1e-05
  %v56 = vadd.f32 %v53, 1e-05
  %v57 = vrsqrt.pop %v54
  %v58 = vrsqrt.pop %v55
  %v59 = vrsqrt.pop %v56
  %v60 = vmul.f32 %v36, %v57
  %v61 = vmul.f32 %v37, %v58
  %v62 = vmul.f32 %v38, %v59
  %v63 = vld [vmem:[%s1] sm:$0x1]
  %v65 = vlaneseq
  %v66 = vshrl.u32 %v65, 7
  %v67 = vsub.s32 0, %v66
  %v68 = vrot.slane %v63, %v67
  %v70 = vmul.f32 %v60, %v68
  %v71 = vmul.f32 %v61, %v68
  %v72 = vmul.f32 %v62, %v68
  %v73 = vld [vmem:[%s2] sm:$0xf]
  %v74 = vld [vmem:[%s2 + $0x4] sm:$0xf]
  %v75 = vld [vmem:[%s2 + $0x8] sm:$0xf]
  %v76 = vld [vmem:[%s2 + $0xc] sm:$0xf]
  %v77 = vld [vmem:[%s2 + $0x10] sm:$0xf]
  %v78 = vld [vmem:[%s2 + $0x14] sm:$0xf]
  %v79 = vld [vmem:[%s2 + $0x18] sm:$0xf]
  %v80 = vld [vmem:[%s2 + $0x1c] sm:$0xf]
  %v81 = vpack.c.bf16 %v71, %v70
  %v82 = vpack.c.bf16 %v72, %v72
  %v91 = vunpack.c.l.b16 %v73
  %v92 = vunpack.c.l.b16 %v74
  %v93 = vunpack.c.l.b16 %v75
  %v94 = vunpack.c.l.b16 %v76
  %v95 = vunpack.c.l.b16 %v77
  %v96 = vunpack.c.l.b16 %v78
  %v97 = vunpack.c.l.b16 %v79
  %v98 = vunpack.c.l.b16 %v80
  %v99 = vpack.c.b16 %v92, %v91
  %v100 = vpack.c.b16 %v94, %v93
  %v101 = vpack.c.b16 %v96, %v95
  %v102 = vpack.c.b16 %v98, %v97
  %v104 = vsel %vm21, %v81, 0
  %v107 = vsel %vm21, %v82, 0
  %v110 = vsel %vm21, %v99, 0
  %v113 = vsel %vm21, %v100, 0
  %v116 = vsel %vm21, %v101, 0
  %v119 = vsel %vm21, %v102, 0
  %121 = vmatprep.subr.bf16.mxu0 0
  %122 = vmatpush1.bf16.xpose.msra.mxu0 %v110
  %123 = vmatprep.subr.bf16.mxu0 0
  %124 = vmatpush1.bf16.xpose.msra.mxu0 %v113
  %125 = vmatprep.subr.bf16.mxu0 0
  %126 = vmatpush1.bf16.xpose.msra.mxu0 %v116
  %127 = vmatprep.subr.bf16.mxu0 0
  %128 = vmatpush1.bf16.xpose.msra.mxu0 %v119
  %129 = vmatprep.subr.bf16.mxu0 0
  %130 = vmatpush1.bf16.xpose.msra.mxu0 0
  %131 = vmatprep.subr.bf16.mxu0 0
  %132 = vmatpush1.bf16.xpose.msra.mxu0 0
  %133 = vmatprep.subr.bf16.mxu0 0
  %134 = vmatpush1.bf16.xpose.msra.mxu0 0
  %135 = vmatprep.subr.bf16.mxu0 0
  %136 = vmatpush1.bf16.xpose.msra.mxu0 0
  %137 = vmatprep.subr.bf16.mxu0 0
  %138 = vmatpush1.bf16.xpose.msra.mxu0 0
  %139 = vmatprep.subr.bf16.mxu0 0
  %140 = vmatpush1.bf16.xpose.msra.mxu0 0
  %141 = vmatprep.subr.bf16.mxu0 0
  %142 = vmatpush1.bf16.xpose.msra.mxu0 0
  %143 = vmatprep.subr.bf16.mxu0 0
  %144 = vmatpush1.bf16.xpose.msra.mxu0 0
  %145 = vmatprep.subr.bf16.mxu0 0
  %146 = vmatpush1.bf16.xpose.msra.mxu0 0
  %147 = vmatprep.subr.bf16.mxu0 0
  %148 = vmatpush1.bf16.xpose.msra.mxu0 0
  %149 = vmatprep.subr.bf16.mxu0 0
  %150 = vmatpush1.bf16.xpose.msra.mxu0 0
  %151 = vmatprep.subr.bf16.mxu0 0
  %152 = vmatpush1.bf16.xpose.msra.mxu0 0
  %153 = vmatprep.mubr.bf16.mxu0 0
  %154 = vmatmul.mubr.bf16.gmra.mrb[0].mxu0 %v104
  %v155 = vpop.f32.mrb[0].mxu0
  %v156 = vadd.f32 0.0, %v155
  %v157 = vpop.f32.mrb[0].mxu0
  %v158 = vpop.f32.mrb[0].mxu0
  %v159 = vadd.f32 0.0, %v158
  %v160 = vpop.f32.mrb[0].mxu0
  %161 = vmatprep.mubr.bf16.mxu0 0
  %162 = vmatmul.mubr.bf16.gmra.mrb[0].mxu0 %v107
  %v163 = vpop.f32.mrb[0].mxu0
  %v164 = vadd.f32 0.0, %v163
  %v165 = vpop.f32.mrb[0].mxu0
  %v166 = vpop.f32.mrb[0].mxu0
  %v167 = vpop.f32.mrb[0].mxu0
  %168 = vdwg.mxu0
  %vm169 = vcmask 523264
  %170 = vst.msk [vmem:[%s3] sm:$0xff] %vm169, %v156
  %171 = vst.msk [vmem:[%s3 + $0x8] sm:$0xff] %vm169, %v159
  %vm172 = vcmask 517120
  %173 = vst.msk [vmem:[%s3 + $0x10] sm:$0x3] %vm172, %v164
  // Predicated region
  $region14: #{gpt_forward.35} parent=0 // pred_check
    _
  $region15: #{gpt_forward.35} parent=0 // pred_check_branch
    %175 = sbr.rel (0) target = $region17
  $region16: #{gpt_forward.35} parent=0 // pred_region
    _
  $region17: #{gpt_forward.35} parent=0 // pred_fallthru
    _
  // Predicated region
  $region18: #{gpt_forward.35} parent=0 // pred_check
    _
  $region19: #{gpt_forward.35} parent=0 // pred_check_branch
    %177 = sbr.rel (0) target = $region21
  $region20: #{gpt_forward.35} parent=0 // pred_region
    _
  $region21: #{gpt_forward.35} parent=0 // pred_fallthru
    _

</llo_original>
